<compile_context>
chip_gen: v7x
topology: tpu7x:2x2x1
jax: 0.10.0
libtpu: 0.0.40
codegen_flags: <defaults>
</compile_context>

<pallas_src>
import functools

import jax
import jax.numpy as jnp
from jax.experimental import pallas as pl
from jax.experimental.pallas import tpu as pltpu

_BF16 = jnp.bfloat16
_COMPILER_PARAMS = pltpu.CompilerParams(
    dimension_semantics=("parallel",),
    vmem_limit_bytes=64 * 1024 * 1024,
)


# ----------------------------- block spec helpers ---------------------------

def _tok_spec(L, E):
    # (N, L, E) array -> per-grid-step (L, E) slab for batch n (leading dim squeezed).
    return pl.BlockSpec((None, L, E), lambda n: (n, 0, 0))


def _const_spec(shape):
    # Parameter resident across the whole grid: constant block index -> single DMA.
    zeros = (0,) * len(shape)
    return pl.BlockSpec(shape, lambda n: zeros)


# ----------------------------- kernel helpers -------------------------------

def _layer_norm(x, w, b, eps):
    mu = jnp.mean(x, axis=-1, keepdims=True)
    var = jnp.mean(jnp.square(x - mu), axis=-1, keepdims=True)  # biased, like PyTorch
    return (x - mu) * jax.lax.rsqrt(var + eps) * w + b


def _mha(qk_in, v_in, mask, wqk, bqk, wv, bv, wo, bo, num_heads):
    """Multi-head self-attention on one (L, E) token slab.

    The 1/sqrt(HD) scale is pre-folded into the q half of wqk / bqk.
    """
    L, E = qk_in.shape
    HD = E // num_heads

    qk = jnp.dot(qk_in.astype(_BF16), wqk, preferred_element_type=jnp.float32) + bqk
    v = jnp.dot(v_in.astype(_BF16), wv, preferred_element_type=jnp.float32) + bv
    q = qk[:, :E]
    k = qk[:, E:]

    ctx_heads = []
    for h in range(num_heads):  # head order h = 0..H-1 matches PyTorch's n*H + h split
        sl = slice(h * HD, (h + 1) * HD)
        qh = q[:, sl].astype(_BF16)
        kh = k[:, sl].astype(_BF16)
        vh = v[:, sl].astype(_BF16)
        # scores = qh @ kh^T without materializing the transpose.
        s = jax.lax.dot_general(qh, kh, (((1,), (1,)), ((), ())),
                                preferred_element_type=jnp.float32)
        if mask is not None:
            s = s + mask
        m = jnp.max(s, axis=-1, keepdims=True)
        p = jnp.exp(s - m)
        denom = jnp.sum(p, axis=-1, keepdims=True)
        attn = p * pl.reciprocal(denom, approx=True)        # divide -> EUP slot
        ctx_heads.append(jnp.dot(attn.astype(_BF16), vh,
                                 preferred_element_type=jnp.float32))
    ctx = jnp.concatenate(ctx_heads, axis=-1)               # (L, E)
    return jnp.dot(ctx.astype(_BF16), wo, preferred_element_type=jnp.float32) + bo


# ----------------------------- fused encoder layer kernel -------------------

def _encoder_layer_kernel(eps, num_heads, norm_first, has_mask, has_final, *refs):
    refs = list(refs)
    o_ref = refs.pop()                                # output ref is last
    if has_final:
        fb_ref = refs.pop()
        fw_ref = refs.pop()
    if has_mask:
        mask = refs.pop()[...]
    else:
        mask = None
    (x_ref, pos_ref, ln1w_ref, ln1b_ref, wqk_ref, bqk_ref, wv_ref, bv_ref,
     wo_ref, bo_ref, ln2w_ref, ln2b_ref, w1_ref, b1_ref, w2_ref, b2_ref) = refs

    x = x_ref[...]                       # (L, E) f32 residual stream
    pos = pos_ref[...]

    if norm_first:
        xn = _layer_norm(x, ln1w_ref[...], ln1b_ref[...], eps)
        qk_in, v_in = xn + pos, xn
    else:
        qk_in, v_in = x + pos, x

    attn_out = _mha(qk_in, v_in, mask, wqk_ref[...], bqk_ref[...],
                    wv_ref[...], bv_ref[...], wo_ref[...], bo_ref[...], num_heads)
    x = x + attn_out                     # dropout1 == identity (eval / p=0)

    if norm_first:
        mlp_in = _layer_norm(x, ln2w_ref[...], ln2b_ref[...], eps)
    else:
        x = _layer_norm(x, ln1w_ref[...], ln1b_ref[...], eps)
        mlp_in = x

    h1 = jnp.dot(mlp_in.astype(_BF16), w1_ref[...],
                 preferred_element_type=jnp.float32) + b1_ref[...]
    h1 = jnp.maximum(h1, 0.0)            # ReLU
    y = jnp.dot(h1.astype(_BF16), w2_ref[...],
                preferred_element_type=jnp.float32) + b2_ref[...]

    if norm_first:
        out = x + y
    else:
        out = _layer_norm(x + y, ln2w_ref[...], ln2b_ref[...], eps)

    if has_final:                        # fused encoder-level final LayerNorm
        out = _layer_norm(out, fw_ref[...], fb_ref[...], eps)
    o_ref[...] = out.astype(o_ref.dtype)


def _ln_kernel(eps, x_ref, w_ref, b_ref, o_ref):
    o_ref[...] = _layer_norm(x_ref[...], w_ref[...], b_ref[...], eps).astype(o_ref.dtype)


# ----------------------------- wrappers --------------------------------------

def build_additive_mask(L, N, src_mask, src_key_padding_mask):
    """Per-batch additive (N, L, L) f32 mask (broadcast over heads in-kernel), or None."""
    if src_mask is None and src_key_padding_mask is None:
        return None                      # never materialize / DMA an all-zero mask
    m = jnp.zeros((N, L, L), jnp.float32)
    if src_mask is not None:
        if jnp.issubdtype(src_mask.dtype, jnp.bool_):
            am = jnp.where(src_mask, -1e9, 0.0).astype(jnp.float32)  # True == disallowed
        else:
            am = src_mask.astype(jnp.float32)                        # additive float mask
        m = m + am[None, :, :]
    if src_key_padding_mask is not None:
        kp = jnp.where(src_key_padding_mask, -1e9, 0.0).astype(jnp.float32)  # (N, L)
        m = m + kp[:, None, :]
    return m


def encoder_layer_forward(x, pos, mask, params, *, num_heads, eps, norm_first,
                          final_norm=None):
    N, L, E = x.shape
    H = params['w1'].shape[1]
    has_mask = mask is not None
    has_final = final_norm is not None

    in_specs = [
        _tok_spec(L, E),                                   # x (residual, aliased to out)
        _tok_spec(L, E),                                   # pos
        _const_spec((1, E)), _const_spec((1, E)),          # ln1 w, b
        _const_spec((E, 2 * E)), _const_spec((1, 2 * E)),  # wqk, bqk (q-scale folded)
        _const_spec((E, E)), _const_spec((1, E)),          # wv, bv
        _const_spec((E, E)), _const_spec((1, E)),          # wo, bo
        _const_spec((1, E)), _const_spec((1, E)),          # ln2 w, b
        _const_spec((E, H)), _const_spec((1, H)),          # w1, b1
        _const_spec((H, E)), _const_spec((1, E)),          # w2, b2
    ]
    args = [x, pos,
            params['ln1_w'], params['ln1_b'],
            params['wqk'], params['bqk'], params['wv'], params['bv'],
            params['wo'], params['bo'],
            params['ln2_w'], params['ln2_b'],
            params['w1'], params['b1'], params['w2'], params['b2']]
    if has_mask:
        in_specs.append(pl.BlockSpec((None, L, L), lambda n: (n, 0, 0)))
        args.append(mask)
    if has_final:
        in_specs += [_const_spec((1, E)), _const_spec((1, E))]
        args += [final_norm['w'], final_norm['b']]

    return pl.pallas_call(
        functools.partial(_encoder_layer_kernel, eps, num_heads, norm_first,
                          has_mask, has_final),
        out_shape=jax.ShapeDtypeStruct((N, L, E), x.dtype),
        grid=(N,),
        in_specs=in_specs,
        out_specs=_tok_spec(L, E),
        input_output_aliases={0: 0},                       # in-place residual update
        compiler_params=_COMPILER_PARAMS,
    )(*args)


def layer_norm_forward(x, w, b, eps):
    N, L, E = x.shape
    return pl.pallas_call(
        functools.partial(_ln_kernel, eps),
        out_shape=jax.ShapeDtypeStruct((N, L, E), x.dtype),
        grid=(N,),
        in_specs=[_tok_spec(L, E), _const_spec((1, E)), _const_spec((1, E))],
        out_specs=_tok_spec(L, E),
        input_output_aliases={0: 0},
        compiler_params=_COMPILER_PARAMS,
    )(x, w, b)


def transformer_encoder_forward(src, pos_emb, src_mask, src_key_padding_mask,
                                layer_params, final_norm, *,
                                num_heads, eps, norm_first=True):
    # src, pos_emb: (L, N, E) -- PyTorch nn.MultiheadAttention default layout.
    L, N, E = src.shape
    x = jnp.transpose(src, (1, 0, 2))         # -> (N, L, E), once per forward pass
    pos = jnp.transpose(pos_emb, (1, 0, 2))
    mask = build_additive_mask(L, N, src_mask, src_key_padding_mask)

    n_layers = len(layer_params)
    for i, p in enumerate(layer_params):
        fused_final = final_norm if (i == n_layers - 1) else None  # fuse final LN into last layer
        x = encoder_layer_forward(x, pos, mask, p, num_heads=num_heads,
                                  eps=eps, norm_first=norm_first,
                                  final_norm=fused_final)
    if n_layers == 0 and final_norm is not None:
        x = layer_norm_forward(x, final_norm['w'], final_norm['b'], eps)
    return jnp.transpose(x, (1, 0, 2))        # back to (L, N, E)


# ----------------------------- parameter init --------------------------------

def init_layer_params(key, E, num_heads, mlp_factor):
    H = mlp_factor * E
    HD = E // num_heads
    ks = jax.random.split(key, 8)

    def rnd(k, shape, scale=0.05):
        return jax.random.normal(k, shape, jnp.float32) * scale

    in_proj_w = rnd(ks[0], (3 * E, E))        # PyTorch in_proj_weight (3E, E)
    in_proj_b = rnd(ks[1], (3 * E,), 0.02)
    out_proj_w = rnd(ks[2], (E, E))
    out_proj_b = rnd(ks[3], (E,), 0.02)
    w1 = rnd(ks[4], (H, E))                   # nn.Linear(E, H).weight
    b1 = rnd(ks[5], (H,), 0.02)
    w2 = rnd(ks[6], (E, H))                   # nn.Linear(H, E).weight
    b2 = rnd(ks[7], (E,), 0.02)

    # Weights pre-transposed so kernels compute x @ W_t + b (== x @ W.T + b).
    # The attention 1/sqrt(HD) scale is folded into Wq / bq here (one-time transform).
    scale = float(HD) ** -0.5
    wq = in_proj_w[:E].T * scale
    bq = in_proj_b[:E] * scale
    wk = in_proj_w[E:2 * E].T
    bk = in_proj_b[E:2 * E]
    wv = in_proj_w[2 * E:].T
    bv = in_proj_b[2 * E:]

    return dict(
        ln1_w=jnp.ones((1, E), jnp.float32), ln1_b=jnp.zeros((1, E), jnp.float32),
        ln2_w=jnp.ones((1, E), jnp.float32), ln2_b=jnp.zeros((1, E), jnp.float32),
        wqk=jnp.concatenate([wq, wk], axis=1).astype(_BF16),   # (E, 2E) bf16 (MXU)
        bqk=jnp.concatenate([bq, bk]).reshape(1, 2 * E),       # f32 (added post-acc)
        wv=wv.astype(_BF16), bv=bv.reshape(1, E),
        wo=out_proj_w.T.astype(_BF16), bo=out_proj_b.reshape(1, E),
        w1=w1.T.astype(_BF16), b1=b1.reshape(1, H),
        w2=w2.T.astype(_BF16), b2=b2.reshape(1, E),
    )


# ----------------------------- main ------------------------------------------

if __name__ == "__main__":
    num_layers, emb_dim, num_heads, mlp_factor = 2, 32, 4, 4
    L, N = 8, 2                     # seq_len, batch
    layer_norm_eps = 1e-5
    norm_first = True               # dropout = 0.0 (eval), activation = ReLU, final norm on

    key = jax.random.PRNGKey(0)
    k_src, k_pos, k_par = jax.random.split(key, 3)
    src = jax.random.normal(k_src, (L, N, emb_dim), jnp.float32)
    pos_emb = jax.random.normal(k_pos, (L, N, emb_dim), jnp.float32)

    layer_keys = jax.random.split(k_par, num_layers)
    layer_params = [init_layer_params(k, emb_dim, num_heads, mlp_factor)
                    for k in layer_keys]
    final_norm = dict(w=jnp.ones((1, emb_dim), jnp.float32),
                      b=jnp.zeros((1, emb_dim), jnp.float32))

    fwd = jax.jit(functools.partial(
        transformer_encoder_forward,
        num_heads=num_heads, eps=layer_norm_eps, norm_first=norm_first))
    out = jax.block_until_ready(fwd(src, pos_emb, None, None, layer_params, final_norm))

    assert out.shape == (L, N, emb_dim)
    assert bool(jnp.all(jnp.isfinite(out)))
    print("KERNEL_OK")
</pallas_src>

<mosaic_0001>
module attributes {stable_mosaic.version = 11 : i64} {
  func.func @_encoder_layer_kernel(%arg0: i32, %arg1: memref<1x8x32xf32, #tpu.memory_space<vmem>>, %arg2: memref<1x8x32xf32, #tpu.memory_space<vmem>>, %arg3: memref<1x32xf32, #tpu.memory_space<vmem>>, %arg4: memref<1x32xf32, #tpu.memory_space<vmem>>, %arg5: memref<32x64xbf16, #tpu.memory_space<vmem>>, %arg6: memref<1x64xf32, #tpu.memory_space<vmem>>, %arg7: memref<32x32xbf16, #tpu.memory_space<vmem>>, %arg8: memref<1x32xf32, #tpu.memory_space<vmem>>, %arg9: memref<32x32xbf16, #tpu.memory_space<vmem>>, %arg10: memref<1x32xf32, #tpu.memory_space<vmem>>, %arg11: memref<1x32xf32, #tpu.memory_space<vmem>>, %arg12: memref<1x32xf32, #tpu.memory_space<vmem>>, %arg13: memref<32x128xbf16, #tpu.memory_space<vmem>>, %arg14: memref<1x128xf32, #tpu.memory_space<vmem>>, %arg15: memref<128x32xbf16, #tpu.memory_space<vmem>>, %arg16: memref<1x32xf32, #tpu.memory_space<vmem>>, %arg17: memref<1x8x32xf32, #tpu.memory_space<vmem>>) attributes {dimension_semantics = [#tpu.dimension_semantics<parallel>], iteration_bounds = array<i64: 2>, scalar_prefetch = 0 : i64, scratch_operands = 0 : i64, tpu.core_type = #tpu.core_type<tc>, window_params = [{transform_indices = @transform_0, window_bounds = array<i64: 1, 8, 32>}, {transform_indices = @transform_1, window_bounds = array<i64: 1, 8, 32>}, {pipeline_mode = #tpu.pipeline_mode<synchronous>, transform_indices = @transform_2, window_bounds = array<i64: 1, 32>}, {pipeline_mode = #tpu.pipeline_mode<synchronous>, transform_indices = @transform_3, window_bounds = array<i64: 1, 32>}, {pipeline_mode = #tpu.pipeline_mode<synchronous>, transform_indices = @transform_4, window_bounds = array<i64: 32, 64>}, {pipeline_mode = #tpu.pipeline_mode<synchronous>, transform_indices = @transform_5, window_bounds = array<i64: 1, 64>}, {pipeline_mode = #tpu.pipeline_mode<synchronous>, transform_indices = @transform_6, window_bounds = array<i64: 32, 32>}, {pipeline_mode = #tpu.pipeline_mode<synchronous>, transform_indices = @transform_7, window_bounds = array<i64: 1, 32>}, {pipeline_mode = #tpu.pipeline_mode<synchronous>, transform_indices = @transform_8, window_bounds = array<i64: 32, 32>}, {pipeline_mode = #tpu.pipeline_mode<synchronous>, transform_indices = @transform_9, window_bounds = array<i64: 1, 32>}, {pipeline_mode = #tpu.pipeline_mode<synchronous>, transform_indices = @transform_10, window_bounds = array<i64: 1, 32>}, {pipeline_mode = #tpu.pipeline_mode<synchronous>, transform_indices = @transform_11, window_bounds = array<i64: 1, 32>}, {pipeline_mode = #tpu.pipeline_mode<synchronous>, transform_indices = @transform_12, window_bounds = array<i64: 32, 128>}, {pipeline_mode = #tpu.pipeline_mode<synchronous>, transform_indices = @transform_13, window_bounds = array<i64: 1, 128>}, {pipeline_mode = #tpu.pipeline_mode<synchronous>, transform_indices = @transform_14, window_bounds = array<i64: 128, 32>}, {pipeline_mode = #tpu.pipeline_mode<synchronous>, transform_indices = @transform_15, window_bounds = array<i64: 1, 32>}, {transform_indices = @transform_16, window_bounds = array<i64: 1, 8, 32>}]} {
    %c0 = arith.constant 0 : index
    %c0_0 = arith.constant 0 : index
    %c0_1 = arith.constant 0 : index
    %0 = vector.load %arg1[%c0, %c0_0, %c0_1] : memref<1x8x32xf32, #tpu.memory_space<vmem>>, vector<1x8x32xf32>
    %1 = vector.shape_cast %0 : vector<1x8x32xf32> to vector<8x32xf32>
    %c0_2 = arith.constant 0 : index
    %c0_3 = arith.constant 0 : index
    %c0_4 = arith.constant 0 : index
    %2 = vector.load %arg2[%c0_2, %c0_3, %c0_4] : memref<1x8x32xf32, #tpu.memory_space<vmem>>, vector<1x8x32xf32>
    %3 = vector.shape_cast %2 : vector<1x8x32xf32> to vector<8x32xf32>
    %c0_5 = arith.constant 0 : index
    %c0_6 = arith.constant 0 : index
    %4 = vector.load %arg3[%c0_5, %c0_6] : memref<1x32xf32, #tpu.memory_space<vmem>>, vector<1x32xf32>
    %c0_7 = arith.constant 0 : index
    %c0_8 = arith.constant 0 : index
    %5 = vector.load %arg4[%c0_7, %c0_8] : memref<1x32xf32, #tpu.memory_space<vmem>>, vector<1x32xf32>
    %cst = arith.constant dense<0.000000e+00> : vector<8xf32>
    %6 = vector.multi_reduction <add>, %1, %cst [1] : vector<8x32xf32> to vector<8xf32>
    %7 = vector.shape_cast %6 : vector<8xf32> to vector<8x1xf32>
    %cst_9 = arith.constant 3.200000e+01 : f32
    %8 = vector.broadcast %cst_9 : f32 to vector<8x1xf32>
    %9 = arith.divf %7, %8 : vector<8x1xf32>
    %10 = vector.broadcast %9 : vector<8x1xf32> to vector<8x32xf32>
    %11 = arith.subf %1, %10 : vector<8x32xf32>
    %12 = arith.mulf %11, %11 : vector<8x32xf32>
    %cst_10 = arith.constant dense<0.000000e+00> : vector<8xf32>
    %13 = vector.multi_reduction <add>, %12, %cst_10 [1] : vector<8x32xf32> to vector<8xf32>
    %14 = vector.shape_cast %13 : vector<8xf32> to vector<8x1xf32>
    %cst_11 = arith.constant 3.200000e+01 : f32
    %15 = vector.broadcast %cst_11 : f32 to vector<8x1xf32>
    %16 = arith.divf %14, %15 : vector<8x1xf32>
    %17 = vector.broadcast %9 : vector<8x1xf32> to vector<8x32xf32>
    %18 = arith.subf %1, %17 : vector<8x32xf32>
    %cst_12 = arith.constant 9.99999974E-6 : f32
    %19 = vector.broadcast %cst_12 : f32 to vector<8x1xf32>
    %20 = arith.addf %16, %19 : vector<8x1xf32>
    %21 = math.rsqrt %20 : vector<8x1xf32>
    %22 = vector.broadcast %21 : vector<8x1xf32> to vector<8x32xf32>
    %23 = arith.mulf %18, %22 : vector<8x32xf32>
    %24 = vector.broadcast %4 : vector<1x32xf32> to vector<8x32xf32>
    %25 = arith.mulf %23, %24 : vector<8x32xf32>
    %26 = vector.broadcast %5 : vector<1x32xf32> to vector<8x32xf32>
    %27 = arith.addf %25, %26 : vector<8x32xf32>
    %28 = arith.addf %27, %3 : vector<8x32xf32>
    %c0_13 = arith.constant 0 : index
    %c0_14 = arith.constant 0 : index
    %29 = vector.load %arg5[%c0_13, %c0_14] : memref<32x64xbf16, #tpu.memory_space<vmem>>, vector<32x64xbf16>
    %c0_15 = arith.constant 0 : index
    %c0_16 = arith.constant 0 : index
    %30 = vector.load %arg6[%c0_15, %c0_16] : memref<1x64xf32, #tpu.memory_space<vmem>>, vector<1x64xf32>
    %c0_17 = arith.constant 0 : index
    %c0_18 = arith.constant 0 : index
    %31 = vector.load %arg7[%c0_17, %c0_18] : memref<32x32xbf16, #tpu.memory_space<vmem>>, vector<32x32xbf16>
    %c0_19 = arith.constant 0 : index
    %c0_20 = arith.constant 0 : index
    %32 = vector.load %arg8[%c0_19, %c0_20] : memref<1x32xf32, #tpu.memory_space<vmem>>, vector<1x32xf32>
    %c0_21 = arith.constant 0 : index
    %c0_22 = arith.constant 0 : index
    %33 = vector.load %arg9[%c0_21, %c0_22] : memref<32x32xbf16, #tpu.memory_space<vmem>>, vector<32x32xbf16>
    %c0_23 = arith.constant 0 : index
    %c0_24 = arith.constant 0 : index
    %34 = vector.load %arg10[%c0_23, %c0_24] : memref<1x32xf32, #tpu.memory_space<vmem>>, vector<1x32xf32>
    %35 = arith.truncf %28 : vector<8x32xf32> to vector<8x32xbf16>
    %cst_25 = arith.constant dense<0.000000e+00> : vector<8x64xf32>
    %36 = tpu.matmul %35, %29, %cst_25 {dimension_numbers = #tpu.dot_dimension_numbers<[1], [0], [0], [1], [0, 0, 1, 1], [], []>} : vector<8x32xbf16>, vector<32x64xbf16>, vector<8x64xf32> -> vector<8x64xf32>
    %37 = vector.broadcast %30 : vector<1x64xf32> to vector<8x64xf32>
    %38 = arith.addf %36, %37 : vector<8x64xf32>
    %39 = arith.truncf %27 : vector<8x32xf32> to vector<8x32xbf16>
    %cst_26 = arith.constant dense<0.000000e+00> : vector<8x32xf32>
    %40 = tpu.matmul %39, %31, %cst_26 {dimension_numbers = #tpu.dot_dimension_numbers<[1], [0], [0], [1], [0, 0, 1, 1], [], []>} : vector<8x32xbf16>, vector<32x32xbf16>, vector<8x32xf32> -> vector<8x32xf32>
    %41 = vector.broadcast %32 : vector<1x32xf32> to vector<8x32xf32>
    %42 = arith.addf %40, %41 : vector<8x32xf32>
    %43 = vector.extract_strided_slice %38 {offsets = [0, 0], sizes = [8, 32], strides = [1, 1]} : vector<8x64xf32> to vector<8x32xf32>
    %44 = vector.extract_strided_slice %38 {offsets = [0, 32], sizes = [8, 32], strides = [1, 1]} : vector<8x64xf32> to vector<8x32xf32>
    %45 = vector.extract_strided_slice %43 {offsets = [0, 0], sizes = [8, 8], strides = [1, 1]} : vector<8x32xf32> to vector<8x8xf32>
    %46 = arith.truncf %45 : vector<8x8xf32> to vector<8x8xbf16>
    %47 = vector.extract_strided_slice %44 {offsets = [0, 0], sizes = [8, 8], strides = [1, 1]} : vector<8x32xf32> to vector<8x8xf32>
    %48 = arith.truncf %47 : vector<8x8xf32> to vector<8x8xbf16>
    %49 = vector.extract_strided_slice %42 {offsets = [0, 0], sizes = [8, 8], strides = [1, 1]} : vector<8x32xf32> to vector<8x8xf32>
    %50 = arith.truncf %49 : vector<8x8xf32> to vector<8x8xbf16>
    %cst_27 = arith.constant dense<0.000000e+00> : vector<8x8xf32>
    %51 = tpu.matmul %46, %48, %cst_27 {dimension_numbers = #tpu.dot_dimension_numbers<[1], [1], [0], [0], [0, 0, 1, 0], [], []>} : vector<8x8xbf16>, vector<8x8xbf16>, vector<8x8xf32> -> vector<8x8xf32>
    %cst_28 = arith.constant dense<0xFF800000> : vector<8xf32>
    %52 = vector.multi_reduction <maximumf>, %51, %cst_28 [1] : vector<8x8xf32> to vector<8xf32>
    %53 = vector.shape_cast %52 : vector<8xf32> to vector<8x1xf32>
    %54 = vector.broadcast %53 : vector<8x1xf32> to vector<8x8xf32>
    %55 = arith.subf %51, %54 : vector<8x8xf32>
    %56 = math.exp %55 : vector<8x8xf32>
    %cst_29 = arith.constant dense<0.000000e+00> : vector<8xf32>
    %57 = vector.multi_reduction <add>, %56, %cst_29 [1] : vector<8x8xf32> to vector<8xf32>
    %58 = vector.shape_cast %57 : vector<8xf32> to vector<8x1xf32>
    %59 = tpu.reciprocal %58 {approx = true} : vector<8x1xf32> -> vector<8x1xf32>
    %60 = vector.broadcast %59 : vector<8x1xf32> to vector<8x8xf32>
    %61 = arith.mulf %56, %60 : vector<8x8xf32>
    %62 = arith.truncf %61 : vector<8x8xf32> to vector<8x8xbf16>
    %cst_30 = arith.constant dense<0.000000e+00> : vector<8x8xf32>
    %63 = tpu.matmul %62, %50, %cst_30 {dimension_numbers = #tpu.dot_dimension_numbers<[1], [0], [0], [1], [0, 0, 1, 1], [], []>} : vector<8x8xbf16>, vector<8x8xbf16>, vector<8x8xf32> -> vector<8x8xf32>
    %64 = vector.extract_strided_slice %43 {offsets = [0, 8], sizes = [8, 8], strides = [1, 1]} : vector<8x32xf32> to vector<8x8xf32>
    %65 = arith.truncf %64 : vector<8x8xf32> to vector<8x8xbf16>
    %66 = vector.extract_strided_slice %44 {offsets = [0, 8], sizes = [8, 8], strides = [1, 1]} : vector<8x32xf32> to vector<8x8xf32>
    %67 = arith.truncf %66 : vector<8x8xf32> to vector<8x8xbf16>
    %68 = vector.extract_strided_slice %42 {offsets = [0, 8], sizes = [8, 8], strides = [1, 1]} : vector<8x32xf32> to vector<8x8xf32>
    %69 = arith.truncf %68 : vector<8x8xf32> to vector<8x8xbf16>
    %cst_31 = arith.constant dense<0.000000e+00> : vector<8x8xf32>
    %70 = tpu.matmul %65, %67, %cst_31 {dimension_numbers = #tpu.dot_dimension_numbers<[1], [1], [0], [0], [0, 0, 1, 0], [], []>} : vector<8x8xbf16>, vector<8x8xbf16>, vector<8x8xf32> -> vector<8x8xf32>
    %cst_32 = arith.constant dense<0xFF800000> : vector<8xf32>
    %71 = vector.multi_reduction <maximumf>, %70, %cst_32 [1] : vector<8x8xf32> to vector<8xf32>
    %72 = vector.shape_cast %71 : vector<8xf32> to vector<8x1xf32>
    %73 = vector.broadcast %72 : vector<8x1xf32> to vector<8x8xf32>
    %74 = arith.subf %70, %73 : vector<8x8xf32>
    %75 = math.exp %74 : vector<8x8xf32>
    %cst_33 = arith.constant dense<0.000000e+00> : vector<8xf32>
    %76 = vector.multi_reduction <add>, %75, %cst_33 [1] : vector<8x8xf32> to vector<8xf32>
    %77 = vector.shape_cast %76 : vector<8xf32> to vector<8x1xf32>
    %78 = tpu.reciprocal %77 {approx = true} : vector<8x1xf32> -> vector<8x1xf32>
    %79 = vector.broadcast %78 : vector<8x1xf32> to vector<8x8xf32>
    %80 = arith.mulf %75, %79 : vector<8x8xf32>
    %81 = arith.truncf %80 : vector<8x8xf32> to vector<8x8xbf16>
    %cst_34 = arith.constant dense<0.000000e+00> : vector<8x8xf32>
    %82 = tpu.matmul %81, %69, %cst_34 {dimension_numbers = #tpu.dot_dimension_numbers<[1], [0], [0], [1], [0, 0, 1, 1], [], []>} : vector<8x8xbf16>, vector<8x8xbf16>, vector<8x8xf32> -> vector<8x8xf32>
    %83 = vector.extract_strided_slice %43 {offsets = [0, 16], sizes = [8, 8], strides = [1, 1]} : vector<8x32xf32> to vector<8x8xf32>
    %84 = arith.truncf %83 : vector<8x8xf32> to vector<8x8xbf16>
    %85 = vector.extract_strided_slice %44 {offsets = [0, 16], sizes = [8, 8], strides = [1, 1]} : vector<8x32xf32> to vector<8x8xf32>
    %86 = arith.truncf %85 : vector<8x8xf32> to vector<8x8xbf16>
    %87 = vector.extract_strided_slice %42 {offsets = [0, 16], sizes = [8, 8], strides = [1, 1]} : vector<8x32xf32> to vector<8x8xf32>
    %88 = arith.truncf %87 : vector<8x8xf32> to vector<8x8xbf16>
    %cst_35 = arith.constant dense<0.000000e+00> : vector<8x8xf32>
    %89 = tpu.matmul %84, %86, %cst_35 {dimension_numbers = #tpu.dot_dimension_numbers<[1], [1], [0], [0], [0, 0, 1, 0], [], []>} : vector<8x8xbf16>, vector<8x8xbf16>, vector<8x8xf32> -> vector<8x8xf32>
    %cst_36 = arith.constant dense<0xFF800000> : vector<8xf32>
    %90 = vector.multi_reduction <maximumf>, %89, %cst_36 [1] : vector<8x8xf32> to vector<8xf32>
    %91 = vector.shape_cast %90 : vector<8xf32> to vector<8x1xf32>
    %92 = vector.broadcast %91 : vector<8x1xf32> to vector<8x8xf32>
    %93 = arith.subf %89, %92 : vector<8x8xf32>
    %94 = math.exp %93 : vector<8x8xf32>
    %cst_37 = arith.constant dense<0.000000e+00> : vector<8xf32>
    %95 = vector.multi_reduction <add>, %94, %cst_37 [1] : vector<8x8xf32> to vector<8xf32>
    %96 = vector.shape_cast %95 : vector<8xf32> to vector<8x1xf32>
    %97 = tpu.reciprocal %96 {approx = true} : vector<8x1xf32> -> vector<8x1xf32>
    %98 = vector.broadcast %97 : vector<8x1xf32> to vector<8x8xf32>
    %99 = arith.mulf %94, %98 : vector<8x8xf32>
    %100 = arith.truncf %99 : vector<8x8xf32> to vector<8x8xbf16>
    %cst_38 = arith.constant dense<0.000000e+00> : vector<8x8xf32>
    %101 = tpu.matmul %100, %88, %cst_38 {dimension_numbers = #tpu.dot_dimension_numbers<[1], [0], [0], [1], [0, 0, 1, 1], [], []>} : vector<8x8xbf16>, vector<8x8xbf16>, vector<8x8xf32> -> vector<8x8xf32>
    %102 = vector.extract_strided_slice %43 {offsets = [0, 24], sizes = [8, 8], strides = [1, 1]} : vector<8x32xf32> to vector<8x8xf32>
    %103 = arith.truncf %102 : vector<8x8xf32> to vector<8x8xbf16>
    %104 = vector.extract_strided_slice %44 {offsets = [0, 24], sizes = [8, 8], strides = [1, 1]} : vector<8x32xf32> to vector<8x8xf32>
    %105 = arith.truncf %104 : vector<8x8xf32> to vector<8x8xbf16>
    %106 = vector.extract_strided_slice %42 {offsets = [0, 24], sizes = [8, 8], strides = [1, 1]} : vector<8x32xf32> to vector<8x8xf32>
    %107 = arith.truncf %106 : vector<8x8xf32> to vector<8x8xbf16>
    %cst_39 = arith.constant dense<0.000000e+00> : vector<8x8xf32>
    %108 = tpu.matmul %103, %105, %cst_39 {dimension_numbers = #tpu.dot_dimension_numbers<[1], [1], [0], [0], [0, 0, 1, 0], [], []>} : vector<8x8xbf16>, vector<8x8xbf16>, vector<8x8xf32> -> vector<8x8xf32>
    %cst_40 = arith.constant dense<0xFF800000> : vector<8xf32>
    %109 = vector.multi_reduction <maximumf>, %108, %cst_40 [1] : vector<8x8xf32> to vector<8xf32>
    %110 = vector.shape_cast %109 : vector<8xf32> to vector<8x1xf32>
    %111 = vector.broadcast %110 : vector<8x1xf32> to vector<8x8xf32>
    %112 = arith.subf %108, %111 : vector<8x8xf32>
    %113 = math.exp %112 : vector<8x8xf32>
    %cst_41 = arith.constant dense<0.000000e+00> : vector<8xf32>
    %114 = vector.multi_reduction <add>, %113, %cst_41 [1] : vector<8x8xf32> to vector<8xf32>
    %115 = vector.shape_cast %114 : vector<8xf32> to vector<8x1xf32>
    %116 = tpu.reciprocal %115 {approx = true} : vector<8x1xf32> -> vector<8x1xf32>
    %117 = vector.broadcast %116 : vector<8x1xf32> to vector<8x8xf32>
    %118 = arith.mulf %113, %117 : vector<8x8xf32>
    %119 = arith.truncf %118 : vector<8x8xf32> to vector<8x8xbf16>
    %cst_42 = arith.constant dense<0.000000e+00> : vector<8x8xf32>
    %120 = tpu.matmul %119, %107, %cst_42 {dimension_numbers = #tpu.dot_dimension_numbers<[1], [0], [0], [1], [0, 0, 1, 1], [], []>} : vector<8x8xbf16>, vector<8x8xbf16>, vector<8x8xf32> -> vector<8x8xf32>
    %121 = tpu.concatenate %63, %82, %101, %120 in 1 : vector<8x8xf32>, vector<8x8xf32>, vector<8x8xf32>, vector<8x8xf32> -> vector<8x32xf32>
    %122 = arith.truncf %121 : vector<8x32xf32> to vector<8x32xbf16>
    %cst_43 = arith.constant dense<0.000000e+00> : vector<8x32xf32>
    %123 = tpu.matmul %122, %33, %cst_43 {dimension_numbers = #tpu.dot_dimension_numbers<[1], [0], [0], [1], [0, 0, 1, 1], [], []>} : vector<8x32xbf16>, vector<32x32xbf16>, vector<8x32xf32> -> vector<8x32xf32>
    %124 = vector.broadcast %34 : vector<1x32xf32> to vector<8x32xf32>
    %125 = arith.addf %123, %124 : vector<8x32xf32>
    %126 = arith.addf %1, %125 : vector<8x32xf32>
    %c0_44 = arith.constant 0 : index
    %c0_45 = arith.constant 0 : index
    %127 = vector.load %arg11[%c0_44, %c0_45] : memref<1x32xf32, #tpu.memory_space<vmem>>, vector<1x32xf32>
    %c0_46 = arith.constant 0 : index
    %c0_47 = arith.constant 0 : index
    %128 = vector.load %arg12[%c0_46, %c0_47] : memref<1x32xf32, #tpu.memory_space<vmem>>, vector<1x32xf32>
    %cst_48 = arith.constant dense<0.000000e+00> : vector<8xf32>
    %129 = vector.multi_reduction <add>, %126, %cst_48 [1] : vector<8x32xf32> to vector<8xf32>
    %130 = vector.shape_cast %129 : vector<8xf32> to vector<8x1xf32>
    %cst_49 = arith.constant 3.200000e+01 : f32
    %131 = vector.broadcast %cst_49 : f32 to vector<8x1xf32>
    %132 = arith.divf %130, %131 : vector<8x1xf32>
    %133 = vector.broadcast %132 : vector<8x1xf32> to vector<8x32xf32>
    %134 = arith.subf %126, %133 : vector<8x32xf32>
    %135 = arith.mulf %134, %134 : vector<8x32xf32>
    %cst_50 = arith.constant dense<0.000000e+00> : vector<8xf32>
    %136 = vector.multi_reduction <add>, %135, %cst_50 [1] : vector<8x32xf32> to vector<8xf32>
    %137 = vector.shape_cast %136 : vector<8xf32> to vector<8x1xf32>
    %cst_51 = arith.constant 3.200000e+01 : f32
    %138 = vector.broadcast %cst_51 : f32 to vector<8x1xf32>
    %139 = arith.divf %137, %138 : vector<8x1xf32>
    %140 = vector.broadcast %132 : vector<8x1xf32> to vector<8x32xf32>
    %141 = arith.subf %126, %140 : vector<8x32xf32>
    %cst_52 = arith.constant 9.99999974E-6 : f32
    %142 = vector.broadcast %cst_52 : f32 to vector<8x1xf32>
    %143 = arith.addf %139, %142 : vector<8x1xf32>
    %144 = math.rsqrt %143 : vector<8x1xf32>
    %145 = vector.broadcast %144 : vector<8x1xf32> to vector<8x32xf32>
    %146 = arith.mulf %141, %145 : vector<8x32xf32>
    %147 = vector.broadcast %127 : vector<1x32xf32> to vector<8x32xf32>
    %148 = arith.mulf %146, %147 : vector<8x32xf32>
    %149 = vector.broadcast %128 : vector<1x32xf32> to vector<8x32xf32>
    %150 = arith.addf %148, %149 : vector<8x32xf32>
    %151 = arith.truncf %150 : vector<8x32xf32> to vector<8x32xbf16>
    %c0_53 = arith.constant 0 : index
    %c0_54 = arith.constant 0 : index
    %152 = vector.load %arg13[%c0_53, %c0_54] : memref<32x128xbf16, #tpu.memory_space<vmem>>, vector<32x128xbf16>
    %cst_55 = arith.constant dense<0.000000e+00> : vector<8x128xf32>
    %153 = tpu.matmul %151, %152, %cst_55 {dimension_numbers = #tpu.dot_dimension_numbers<[1], [0], [0], [1], [0, 0, 1, 1], [], []>} : vector<8x32xbf16>, vector<32x128xbf16>, vector<8x128xf32> -> vector<8x128xf32>
    %c0_56 = arith.constant 0 : index
    %c0_57 = arith.constant 0 : index
    %154 = vector.load %arg14[%c0_56, %c0_57] : memref<1x128xf32, #tpu.memory_space<vmem>>, vector<1x128xf32>
    %155 = vector.broadcast %154 : vector<1x128xf32> to vector<8x128xf32>
    %156 = arith.addf %153, %155 : vector<8x128xf32>
    %cst_58 = arith.constant 0.000000e+00 : f32
    %157 = vector.broadcast %cst_58 : f32 to vector<8x128xf32>
    %158 = arith.maximumf %156, %157 : vector<8x128xf32>
    %159 = arith.truncf %158 : vector<8x128xf32> to vector<8x128xbf16>
    %c0_59 = arith.constant 0 : index
    %c0_60 = arith.constant 0 : index
    %160 = vector.load %arg15[%c0_59, %c0_60] : memref<128x32xbf16, #tpu.memory_space<vmem>>, vector<128x32xbf16>
    %cst_61 = arith.constant dense<0.000000e+00> : vector<8x32xf32>
    %161 = tpu.matmul %159, %160, %cst_61 {dimension_numbers = #tpu.dot_dimension_numbers<[1], [0], [0], [1], [0, 0, 1, 1], [], []>} : vector<8x128xbf16>, vector<128x32xbf16>, vector<8x32xf32> -> vector<8x32xf32>
    %c0_62 = arith.constant 0 : index
    %c0_63 = arith.constant 0 : index
    %162 = vector.load %arg16[%c0_62, %c0_63] : memref<1x32xf32, #tpu.memory_space<vmem>>, vector<1x32xf32>
    %163 = vector.broadcast %162 : vector<1x32xf32> to vector<8x32xf32>
    %164 = arith.addf %161, %163 : vector<8x32xf32>
    %165 = arith.addf %126, %164 : vector<8x32xf32>
    %c0_64 = arith.constant 0 : index
    %c0_65 = arith.constant 0 : index
    %c0_66 = arith.constant 0 : index
    %166 = vector.load %arg17[%c0_64, %c0_65, %c0_66] : memref<1x8x32xf32, #tpu.memory_space<vmem>>, vector<1x8x32xf32>
    %167 = vector.shape_cast %166 : vector<1x8x32xf32> to vector<8x32xf32>
    %168 = vector.shape_cast %165 : vector<8x32xf32> to vector<1x8x32xf32>
    tpu.vector_store %arg17[%c0_64, %c0_65, %c0_66], %168 {strides = array<i32>} : memref<1x8x32xf32, #tpu.memory_space<vmem>>, vector<1x8x32xf32>,
    return
  }
  func.func @transform_0(%arg0: i32) -> (i32, i32, i32) {
    %c0_i32 = arith.constant 0 : i32
    %c0_i32_0 = arith.constant 0 : i32
    %c0_i32_1 = arith.constant 0 : i32
    return %arg0, %c0_i32, %c0_i32_0 : i32, i32, i32
  }
  func.func @transform_1(%arg0: i32) -> (i32, i32, i32) {
    %c0_i32 = arith.constant 0 : i32
    %c0_i32_0 = arith.constant 0 : i32
    %c0_i32_1 = arith.constant 0 : i32
    return %arg0, %c0_i32, %c0_i32_0 : i32, i32, i32
  }
  func.func @transform_2(%arg0: i32) -> (i32, i32) {
    %c0_i32 = arith.constant 0 : i32
    %c0_i32_0 = arith.constant 0 : i32
    %c0_i32_1 = arith.constant 0 : i32
    return %c0_i32, %c0_i32_0 : i32, i32
  }
  func.func @transform_3(%arg0: i32) -> (i32, i32) {
    %c0_i32 = arith.constant 0 : i32
    %c0_i32_0 = arith.constant 0 : i32
    %c0_i32_1 = arith.constant 0 : i32
    return %c0_i32, %c0_i32_0 : i32, i32
  }
  func.func @transform_4(%arg0: i32) -> (i32, i32) {
    %c0_i32 = arith.constant 0 : i32
    %c0_i32_0 = arith.constant 0 : i32
    %c0_i32_1 = arith.constant 0 : i32
    return %c0_i32, %c0_i32_0 : i32, i32
  }
  func.func @transform_5(%arg0: i32) -> (i32, i32) {
    %c0_i32 = arith.constant 0 : i32
    %c0_i32_0 = arith.constant 0 : i32
    %c0_i32_1 = arith.constant 0 : i32
    return %c0_i32, %c0_i32_0 : i32, i32
  }
  func.func @transform_6(%arg0: i32) -> (i32, i32) {
    %c0_i32 = arith.constant 0 : i32
    %c0_i32_0 = arith.constant 0 : i32
    %c0_i32_1 = arith.constant 0 : i32
    return %c0_i32, %c0_i32_0 : i32, i32
  }
  func.func @transform_7(%arg0: i32) -> (i32, i32) {
    %c0_i32 = arith.constant 0 : i32
    %c0_i32_0 = arith.constant 0 : i32
    %c0_i32_1 = arith.constant 0 : i32
    return %c0_i32, %c0_i32_0 : i32, i32
  }
  func.func @transform_8(%arg0: i32) -> (i32, i32) {
    %c0_i32 = arith.constant 0 : i32
    %c0_i32_0 = arith.constant 0 : i32
    %c0_i32_1 = arith.constant 0 : i32
    return %c0_i32, %c0_i32_0 : i32, i32
  }
  func.func @transform_9(%arg0: i32) -> (i32, i32) {
    %c0_i32 = arith.constant 0 : i32
    %c0_i32_0 = arith.constant 0 : i32
    %c0_i32_1 = arith.constant 0 : i32
    return %c0_i32, %c0_i32_0 : i32, i32
  }
  func.func @transform_10(%arg0: i32) -> (i32, i32) {
    %c0_i32 = arith.constant 0 : i32
    %c0_i32_0 = arith.constant 0 : i32
    %c0_i32_1 = arith.constant 0 : i32
    return %c0_i32, %c0_i32_0 : i32, i32
  }
  func.func @transform_11(%arg0: i32) -> (i32, i32) {
    %c0_i32 = arith.constant 0 : i32
    %c0_i32_0 = arith.constant 0 : i32
    %c0_i32_1 = arith.constant 0 : i32
    return %c0_i32, %c0_i32_0 : i32, i32
  }
  func.func @transform_12(%arg0: i32) -> (i32, i32) {
    %c0_i32 = arith.constant 0 : i32
    %c0_i32_0 = arith.constant 0 : i32
    %c0_i32_1 = arith.constant 0 : i32
    return %c0_i32, %c0_i32_0 : i32, i32
  }
  func.func @transform_13(%arg0: i32) -> (i32, i32) {
    %c0_i32 = arith.constant 0 : i32
    %c0_i32_0 = arith.constant 0 : i32
    %c0_i32_1 = arith.constant 0 : i32
    return %c0_i32, %c0_i32_0 : i32, i32
  }
  func.func @transform_14(%arg0: i32) -> (i32, i32) {
    %c0_i32 = arith.constant 0 : i32
    %c0_i32_0 = arith.constant 0 : i32
    %c0_i32_1 = arith.constant 0 : i32
    return %c0_i32, %c0_i32_0 : i32, i32
  }
  func.func @transform_15(%arg0: i32) -> (i32, i32) {
    %c0_i32 = arith.constant 0 : i32
    %c0_i32_0 = arith.constant 0 : i32
    %c0_i32_1 = arith.constant 0 : i32
    return %c0_i32, %c0_i32_0 : i32, i32
  }
  func.func @transform_16(%arg0: i32) -> (i32, i32, i32) {
    %c0_i32 = arith.constant 0 : i32
    %c0_i32_0 = arith.constant 0 : i32
    %c0_i32_1 = arith.constant 0 : i32
    return %arg0, %c0_i32, %c0_i32_0 : i32, i32, i32
  }
}

module attributes {stable_mosaic.version = 11 : i64} {
  func.func @_encoder_layer_kernel(%arg0: i32, %arg1: memref<1x8x32xf32, #tpu.memory_space<vmem>>, %arg2: memref<1x8x32xf32, #tpu.memory_space<vmem>>, %arg3: memref<1x32xf32, #tpu.memory_space<vmem>>, %arg4: memref<1x32xf32, #tpu.memory_space<vmem>>, %arg5: memref<32x64xbf16, #tpu.memory_space<vmem>>, %arg6: memref<1x64xf32, #tpu.memory_space<vmem>>, %arg7: memref<32x32xbf16, #tpu.memory_space<vmem>>, %arg8: memref<1x32xf32, #tpu.memory_space<vmem>>, %arg9: memref<32x32xbf16, #tpu.memory_space<vmem>>, %arg10: memref<1x32xf32, #tpu.memory_space<vmem>>, %arg11: memref<1x32xf32, #tpu.memory_space<vmem>>, %arg12: memref<1x32xf32, #tpu.memory_space<vmem>>, %arg13: memref<32x128xbf16, #tpu.memory_space<vmem>>, %arg14: memref<1x128xf32, #tpu.memory_space<vmem>>, %arg15: memref<128x32xbf16, #tpu.memory_space<vmem>>, %arg16: memref<1x32xf32, #tpu.memory_space<vmem>>, %arg17: memref<1x32xf32, #tpu.memory_space<vmem>>, %arg18: memref<1x32xf32, #tpu.memory_space<vmem>>, %arg19: memref<1x8x32xf32, #tpu.memory_space<vmem>>) attributes {dimension_semantics = [#tpu.dimension_semantics<parallel>], iteration_bounds = array<i64: 2>, scalar_prefetch = 0 : i64, scratch_operands = 0 : i64, tpu.core_type = #tpu.core_type<tc>, window_params = [{transform_indices = @transform_0, window_bounds = array<i64: 1, 8, 32>}, {transform_indices = @transform_1, window_bounds = array<i64: 1, 8, 32>}, {pipeline_mode = #tpu.pipeline_mode<synchronous>, transform_indices = @transform_2, window_bounds = array<i64: 1, 32>}, {pipeline_mode = #tpu.pipeline_mode<synchronous>, transform_indices = @transform_3, window_bounds = array<i64: 1, 32>}, {pipeline_mode = #tpu.pipeline_mode<synchronous>, transform_indices = @transform_4, window_bounds = array<i64: 32, 64>}, {pipeline_mode = #tpu.pipeline_mode<synchronous>, transform_indices = @transform_5, window_bounds = array<i64: 1, 64>}, {pipeline_mode = #tpu.pipeline_mode<synchronous>, transform_indices = @transform_6, window_bounds = array<i64: 32, 32>}, {pipeline_mode = #tpu.pipeline_mode<synchronous>, transform_indices = @transform_7, window_bounds = array<i64: 1, 32>}, {pipeline_mode = #tpu.pipeline_mode<synchronous>, transform_indices = @transform_8, window_bounds = array<i64: 32, 32>}, {pipeline_mode = #tpu.pipeline_mode<synchronous>, transform_indices = @transform_9, window_bounds = array<i64: 1, 32>}, {pipeline_mode = #tpu.pipeline_mode<synchronous>, transform_indices = @transform_10, window_bounds = array<i64: 1, 32>}, {pipeline_mode = #tpu.pipeline_mode<synchronous>, transform_indices = @transform_11, window_bounds = array<i64: 1, 32>}, {pipeline_mode = #tpu.pipeline_mode<synchronous>, transform_indices = @transform_12, window_bounds = array<i64: 32, 128>}, {pipeline_mode = #tpu.pipeline_mode<synchronous>, transform_indices = @transform_13, window_bounds = array<i64: 1, 128>}, {pipeline_mode = #tpu.pipeline_mode<synchronous>, transform_indices = @transform_14, window_bounds = array<i64: 128, 32>}, {pipeline_mode = #tpu.pipeline_mode<synchronous>, transform_indices = @transform_15, window_bounds = array<i64: 1, 32>}, {pipeline_mode = #tpu.pipeline_mode<synchronous>, transform_indices = @transform_16, window_bounds = array<i64: 1, 32>}, {pipeline_mode = #tpu.pipeline_mode<synchronous>, transform_indices = @transform_17, window_bounds = array<i64: 1, 32>}, {transform_indices = @transform_18, window_bounds = array<i64: 1, 8, 32>}]} {
    %c0 = arith.constant 0 : index
    %c0_0 = arith.constant 0 : index
    %c0_1 = arith.constant 0 : index
    %0 = vector.load %arg1[%c0, %c0_0, %c0_1] : memref<1x8x32xf32, #tpu.memory_space<vmem>>, vector<1x8x32xf32>
    %1 = vector.shape_cast %0 : vector<1x8x32xf32> to vector<8x32xf32>
    %c0_2 = arith.constant 0 : index
    %c0_3 = arith.constant 0 : index
    %c0_4 = arith.constant 0 : index
    %2 = vector.load %arg2[%c0_2, %c0_3, %c0_4] : memref<1x8x32xf32, #tpu.memory_space<vmem>>, vector<1x8x32xf32>
    %3 = vector.shape_cast %2 : vector<1x8x32xf32> to vector<8x32xf32>
    %c0_5 = arith.constant 0 : index
    %c0_6 = arith.constant 0 : index
    %4 = vector.load %arg3[%c0_5, %c0_6] : memref<1x32xf32, #tpu.memory_space<vmem>>, vector<1x32xf32>
    %c0_7 = arith.constant 0 : index
    %c0_8 = arith.constant 0 : index
    %5 = vector.load %arg4[%c0_7, %c0_8] : memref<1x32xf32, #tpu.memory_space<vmem>>, vector<1x32xf32>
    %cst = arith.constant dense<0.000000e+00> : vector<8xf32>
    %6 = vector.multi_reduction <add>, %1, %cst [1] : vector<8x32xf32> to vector<8xf32>
    %7 = vector.shape_cast %6 : vector<8xf32> to vector<8x1xf32>
    %cst_9 = arith.constant 3.200000e+01 : f32
    %8 = vector.broadcast %cst_9 : f32 to vector<8x1xf32>
    %9 = arith.divf %7, %8 : vector<8x1xf32>
    %10 = vector.broadcast %9 : vector<8x1xf32> to vector<8x32xf32>
    %11 = arith.subf %1, %10 : vector<8x32xf32>
    %12 = arith.mulf %11, %11 : vector<8x32xf32>
    %cst_10 = arith.constant dense<0.000000e+00> : vector<8xf32>
    %13 = vector.multi_reduction <add>, %12, %cst_10 [1] : vector<8x32xf32> to vector<8xf32>
    %14 = vector.shape_cast %13 : vector<8xf32> to vector<8x1xf32>
    %cst_11 = arith.constant 3.200000e+01 : f32
    %15 = vector.broadcast %cst_11 : f32 to vector<8x1xf32>
    %16 = arith.divf %14, %15 : vector<8x1xf32>
    %17 = vector.broadcast %9 : vector<8x1xf32> to vector<8x32xf32>
    %18 = arith.subf %1, %17 : vector<8x32xf32>
    %cst_12 = arith.constant 9.99999974E-6 : f32
    %19 = vector.broadcast %cst_12 : f32 to vector<8x1xf32>
    %20 = arith.addf %16, %19 : vector<8x1xf32>
    %21 = math.rsqrt %20 : vector<8x1xf32>
    %22 = vector.broadcast %21 : vector<8x1xf32> to vector<8x32xf32>
    %23 = arith.mulf %18, %22 : vector<8x32xf32>
    %24 = vector.broadcast %4 : vector<1x32xf32> to vector<8x32xf32>
    %25 = arith.mulf %23, %24 : vector<8x32xf32>
    %26 = vector.broadcast %5 : vector<1x32xf32> to vector<8x32xf32>
    %27 = arith.addf %25, %26 : vector<8x32xf32>
    %28 = arith.addf %27, %3 : vector<8x32xf32>
    %c0_13 = arith.constant 0 : index
    %c0_14 = arith.constant 0 : index
    %29 = vector.load %arg5[%c0_13, %c0_14] : memref<32x64xbf16, #tpu.memory_space<vmem>>, vector<32x64xbf16>
    %c0_15 = arith.constant 0 : index
    %c0_16 = arith.constant 0 : index
    %30 = vector.load %arg6[%c0_15, %c0_16] : memref<1x64xf32, #tpu.memory_space<vmem>>, vector<1x64xf32>
    %c0_17 = arith.constant 0 : index
    %c0_18 = arith.constant 0 : index
    %31 = vector.load %arg7[%c0_17, %c0_18] : memref<32x32xbf16, #tpu.memory_space<vmem>>, vector<32x32xbf16>
    %c0_19 = arith.constant 0 : index
    %c0_20 = arith.constant 0 : index
    %32 = vector.load %arg8[%c0_19, %c0_20] : memref<1x32xf32, #tpu.memory_space<vmem>>, vector<1x32xf32>
    %c0_21 = arith.constant 0 : index
    %c0_22 = arith.constant 0 : index
    %33 = vector.load %arg9[%c0_21, %c0_22] : memref<32x32xbf16, #tpu.memory_space<vmem>>, vector<32x32xbf16>
    %c0_23 = arith.constant 0 : index
    %c0_24 = arith.constant 0 : index
    %34 = vector.load %arg10[%c0_23, %c0_24] : memref<1x32xf32, #tpu.memory_space<vmem>>, vector<1x32xf32>
    %35 = arith.truncf %28 : vector<8x32xf32> to vector<8x32xbf16>
    %cst_25 = arith.constant dense<0.000000e+00> : vector<8x64xf32>
    %36 = tpu.matmul %35, %29, %cst_25 {dimension_numbers = #tpu.dot_dimension_numbers<[1], [0], [0], [1], [0, 0, 1, 1], [], []>} : vector<8x32xbf16>, vector<32x64xbf16>, vector<8x64xf32> -> vector<8x64xf32>
    %37 = vector.broadcast %30 : vector<1x64xf32> to vector<8x64xf32>
    %38 = arith.addf %36, %37 : vector<8x64xf32>
    %39 = arith.truncf %27 : vector<8x32xf32> to vector<8x32xbf16>
    %cst_26 = arith.constant dense<0.000000e+00> : vector<8x32xf32>
    %40 = tpu.matmul %39, %31, %cst_26 {dimension_numbers = #tpu.dot_dimension_numbers<[1], [0], [0], [1], [0, 0, 1, 1], [], []>} : vector<8x32xbf16>, vector<32x32xbf16>, vector<8x32xf32> -> vector<8x32xf32>
    %41 = vector.broadcast %32 : vector<1x32xf32> to vector<8x32xf32>
    %42 = arith.addf %40, %41 : vector<8x32xf32>
    %43 = vector.extract_strided_slice %38 {offsets = [0, 0], sizes = [8, 32], strides = [1, 1]} : vector<8x64xf32> to vector<8x32xf32>
    %44 = vector.extract_strided_slice %38 {offsets = [0, 32], sizes = [8, 32], strides = [1, 1]} : vector<8x64xf32> to vector<8x32xf32>
    %45 = vector.extract_strided_slice %43 {offsets = [0, 0], sizes = [8, 8], strides = [1, 1]} : vector<8x32xf32> to vector<8x8xf32>
    %46 = arith.truncf %45 : vector<8x8xf32> to vector<8x8xbf16>
    %47 = vector.extract_strided_slice %44 {offsets = [0, 0], sizes = [8, 8], strides = [1, 1]} : vector<8x32xf32> to vector<8x8xf32>
    %48 = arith.truncf %47 : vector<8x8xf32> to vector<8x8xbf16>
    %49 = vector.extract_strided_slice %42 {offsets = [0, 0], sizes = [8, 8], strides = [1, 1]} : vector<8x32xf32> to vector<8x8xf32>
    %50 = arith.truncf %49 : vector<8x8xf32> to vector<8x8xbf16>
    %cst_27 = arith.constant dense<0.000000e+00> : vector<8x8xf32>
    %51 = tpu.matmul %46, %48, %cst_27 {dimension_numbers = #tpu.dot_dimension_numbers<[1], [1], [0], [0], [0, 0, 1, 0], [], []>} : vector<8x8xbf16>, vector<8x8xbf16>, vector<8x8xf32> -> vector<8x8xf32>
    %cst_28 = arith.constant dense<0xFF800000> : vector<8xf32>
    %52 = vector.multi_reduction <maximumf>, %51, %cst_28 [1] : vector<8x8xf32> to vector<8xf32>
    %53 = vector.shape_cast %52 : vector<8xf32> to vector<8x1xf32>
    %54 = vector.broadcast %53 : vector<8x1xf32> to vector<8x8xf32>
    %55 = arith.subf %51, %54 : vector<8x8xf32>
    %56 = math.exp %55 : vector<8x8xf32>
    %cst_29 = arith.constant dense<0.000000e+00> : vector<8xf32>
    %57 = vector.multi_reduction <add>, %56, %cst_29 [1] : vector<8x8xf32> to vector<8xf32>
    %58 = vector.shape_cast %57 : vector<8xf32> to vector<8x1xf32>
    %59 = tpu.reciprocal %58 {approx = true} : vector<8x1xf32> -> vector<8x1xf32>
    %60 = vector.broadcast %59 : vector<8x1xf32> to vector<8x8xf32>
    %61 = arith.mulf %56, %60 : vector<8x8xf32>
    %62 = arith.truncf %61 : vector<8x8xf32> to vector<8x8xbf16>
    %cst_30 = arith.constant dense<0.000000e+00> : vector<8x8xf32>
    %63 = tpu.matmul %62, %50, %cst_30 {dimension_numbers = #tpu.dot_dimension_numbers<[1], [0], [0], [1], [0, 0, 1, 1], [], []>} : vector<8x8xbf16>, vector<8x8xbf16>, vector<8x8xf32> -> vector<8x8xf32>
    %64 = vector.extract_strided_slice %43 {offsets = [0, 8], sizes = [8, 8], strides = [1, 1]} : vector<8x32xf32> to vector<8x8xf32>
    %65 = arith.truncf %64 : vector<8x8xf32> to vector<8x8xbf16>
    %66 = vector.extract_strided_slice %44 {offsets = [0, 8], sizes = [8, 8], strides = [1, 1]} : vector<8x32xf32> to vector<8x8xf32>
    %67 = arith.truncf %66 : vector<8x8xf32> to vector<8x8xbf16>
    %68 = vector.extract_strided_slice %42 {offsets = [0, 8], sizes = [8, 8], strides = [1, 1]} : vector<8x32xf32> to vector<8x8xf32>
    %69 = arith.truncf %68 : vector<8x8xf32> to vector<8x8xbf16>
    %cst_31 = arith.constant dense<0.000000e+00> : vector<8x8xf32>
    %70 = tpu.matmul %65, %67, %cst_31 {dimension_numbers = #tpu.dot_dimension_numbers<[1], [1], [0], [0], [0, 0, 1, 0], [], []>} : vector<8x8xbf16>, vector<8x8xbf16>, vector<8x8xf32> -> vector<8x8xf32>
    %cst_32 = arith.constant dense<0xFF800000> : vector<8xf32>
    %71 = vector.multi_reduction <maximumf>, %70, %cst_32 [1] : vector<8x8xf32> to vector<8xf32>
    %72 = vector.shape_cast %71 : vector<8xf32> to vector<8x1xf32>
    %73 = vector.broadcast %72 : vector<8x1xf32> to vector<8x8xf32>
    %74 = arith.subf %70, %73 : vector<8x8xf32>
    %75 = math.exp %74 : vector<8x8xf32>
    %cst_33 = arith.constant dense<0.000000e+00> : vector<8xf32>
    %76 = vector.multi_reduction <add>, %75, %cst_33 [1] : vector<8x8xf32> to vector<8xf32>
    %77 = vector.shape_cast %76 : vector<8xf32> to vector<8x1xf32>
    %78 = tpu.reciprocal %77 {approx = true} : vector<8x1xf32> -> vector<8x1xf32>
    %79 = vector.broadcast %78 : vector<8x1xf32> to vector<8x8xf32>
    %80 = arith.mulf %75, %79 : vector<8x8xf32>
    %81 = arith.truncf %80 : vector<8x8xf32> to vector<8x8xbf16>
    %cst_34 = arith.constant dense<0.000000e+00> : vector<8x8xf32>
    %82 = tpu.matmul %81, %69, %cst_34 {dimension_numbers = #tpu.dot_dimension_numbers<[1], [0], [0], [1], [0, 0, 1, 1], [], []>} : vector<8x8xbf16>, vector<8x8xbf16>, vector<8x8xf32> -> vector<8x8xf32>
    %83 = vector.extract_strided_slice %43 {offsets = [0, 16], sizes = [8, 8], strides = [1, 1]} : vector<8x32xf32> to vector<8x8xf32>
    %84 = arith.truncf %83 : vector<8x8xf32> to vector<8x8xbf16>
    %85 = vector.extract_strided_slice %44 {offsets = [0, 16], sizes = [8, 8], strides = [1, 1]} : vector<8x32xf32> to vector<8x8xf32>
    %86 = arith.truncf %85 : vector<8x8xf32> to vector<8x8xbf16>
    %87 = vector.extract_strided_slice %42 {offsets = [0, 16], sizes = [8, 8], strides = [1, 1]} : vector<8x32xf32> to vector<8x8xf32>
    %88 = arith.truncf %87 : vector<8x8xf32> to vector<8x8xbf16>
    %cst_35 = arith.constant dense<0.000000e+00> : vector<8x8xf32>
    %89 = tpu.matmul %84, %86, %cst_35 {dimension_numbers = #tpu.dot_dimension_numbers<[1], [1], [0], [0], [0, 0, 1, 0], [], []>} : vector<8x8xbf16>, vector<8x8xbf16>, vector<8x8xf32> -> vector<8x8xf32>
    %cst_36 = arith.constant dense<0xFF800000> : vector<8xf32>
    %90 = vector.multi_reduction <maximumf>, %89, %cst_36 [1] : vector<8x8xf32> to vector<8xf32>
    %91 = vector.shape_cast %90 : vector<8xf32> to vector<8x1xf32>
    %92 = vector.broadcast %91 : vector<8x1xf32> to vector<8x8xf32>
    %93 = arith.subf %89, %92 : vector<8x8xf32>
    %94 = math.exp %93 : vector<8x8xf32>
    %cst_37 = arith.constant dense<0.000000e+00> : vector<8xf32>
    %95 = vector.multi_reduction <add>, %94, %cst_37 [1] : vector<8x8xf32> to vector<8xf32>
    %96 = vector.shape_cast %95 : vector<8xf32> to vector<8x1xf32>
    %97 = tpu.reciprocal %96 {approx = true} : vector<8x1xf32> -> vector<8x1xf32>
    %98 = vector.broadcast %97 : vector<8x1xf32> to vector<8x8xf32>
    %99 = arith.mulf %94, %98 : vector<8x8xf32>
    %100 = arith.truncf %99 : vector<8x8xf32> to vector<8x8xbf16>
    %cst_38 = arith.constant dense<0.000000e+00> : vector<8x8xf32>
    %101 = tpu.matmul %100, %88, %cst_38 {dimension_numbers = #tpu.dot_dimension_numbers<[1], [0], [0], [1], [0, 0, 1, 1], [], []>} : vector<8x8xbf16>, vector<8x8xbf16>, vector<8x8xf32> -> vector<8x8xf32>
    %102 = vector.extract_strided_slice %43 {offsets = [0, 24], sizes = [8, 8], strides = [1, 1]} : vector<8x32xf32> to vector<8x8xf32>
    %103 = arith.truncf %102 : vector<8x8xf32> to vector<8x8xbf16>
    %104 = vector.extract_strided_slice %44 {offsets = [0, 24], sizes = [8, 8], strides = [1, 1]} : vector<8x32xf32> to vector<8x8xf32>
    %105 = arith.truncf %104 : vector<8x8xf32> to vector<8x8xbf16>
    %106 = vector.extract_strided_slice %42 {offsets = [0, 24], sizes = [8, 8], strides = [1, 1]} : vector<8x32xf32> to vector<8x8xf32>
    %107 = arith.truncf %106 : vector<8x8xf32> to vector<8x8xbf16>
    %cst_39 = arith.constant dense<0.000000e+00> : vector<8x8xf32>
    %108 = tpu.matmul %103, %105, %cst_39 {dimension_numbers = #tpu.dot_dimension_numbers<[1], [1], [0], [0], [0, 0, 1, 0], [], []>} : vector<8x8xbf16>, vector<8x8xbf16>, vector<8x8xf32> -> vector<8x8xf32>
    %cst_40 = arith.constant dense<0xFF800000> : vector<8xf32>
    %109 = vector.multi_reduction <maximumf>, %108, %cst_40 [1] : vector<8x8xf32> to vector<8xf32>
    %110 = vector.shape_cast %109 : vector<8xf32> to vector<8x1xf32>
    %111 = vector.broadcast %110 : vector<8x1xf32> to vector<8x8xf32>
    %112 = arith.subf %108, %111 : vector<8x8xf32>
    %113 = math.exp %112 : vector<8x8xf32>
    %cst_41 = arith.constant dense<0.000000e+00> : vector<8xf32>
    %114 = vector.multi_reduction <add>, %113, %cst_41 [1] : vector<8x8xf32> to vector<8xf32>
    %115 = vector.shape_cast %114 : vector<8xf32> to vector<8x1xf32>
    %116 = tpu.reciprocal %115 {approx = true} : vector<8x1xf32> -> vector<8x1xf32>
    %117 = vector.broadcast %116 : vector<8x1xf32> to vector<8x8xf32>
    %118 = arith.mulf %113, %117 : vector<8x8xf32>
    %119 = arith.truncf %118 : vector<8x8xf32> to vector<8x8xbf16>
    %cst_42 = arith.constant dense<0.000000e+00> : vector<8x8xf32>
    %120 = tpu.matmul %119, %107, %cst_42 {dimension_numbers = #tpu.dot_dimension_numbers<[1], [0], [0], [1], [0, 0, 1, 1], [], []>} : vector<8x8xbf16>, vector<8x8xbf16>, vector<8x8xf32> -> vector<8x8xf32>
    %121 = tpu.concatenate %63, %82, %101, %120 in 1 : vector<8x8xf32>, vector<8x8xf32>, vector<8x8xf32>, vector<8x8xf32> -> vector<8x32xf32>
    %122 = arith.truncf %121 : vector<8x32xf32> to vector<8x32xbf16>
    %cst_43 = arith.constant dense<0.000000e+00> : vector<8x32xf32>
    %123 = tpu.matmul %122, %33, %cst_43 {dimension_numbers = #tpu.dot_dimension_numbers<[1], [0], [0], [1], [0, 0, 1, 1], [], []>} : vector<8x32xbf16>, vector<32x32xbf16>, vector<8x32xf32> -> vector<8x32xf32>
    %124 = vector.broadcast %34 : vector<1x32xf32> to vector<8x32xf32>
    %125 = arith.addf %123, %124 : vector<8x32xf32>
    %126 = arith.addf %1, %125 : vector<8x32xf32>
    %c0_44 = arith.constant 0 : index
    %c0_45 = arith.constant 0 : index
    %127 = vector.load %arg11[%c0_44, %c0_45] : memref<1x32xf32, #tpu.memory_space<vmem>>, vector<1x32xf32>
    %c0_46 = arith.constant 0 : index
    %c0_47 = arith.constant 0 : index
    %128 = vector.load %arg12[%c0_46, %c0_47] : memref<1x32xf32, #tpu.memory_space<vmem>>, vector<1x32xf32>
    %cst_48 = arith.constant dense<0.000000e+00> : vector<8xf32>
    %129 = vector.multi_reduction <add>, %126, %cst_48 [1] : vector<8x32xf32> to vector<8xf32>
    %130 = vector.shape_cast %129 : vector<8xf32> to vector<8x1xf32>
    %cst_49 = arith.constant 3.200000e+01 : f32
    %131 = vector.broadcast %cst_49 : f32 to vector<8x1xf32>
    %132 = arith.divf %130, %131 : vector<8x1xf32>
    %133 = vector.broadcast %132 : vector<8x1xf32> to vector<8x32xf32>
    %134 = arith.subf %126, %133 : vector<8x32xf32>
    %135 = arith.mulf %134, %134 : vector<8x32xf32>
    %cst_50 = arith.constant dense<0.000000e+00> : vector<8xf32>
    %136 = vector.multi_reduction <add>, %135, %cst_50 [1] : vector<8x32xf32> to vector<8xf32>
    %137 = vector.shape_cast %136 : vector<8xf32> to vector<8x1xf32>
    %cst_51 = arith.constant 3.200000e+01 : f32
    %138 = vector.broadcast %cst_51 : f32 to vector<8x1xf32>
    %139 = arith.divf %137, %138 : vector<8x1xf32>
    %140 = vector.broadcast %132 : vector<8x1xf32> to vector<8x32xf32>
    %141 = arith.subf %126, %140 : vector<8x32xf32>
    %cst_52 = arith.constant 9.99999974E-6 : f32
    %142 = vector.broadcast %cst_52 : f32 to vector<8x1xf32>
    %143 = arith.addf %139, %142 : vector<8x1xf32>
    %144 = math.rsqrt %143 : vector<8x1xf32>
    %145 = vector.broadcast %144 : vector<8x1xf32> to vector<8x32xf32>
    %146 = arith.mulf %141, %145 : vector<8x32xf32>
    %147 = vector.broadcast %127 : vector<1x32xf32> to vector<8x32xf32>
    %148 = arith.mulf %146, %147 : vector<8x32xf32>
    %149 = vector.broadcast %128 : vector<1x32xf32> to vector<8x32xf32>
    %150 = arith.addf %148, %149 : vector<8x32xf32>
    %151 = arith.truncf %150 : vector<8x32xf32> to vector<8x32xbf16>
    %c0_53 = arith.constant 0 : index
    %c0_54 = arith.constant 0 : index
    %152 = vector.load %arg13[%c0_53, %c0_54] : memref<32x128xbf16, #tpu.memory_space<vmem>>, vector<32x128xbf16>
    %cst_55 = arith.constant dense<0.000000e+00> : vector<8x128xf32>
    %153 = tpu.matmul %151, %152, %cst_55 {dimension_numbers = #tpu.dot_dimension_numbers<[1], [0], [0], [1], [0, 0, 1, 1], [], []>} : vector<8x32xbf16>, vector<32x128xbf16>, vector<8x128xf32> -> vector<8x128xf32>
    %c0_56 = arith.constant 0 : index
    %c0_57 = arith.constant 0 : index
    %154 = vector.load %arg14[%c0_56, %c0_57] : memref<1x128xf32, #tpu.memory_space<vmem>>, vector<1x128xf32>
    %155 = vector.broadcast %154 : vector<1x128xf32> to vector<8x128xf32>
    %156 = arith.addf %153, %155 : vector<8x128xf32>
    %cst_58 = arith.constant 0.000000e+00 : f32
    %157 = vector.broadcast %cst_58 : f32 to vector<8x128xf32>
    %158 = arith.maximumf %156, %157 : vector<8x128xf32>
    %159 = arith.truncf %158 : vector<8x128xf32> to vector<8x128xbf16>
    %c0_59 = arith.constant 0 : index
    %c0_60 = arith.constant 0 : index
    %160 = vector.load %arg15[%c0_59, %c0_60] : memref<128x32xbf16, #tpu.memory_space<vmem>>, vector<128x32xbf16>
    %cst_61 = arith.constant dense<0.000000e+00> : vector<8x32xf32>
    %161 = tpu.matmul %159, %160, %cst_61 {dimension_numbers = #tpu.dot_dimension_numbers<[1], [0], [0], [1], [0, 0, 1, 1], [], []>} : vector<8x128xbf16>, vector<128x32xbf16>, vector<8x32xf32> -> vector<8x32xf32>
    %c0_62 = arith.constant 0 : index
    %c0_63 = arith.constant 0 : index
    %162 = vector.load %arg16[%c0_62, %c0_63] : memref<1x32xf32, #tpu.memory_space<vmem>>, vector<1x32xf32>
    %163 = vector.broadcast %162 : vector<1x32xf32> to vector<8x32xf32>
    %164 = arith.addf %161, %163 : vector<8x32xf32>
    %165 = arith.addf %126, %164 : vector<8x32xf32>
    %c0_64 = arith.constant 0 : index
    %c0_65 = arith.constant 0 : index
    %166 = vector.load %arg17[%c0_64, %c0_65] : memref<1x32xf32, #tpu.memory_space<vmem>>, vector<1x32xf32>
    %c0_66 = arith.constant 0 : index
    %c0_67 = arith.constant 0 : index
    %167 = vector.load %arg18[%c0_66, %c0_67] : memref<1x32xf32, #tpu.memory_space<vmem>>, vector<1x32xf32>
    %cst_68 = arith.constant dense<0.000000e+00> : vector<8xf32>
    %168 = vector.multi_reduction <add>, %165, %cst_68 [1] : vector<8x32xf32> to vector<8xf32>
    %169 = vector.shape_cast %168 : vector<8xf32> to vector<8x1xf32>
    %cst_69 = arith.constant 3.200000e+01 : f32
    %170 = vector.broadcast %cst_69 : f32 to vector<8x1xf32>
    %171 = arith.divf %169, %170 : vector<8x1xf32>
    %172 = vector.broadcast %171 : vector<8x1xf32> to vector<8x32xf32>
    %173 = arith.subf %165, %172 : vector<8x32xf32>
    %174 = arith.mulf %173, %173 : vector<8x32xf32>
    %cst_70 = arith.constant dense<0.000000e+00> : vector<8xf32>
    %175 = vector.multi_reduction <add>, %174, %cst_70 [1] : vector<8x32xf32> to vector<8xf32>
    %176 = vector.shape_cast %175 : vector<8xf32> to vector<8x1xf32>
    %cst_71 = arith.constant 3.200000e+01 : f32
    %177 = vector.broadcast %cst_71 : f32 to vector<8x1xf32>
    %178 = arith.divf %176, %177 : vector<8x1xf32>
    %179 = vector.broadcast %171 : vector<8x1xf32> to vector<8x32xf32>
    %180 = arith.subf %165, %179 : vector<8x32xf32>
    %cst_72 = arith.constant 9.99999974E-6 : f32
    %181 = vector.broadcast %cst_72 : f32 to vector<8x1xf32>
    %182 = arith.addf %178, %181 : vector<8x1xf32>
    %183 = math.rsqrt %182 : vector<8x1xf32>
    %184 = vector.broadcast %183 : vector<8x1xf32> to vector<8x32xf32>
    %185 = arith.mulf %180, %184 : vector<8x32xf32>
    %186 = vector.broadcast %166 : vector<1x32xf32> to vector<8x32xf32>
    %187 = arith.mulf %185, %186 : vector<8x32xf32>
    %188 = vector.broadcast %167 : vector<1x32xf32> to vector<8x32xf32>
    %189 = arith.addf %187, %188 : vector<8x32xf32>
    %c0_73 = arith.constant 0 : index
    %c0_74 = arith.constant 0 : index
    %c0_75 = arith.constant 0 : index
    %190 = vector.load %arg19[%c0_73, %c0_74, %c0_75] : memref<1x8x32xf32, #tpu.memory_space<vmem>>, vector<1x8x32xf32>
    %191 = vector.shape_cast %190 : vector<1x8x32xf32> to vector<8x32xf32>
    %192 = vector.shape_cast %189 : vector<8x32xf32> to vector<1x8x32xf32>
    tpu.vector_store %arg19[%c0_73, %c0_74, %c0_75], %192 {strides = array<i32>} : memref<1x8x32xf32, #tpu.memory_space<vmem>>, vector<1x8x32xf32>,
    return
  }
  func.func @transform_0(%arg0: i32) -> (i32, i32, i32) {
    %c0_i32 = arith.constant 0 : i32
    %c0_i32_0 = arith.constant 0 : i32
    %c0_i32_1 = arith.constant 0 : i32
    return %arg0, %c0_i32, %c0_i32_0 : i32, i32, i32
  }
  func.func @transform_1(%arg0: i32) -> (i32, i32, i32) {
    %c0_i32 = arith.constant 0 : i32
    %c0_i32_0 = arith.constant 0 : i32
    %c0_i32_1 = arith.constant 0 : i32
    return %arg0, %c0_i32, %c0_i32_0 : i32, i32, i32
  }
  func.func @transform_2(%arg0: i32) -> (i32, i32) {
    %c0_i32 = arith.constant 0 : i32
    %c0_i32_0 = arith.constant 0 : i32
    %c0_i32_1 = arith.constant 0 : i32
    return %c0_i32, %c0_i32_0 : i32, i32
  }
  func.func @transform_3(%arg0: i32) -> (i32, i32) {
    %c0_i32 = arith.constant 0 : i32
    %c0_i32_0 = arith.constant 0 : i32
    %c0_i32_1 = arith.constant 0 : i32
    return %c0_i32, %c0_i32_0 : i32, i32
  }
  func.func @transform_4(%arg0: i32) -> (i32, i32) {
    %c0_i32 = arith.constant 0 : i32
    %c0_i32_0 = arith.constant 0 : i32
    %c0_i32_1 = arith.constant 0 : i32
    return %c0_i32, %c0_i32_0 : i32, i32
  }
  func.func @transform_5(%arg0: i32) -> (i32, i32) {
    %c0_i32 = arith.constant 0 : i32
    %c0_i32_0 = arith.constant 0 : i32
    %c0_i32_1 = arith.constant 0 : i32
    return %c0_i32, %c0_i32_0 : i32, i32
  }
  func.func @transform_6(%arg0: i32) -> (i32, i32) {
    %c0_i32 = arith.constant 0 : i32
    %c0_i32_0 = arith.constant 0 : i32
    %c0_i32_1 = arith.constant 0 : i32
    return %c0_i32, %c0_i32_0 : i32, i32
  }
  func.func @transform_7(%arg0: i32) -> (i32, i32) {
    %c0_i32 = arith.constant 0 : i32
    %c0_i32_0 = arith.constant 0 : i32
    %c0_i32_1 = arith.constant 0 : i32
    return %c0_i32, %c0_i32_0 : i32, i32
  }
  func.func @transform_8(%arg0: i32) -> (i32, i32) {
    %c0_i32 = arith.constant 0 : i32
    %c0_i32_0 = arith.constant 0 : i32
    %c0_i32_1 = arith.constant 0 : i32
    return %c0_i32, %c0_i32_0 : i32, i32
  }
  func.func @transform_9(%arg0: i32) -> (i32, i32) {
    %c0_i32 = arith.constant 0 : i32
    %c0_i32_0 = arith.constant 0 : i32
    %c0_i32_1 = arith.constant 0 : i32
    return %c0_i32, %c0_i32_0 : i32, i32
  }
  func.func @transform_10(%arg0: i32) -> (i32, i32) {
    %c0_i32 = arith.constant 0 : i32
    %c0_i32_0 = arith.constant 0 : i32
    %c0_i32_1 = arith.constant 0 : i32
    return %c0_i32, %c0_i32_0 : i32, i32
  }
  func.func @transform_11(%arg0: i32) -> (i32, i32) {
    %c0_i32 = arith.constant 0 : i32
    %c0_i32_0 = arith.constant 0 : i32
    %c0_i32_1 = arith.constant 0 : i32
    return %c0_i32, %c0_i32_0 : i32, i32
  }
  func.func @transform_12(%arg0: i32) -> (i32, i32) {
    %c0_i32 = arith.constant 0 : i32
    %c0_i32_0 = arith.constant 0 : i32
    %c0_i32_1 = arith.constant 0 : i32
    return %c0_i32, %c0_i32_0 : i32, i32
  }
  func.func @transform_13(%arg0: i32) -> (i32, i32) {
    %c0_i32 = arith.constant 0 : i32
    %c0_i32_0 = arith.constant 0 : i32
    %c0_i32_1 = arith.constant 0 : i32
    return %c0_i32, %c0_i32_0 : i32, i32
  }
  func.func @transform_14(%arg0: i32) -> (i32, i32) {
    %c0_i32 = arith.constant 0 : i32
    %c0_i32_0 = arith.constant 0 : i32
    %c0_i32_1 = arith.constant 0 : i32
    return %c0_i32, %c0_i32_0 : i32, i32
  }
  func.func @transform_15(%arg0: i32) -> (i32, i32) {
    %c0_i32 = arith.constant 0 : i32
    %c0_i32_0 = arith.constant 0 : i32
    %c0_i32_1 = arith.constant 0 : i32
    return %c0_i32, %c0_i32_0 : i32, i32
  }
  func.func @transform_16(%arg0: i32) -> (i32, i32) {
    %c0_i32 = arith.constant 0 : i32
    %c0_i32_0 = arith.constant 0 : i32
    %c0_i32_1 = arith.constant 0 : i32
    return %c0_i32, %c0_i32_0 : i32, i32
  }
  func.func @transform_17(%arg0: i32) -> (i32, i32) {
    %c0_i32 = arith.constant 0 : i32
    %c0_i32_0 = arith.constant 0 : i32
    %c0_i32_1 = arith.constant 0 : i32
    return %c0_i32, %c0_i32_0 : i32, i32
  }
  func.func @transform_18(%arg0: i32) -> (i32, i32, i32) {
    %c0_i32 = arith.constant 0 : i32
    %c0_i32_0 = arith.constant 0 : i32
    %c0_i32_1 = arith.constant 0 : i32
    return %arg0, %c0_i32, %c0_i32_0 : i32, i32, i32
  }
}

</mosaic_0001>

<llo_original>
// kernel: transformer_encoder_forward.3
$region0: #{transformer_encoder_forward.3}
  #allocation0 [shape = 'u32[]', space=smem, size = 0x4, offset = 0x4, fixed_abs, tag = 'smem constant byte address 0x4 - core index']
  #allocation1 [shape = 'u32[144,128]{1,0:T(1,128)}', space=vmem, size = 0x12000, scoped, tag = 'internal scratch']
  %s0 = inlined_call_operand.hbm [shape: f32[2,8,32], index: 0, kind: input, shape index: {}, may-alias: {0,18}]
  %s1 = inlined_call_operand.hbm [shape: f32[2,8,32], index: 1, kind: input, shape index: {}]
  %s2 = inlined_call_operand.hbm [shape: f32[1,32], index: 2, kind: input, shape index: {}]
  %s3 = inlined_call_operand.hbm [shape: f32[1,32], index: 3, kind: input, shape index: {}]
  %s4 = inlined_call_operand.hbm [shape: bf16[32,64], index: 4, kind: input, shape index: {}]
  %s5 = inlined_call_operand.hbm [shape: f32[1,64], index: 5, kind: input, shape index: {}]
  %s6 = inlined_call_operand.hbm [shape: bf16[32,32], index: 6, kind: input, shape index: {}]
  %s7 = inlined_call_operand.hbm [shape: f32[1,32], index: 7, kind: input, shape index: {}]
  %s8 = inlined_call_operand.hbm [shape: bf16[32,32], index: 8, kind: input, shape index: {}]
  %s9 = inlined_call_operand.hbm [shape: f32[1,32], index: 9, kind: input, shape index: {}]
  %s10 = inlined_call_operand.hbm [shape: f32[1,32], index: 10, kind: input, shape index: {}]
  %s11 = inlined_call_operand.hbm [shape: f32[1,32], index: 11, kind: input, shape index: {}]
  %s12 = inlined_call_operand.hbm [shape: bf16[32,128], index: 12, kind: input, shape index: {}]
  %s13 = inlined_call_operand.hbm [shape: f32[1,128], index: 13, kind: input, shape index: {}]
  %s14 = inlined_call_operand.hbm [shape: bf16[128,32], index: 14, kind: input, shape index: {}]
  %s15 = inlined_call_operand.hbm [shape: f32[1,32], index: 15, kind: input, shape index: {}]
  %s16 = inlined_call_operand.hbm [shape: f32[1,32], index: 16, kind: input, shape index: {}]
  %s17 = inlined_call_operand.hbm [shape: f32[1,32], index: 17, kind: input, shape index: {}]
  %s18 = inlined_call_operand.hbm [shape: f32[2,8,32], index: 18, kind: output, shape index: {}, may-alias: {0,18}]
  %s19 = sld [smem:[#allocation0]]
  $region177: #{transformer_encoder_forward.3} parent=0
    _
  %s21 = ssub.s32 1, %s19
  %s22 = scalar_select 0, %s21, %s19
  $region1: #{transformer_encoder_forward.3} parent=0
    #allocation2 [shape = 'u8[8192]{0}', space=vmem, size = 0x2000, scoped, tag = 'input window, operand 0']
    #allocation3 [shape = 's32[2]{0}', space=sflag, size = 0x8, scoped, tag = 'scoped memory for transformer_encoder_forward.3']
    #allocation4 [shape = 's32[2]{0}', space=sflag, size = 0x8, scoped, tag = 'scoped memory for transformer_encoder_forward.3']
    #allocation5 [shape = 'u8[8192]{0}', space=vmem, size = 0x2000, scoped, tag = 'input window, operand 1']
    #allocation6 [shape = 's32[2]{0}', space=sflag, size = 0x8, scoped, tag = 'scoped memory for transformer_encoder_forward.3']
    #allocation7 [shape = 'u8[512]{0}', space=vmem, size = 0x400, scoped, tag = 'input window, operand 2, single buffered']
    #allocation8 [shape = 'u8[512]{0}', space=vmem, size = 0x400, scoped, tag = 'input window, operand 3, single buffered']
    #allocation9 [shape = 's32[1]{0}', space=sflag, size = 0x4, scoped, tag = 'scoped memory for transformer_encoder_forward.3']
    #allocation10 [shape = 'u8[8192]{0}', space=vmem, size = 0x2000, scoped, tag = 'input window, operand 4, single buffered']
    #allocation11 [shape = 'u8[512]{0}', space=vmem, size = 0x400, scoped, tag = 'input window, operand 5, single buffered']
    #allocation12 [shape = 's32[1]{0}', space=sflag, size = 0x4, scoped, tag = 'scoped memory for transformer_encoder_forward.3']
    #allocation13 [shape = 'u8[8192]{0}', space=vmem, size = 0x2000, scoped, tag = 'input window, operand 6, single buffered']
    #allocation14 [shape = 'u8[512]{0}', space=vmem, size = 0x400, scoped, tag = 'input window, operand 7, single buffered']
    #allocation15 [shape = 's32[1]{0}', space=sflag, size = 0x4, scoped, tag = 'scoped memory for transformer_encoder_forward.3']
    #allocation16 [shape = 'u8[8192]{0}', space=vmem, size = 0x2000, scoped, tag = 'input window, operand 8, single buffered']
    #allocation17 [shape = 'u8[512]{0}', space=vmem, size = 0x400, scoped, tag = 'input window, operand 9, single buffered']
    #allocation18 [shape = 's32[1]{0}', space=sflag, size = 0x4, scoped, tag = 'scoped memory for transformer_encoder_forward.3']
    #allocation19 [shape = 'u8[512]{0}', space=vmem, size = 0x400, scoped, tag = 'input window, operand 10, single buffered']
    #allocation20 [shape = 'u8[512]{0}', space=vmem, size = 0x400, scoped, tag = 'input window, operand 11, single buffered']
    #allocation21 [shape = 's32[1]{0}', space=sflag, size = 0x4, scoped, tag = 'scoped memory for transformer_encoder_forward.3']
    #allocation22 [shape = 'u8[8192]{0}', space=vmem, size = 0x2000, scoped, tag = 'input window, operand 12, single buffered']
    #allocation23 [shape = 'u8[512]{0}', space=vmem, size = 0x400, scoped, tag = 'input window, operand 13, single buffered']
    #allocation24 [shape = 's32[1]{0}', space=sflag, size = 0x4, scoped, tag = 'scoped memory for transformer_encoder_forward.3']
    #allocation25 [shape = 'u8[32768]{0}', space=vmem, size = 0x8000, scoped, tag = 'input window, operand 14, single buffered']
    #allocation26 [shape = 'u8[512]{0}', space=vmem, size = 0x400, scoped, tag = 'input window, operand 15, single buffered']
    #allocation27 [shape = 's32[1]{0}', space=sflag, size = 0x4, scoped, tag = 'scoped memory for transformer_encoder_forward.3']
    #allocation28 [shape = 'u8[512]{0}', space=vmem, size = 0x400, scoped, tag = 'input window, operand 16, single buffered']
    #allocation29 [shape = 'u8[512]{0}', space=vmem, size = 0x400, scoped, tag = 'input window, operand 17, single buffered']
    #allocation30 [shape = 's32[1]{0}', space=sflag, size = 0x4, scoped, tag = 'scoped memory for transformer_encoder_forward.3']
    #allocation31 [shape = 'u8[8192]{0}', space=vmem, size = 0x2000, scoped, tag = 'output window, operand 0']
    %23 = vsyncpa [#allocation3], 0
    %s24 = scalar_lea.sflag [#allocation3], 1
    %25 = vsyncpa %s24, 0
    %26 = vsyncpa [#allocation6], 0
    %s27 = scalar_lea.sflag [#allocation6], 1
    %28 = vsyncpa %s27, 0
    %29 = vsyncpa [#allocation9], 0
    %30 = vsyncpa [#allocation12], 0
    %31 = vsyncpa [#allocation15], 0
    %32 = vsyncpa [#allocation18], 0
    %33 = vsyncpa [#allocation21], 0
    %34 = vsyncpa [#allocation24], 0
    %35 = vsyncpa [#allocation27], 0
    %36 = vsyncpa [#allocation30], 0
    %37 = vsyncpa [#allocation4], 0
    %s38 = scalar_lea.sflag [#allocation4], 1
    %39 = vsyncpa %s38, 0
    loop: start=0, step=1, limit=4
    $region2: #{transformer_encoder_forward.3} parent=1 // loop_pre_header
      _
    $region3: #{transformer_encoder_forward.3} parent=1 // loop_header
      %s41 = sphi 0, %s45
      %p42 = scmp.ge.s32.totalorder %s41, 4
      %s51 = sphi 0, %s53
      %s54 = sphi 0, %s51
      %s55 = sphi 0, %s54
      %s71 = sphi 0, %s55
      %s77 = sphi 0, %s79
      %s80 = sphi 0, %s77
      %s81 = sphi 0, %s80
      %s97 = sphi 0, %s81
      %s101 = sphi 0, %s101
      %s103 = sphi 0, %s101
      %s104 = sphi 0, %s103
      %s118 = sphi 0, %s104
      %s122 = sphi 0, %s122
      %s124 = sphi 0, %s122
      %s125 = sphi 0, %s124
      %s139 = sphi 0, %s125
      %s143 = sphi 0, %s143
      %s145 = sphi 0, %s143
      %s146 = sphi 0, %s145
      %s160 = sphi 0, %s146
      %s164 = sphi 0, %s164
      %s166 = sphi 0, %s164
      %s167 = sphi 0, %s166
      %s181 = sphi 0, %s167
      %s185 = sphi 0, %s185
      %s187 = sphi 0, %s185
      %s188 = sphi 0, %s187
      %s202 = sphi 0, %s188
      %s206 = sphi 0, %s206
      %s208 = sphi 0, %s206
      %s209 = sphi 0, %s208
      %s223 = sphi 0, %s209
      %s227 = sphi 0, %s227
      %s229 = sphi 0, %s227
      %s230 = sphi 0, %s229
      %s244 = sphi 0, %s230
      %s248 = sphi 0, %s248
      %s250 = sphi 0, %s248
      %s251 = sphi 0, %s250
      %s265 = sphi 0, %s251
      %s269 = sphi 0, %s269
      %s271 = sphi 0, %s269
      %s272 = sphi 0, %s271
      %s286 = sphi 0, %s272
      %s290 = sphi 0, %s290
      %s292 = sphi 0, %s290
      %s293 = sphi 0, %s292
      %s307 = sphi 0, %s293
      %s311 = sphi 0, %s311
      %s313 = sphi 0, %s311
      %s314 = sphi 0, %s313
      %s328 = sphi 0, %s314
      %s332 = sphi 0, %s332
      %s334 = sphi 0, %s332
      %s335 = sphi 0, %s334
      %s349 = sphi 0, %s335
      %s353 = sphi 0, %s353
      %s355 = sphi 0, %s353
      %s356 = sphi 0, %s355
      %s370 = sphi 0, %s356
      %s374 = sphi 0, %s374
      %s376 = sphi 0, %s374
      %s377 = sphi 0, %s376
      %s391 = sphi 0, %s377
      %s395 = sphi 0, %s395
      %s397 = sphi 0, %s395
      %s398 = sphi 0, %s397
      %s412 = sphi 0, %s398
      %s416 = sphi 0, %s416
      %s418 = sphi 0, %s416
      %s419 = sphi 0, %s418
      %s433 = sphi 0, %s419
      %s439 = sphi 0, %s441
      %s442 = sphi 0, %s439
      %s443 = sphi 0, %s442
      %s459 = sphi 0, %s443
    $region4: #{transformer_encoder_forward.3} parent=1 // loop_header_branch
      %44 = sbr.rel (%p42) target = $region8
    $region5: #{transformer_encoder_forward.3} parent=1 // loop_body
      %s46 = ssub.s32 %s41, 1
      %s47 = ssub.s32 %s41, 2
      %s48 = sadd.s32 %s41, 1
      %s49 = ssub.s32 %s41, %s48
      %p50 = scmp.eq.s32.totalorder %s49, 0
      %s52 = sadd.s32 %s51, 1
      %s53 = scalar_select %p50, %s51, %s52
      %p56 = pneg %p50
      %p57 = scmp.eq.s32.totalorder %s41, 1
      %p58 = por %p56, %p57
      %p59 = scmp.ne.s32.totalorder %s51, %s54
      %p60 = scmp.eq.s32.totalorder %s41, 0
      %p61 = por %p59, %p60
      %p62 = scmp.ne.s32.totalorder %s51, %s54
      %p63 = scmp.eq.s32.totalorder %s46, 1
      %p64 = por %p62, %p63
      %p65 = scmp.ne.s32.totalorder %s54, %s55
      %p66 = scmp.eq.s32.totalorder %s46, 0
      %p67 = por %p65, %p66
      %p68 = scmp.ne.s32.totalorder %s54, %s55
      %p69 = scmp.eq.s32.totalorder %s47, 1
      %p70 = por %p68, %p69
      %p72 = scmp.ne.s32.totalorder %s55, %s71
      %p73 = scmp.eq.s32.totalorder %s47, 0
      %p74 = por %p72, %p73
      %s75 = ssub.s32 %s41, %s48
      %p76 = scmp.eq.s32.totalorder %s75, 0
      %s78 = sadd.s32 %s77, 1
      %s79 = scalar_select %p76, %s77, %s78
      %p82 = pneg %p76
      %p83 = scmp.eq.s32.totalorder %s41, 1
      %p84 = por %p82, %p83
      %p85 = scmp.ne.s32.totalorder %s77, %s80
      %p86 = scmp.eq.s32.totalorder %s41, 0
      %p87 = por %p85, %p86
      %p88 = scmp.ne.s32.totalorder %s77, %s80
      %p89 = scmp.eq.s32.totalorder %s46, 1
      %p90 = por %p88, %p89
      %p91 = scmp.ne.s32.totalorder %s80, %s81
      %p92 = scmp.eq.s32.totalorder %s46, 0
      %p93 = por %p91, %p92
      %p94 = scmp.ne.s32.totalorder %s80, %s81
      %p95 = scmp.eq.s32.totalorder %s47, 1
      %p96 = por %p94, %p95
      %p98 = scmp.ne.s32.totalorder %s81, %s97
      %p99 = scmp.eq.s32.totalorder %s47, 0
      %p100 = por %p98, %p99
      %s102 = sadd.s32 %s101, 1
      %p105 = scmp.eq.s32.totalorder %s41, 1
      %p106 = scmp.ne.s32.totalorder %s101, %s103
      %p107 = scmp.eq.s32.totalorder %s41, 0
      %p108 = por %p106, %p107
      %p109 = scmp.ne.s32.totalorder %s101, %s103
      %p110 = scmp.eq.s32.totalorder %s46, 1
      %p111 = por %p109, %p110
      %p112 = scmp.ne.s32.totalorder %s103, %s104
      %p113 = scmp.eq.s32.totalorder %s46, 0
      %p114 = por %p112, %p113
      %p115 = scmp.ne.s32.totalorder %s103, %s104
      %p116 = scmp.eq.s32.totalorder %s47, 1
      %p117 = por %p115, %p116
      %p119 = scmp.ne.s32.totalorder %s104, %s118
      %p120 = scmp.eq.s32.totalorder %s47, 0
      %p121 = por %p119, %p120
      %s123 = sadd.s32 %s122, 1
      %p126 = scmp.eq.s32.totalorder %s41, 1
      %p127 = scmp.ne.s32.totalorder %s122, %s124
      %p128 = scmp.eq.s32.totalorder %s41, 0
      %p129 = por %p127, %p128
      %p130 = scmp.ne.s32.totalorder %s122, %s124
      %p131 = scmp.eq.s32.totalorder %s46, 1
      %p132 = por %p130, %p131
      %p133 = scmp.ne.s32.totalorder %s124, %s125
      %p134 = scmp.eq.s32.totalorder %s46, 0
      %p135 = por %p133, %p134
      %p136 = scmp.ne.s32.totalorder %s124, %s125
      %p137 = scmp.eq.s32.totalorder %s47, 1
      %p138 = por %p136, %p137
      %p140 = scmp.ne.s32.totalorder %s125, %s139
      %p141 = scmp.eq.s32.totalorder %s47, 0
      %p142 = por %p140, %p141
      %s144 = sadd.s32 %s143, 1
      %p147 = scmp.eq.s32.totalorder %s41, 1
      %p148 = scmp.ne.s32.totalorder %s143, %s145
      %p149 = scmp.eq.s32.totalorder %s41, 0
      %p150 = por %p148, %p149
      %p151 = scmp.ne.s32.totalorder %s143, %s145
      %p152 = scmp.eq.s32.totalorder %s46, 1
      %p153 = por %p151, %p152
      %p154 = scmp.ne.s32.totalorder %s145, %s146
      %p155 = scmp.eq.s32.totalorder %s46, 0
      %p156 = por %p154, %p155
      %p157 = scmp.ne.s32.totalorder %s145, %s146
      %p158 = scmp.eq.s32.totalorder %s47, 1
      %p159 = por %p157, %p158
      %p161 = scmp.ne.s32.totalorder %s146, %s160
      %p162 = scmp.eq.s32.totalorder %s47, 0
      %p163 = por %p161, %p162
      %s165 = sadd.s32 %s164, 1
      %p168 = scmp.eq.s32.totalorder %s41, 1
      %p169 = scmp.ne.s32.totalorder %s164, %s166
      %p170 = scmp.eq.s32.totalorder %s41, 0
      %p171 = por %p169, %p170
      %p172 = scmp.ne.s32.totalorder %s164, %s166
      %p173 = scmp.eq.s32.totalorder %s46, 1
      %p174 = por %p172, %p173
      %p175 = scmp.ne.s32.totalorder %s166, %s167
      %p176 = scmp.eq.s32.totalorder %s46, 0
      %p177 = por %p175, %p176
      %p178 = scmp.ne.s32.totalorder %s166, %s167
      %p179 = scmp.eq.s32.totalorder %s47, 1
      %p180 = por %p178, %p179
      %p182 = scmp.ne.s32.totalorder %s167, %s181
      %p183 = scmp.eq.s32.totalorder %s47, 0
      %p184 = por %p182, %p183
      %s186 = sadd.s32 %s185, 1
      %p189 = scmp.eq.s32.totalorder %s41, 1
      %p190 = scmp.ne.s32.totalorder %s185, %s187
      %p191 = scmp.eq.s32.totalorder %s41, 0
      %p192 = por %p190, %p191
      %p193 = scmp.ne.s32.totalorder %s185, %s187
      %p194 = scmp.eq.s32.totalorder %s46, 1
      %p195 = por %p193, %p194
      %p196 = scmp.ne.s32.totalorder %s187, %s188
      %p197 = scmp.eq.s32.totalorder %s46, 0
      %p198 = por %p196, %p197
      %p199 = scmp.ne.s32.totalorder %s187, %s188
      %p200 = scmp.eq.s32.totalorder %s47, 1
      %p201 = por %p199, %p200
      %p203 = scmp.ne.s32.totalorder %s188, %s202
      %p204 = scmp.eq.s32.totalorder %s47, 0
      %p205 = por %p203, %p204
      %s207 = sadd.s32 %s206, 1
      %p210 = scmp.eq.s32.totalorder %s41, 1
      %p211 = scmp.ne.s32.totalorder %s206, %s208
      %p212 = scmp.eq.s32.totalorder %s41, 0
      %p213 = por %p211, %p212
      %p214 = scmp.ne.s32.totalorder %s206, %s208
      %p215 = scmp.eq.s32.totalorder %s46, 1
      %p216 = por %p214, %p215
      %p217 = scmp.ne.s32.totalorder %s208, %s209
      %p218 = scmp.eq.s32.totalorder %s46, 0
      %p219 = por %p217, %p218
      %p220 = scmp.ne.s32.totalorder %s208, %s209
      %p221 = scmp.eq.s32.totalorder %s47, 1
      %p222 = por %p220, %p221
      %p224 = scmp.ne.s32.totalorder %s209, %s223
      %p225 = scmp.eq.s32.totalorder %s47, 0
      %p226 = por %p224, %p225
      %s228 = sadd.s32 %s227, 1
      %p231 = scmp.eq.s32.totalorder %s41, 1
      %p232 = scmp.ne.s32.totalorder %s227, %s229
      %p233 = scmp.eq.s32.totalorder %s41, 0
      %p234 = por %p232, %p233
      %p235 = scmp.ne.s32.totalorder %s227, %s229
      %p236 = scmp.eq.s32.totalorder %s46, 1
      %p237 = por %p235, %p236
      %p238 = scmp.ne.s32.totalorder %s229, %s230
      %p239 = scmp.eq.s32.totalorder %s46, 0
      %p240 = por %p238, %p239
      %p241 = scmp.ne.s32.totalorder %s229, %s230
      %p242 = scmp.eq.s32.totalorder %s47, 1
      %p243 = por %p241, %p242
      %p245 = scmp.ne.s32.totalorder %s230, %s244
      %p246 = scmp.eq.s32.totalorder %s47, 0
      %p247 = por %p245, %p246
      %s249 = sadd.s32 %s248, 1
      %p252 = scmp.eq.s32.totalorder %s41, 1
      %p253 = scmp.ne.s32.totalorder %s248, %s250
      %p254 = scmp.eq.s32.totalorder %s41, 0
      %p255 = por %p253, %p254
      %p256 = scmp.ne.s32.totalorder %s248, %s250
      %p257 = scmp.eq.s32.totalorder %s46, 1
      %p258 = por %p256, %p257
      %p259 = scmp.ne.s32.totalorder %s250, %s251
      %p260 = scmp.eq.s32.totalorder %s46, 0
      %p261 = por %p259, %p260
      %p262 = scmp.ne.s32.totalorder %s250, %s251
      %p263 = scmp.eq.s32.totalorder %s47, 1
      %p264 = por %p262, %p263
      %p266 = scmp.ne.s32.totalorder %s251, %s265
      %p267 = scmp.eq.s32.totalorder %s47, 0
      %p268 = por %p266, %p267
      %s270 = sadd.s32 %s269, 1
      %p273 = scmp.eq.s32.totalorder %s41, 1
      %p274 = scmp.ne.s32.totalorder %s269, %s271
      %p275 = scmp.eq.s32.totalorder %s41, 0
      %p276 = por %p274, %p275
      %p277 = scmp.ne.s32.totalorder %s269, %s271
      %p278 = scmp.eq.s32.totalorder %s46, 1
      %p279 = por %p277, %p278
      %p280 = scmp.ne.s32.totalorder %s271, %s272
      %p281 = scmp.eq.s32.totalorder %s46, 0
      %p282 = por %p280, %p281
      %p283 = scmp.ne.s32.totalorder %s271, %s272
      %p284 = scmp.eq.s32.totalorder %s47, 1
      %p285 = por %p283, %p284
      %p287 = scmp.ne.s32.totalorder %s272, %s286
      %p288 = scmp.eq.s32.totalorder %s47, 0
      %p289 = por %p287, %p288
      %s291 = sadd.s32 %s290, 1
      %p294 = scmp.eq.s32.totalorder %s41, 1
      %p295 = scmp.ne.s32.totalorder %s290, %s292
      %p296 = scmp.eq.s32.totalorder %s41, 0
      %p297 = por %p295, %p296
      %p298 = scmp.ne.s32.totalorder %s290, %s292
      %p299 = scmp.eq.s32.totalorder %s46, 1
      %p300 = por %p298, %p299
      %p301 = scmp.ne.s32.totalorder %s292, %s293
      %p302 = scmp.eq.s32.totalorder %s46, 0
      %p303 = por %p301, %p302
      %p304 = scmp.ne.s32.totalorder %s292, %s293
      %p305 = scmp.eq.s32.totalorder %s47, 1
      %p306 = por %p304, %p305
      %p308 = scmp.ne.s32.totalorder %s293, %s307
      %p309 = scmp.eq.s32.totalorder %s47, 0
      %p310 = por %p308, %p309
      %s312 = sadd.s32 %s311, 1
      %p315 = scmp.eq.s32.totalorder %s41, 1
      %p316 = scmp.ne.s32.totalorder %s311, %s313
      %p317 = scmp.eq.s32.totalorder %s41, 0
      %p318 = por %p316, %p317
      %p319 = scmp.ne.s32.totalorder %s311, %s313
      %p320 = scmp.eq.s32.totalorder %s46, 1
      %p321 = por %p319, %p320
      %p322 = scmp.ne.s32.totalorder %s313, %s314
      %p323 = scmp.eq.s32.totalorder %s46, 0
      %p324 = por %p322, %p323
      %p325 = scmp.ne.s32.totalorder %s313, %s314
      %p326 = scmp.eq.s32.totalorder %s47, 1
      %p327 = por %p325, %p326
      %p329 = scmp.ne.s32.totalorder %s314, %s328
      %p330 = scmp.eq.s32.totalorder %s47, 0
      %p331 = por %p329, %p330
      %s333 = sadd.s32 %s332, 1
      %p336 = scmp.eq.s32.totalorder %s41, 1
      %p337 = scmp.ne.s32.totalorder %s332, %s334
      %p338 = scmp.eq.s32.totalorder %s41, 0
      %p339 = por %p337, %p338
      %p340 = scmp.ne.s32.totalorder %s332, %s334
      %p341 = scmp.eq.s32.totalorder %s46, 1
      %p342 = por %p340, %p341
      %p343 = scmp.ne.s32.totalorder %s334, %s335
      %p344 = scmp.eq.s32.totalorder %s46, 0
      %p345 = por %p343, %p344
      %p346 = scmp.ne.s32.totalorder %s334, %s335
      %p347 = scmp.eq.s32.totalorder %s47, 1
      %p348 = por %p346, %p347
      %p350 = scmp.ne.s32.totalorder %s335, %s349
      %p351 = scmp.eq.s32.totalorder %s47, 0
      %p352 = por %p350, %p351
      %s354 = sadd.s32 %s353, 1
      %p357 = scmp.eq.s32.totalorder %s41, 1
      %p358 = scmp.ne.s32.totalorder %s353, %s355
      %p359 = scmp.eq.s32.totalorder %s41, 0
      %p360 = por %p358, %p359
      %p361 = scmp.ne.s32.totalorder %s353, %s355
      %p362 = scmp.eq.s32.totalorder %s46, 1
      %p363 = por %p361, %p362
      %p364 = scmp.ne.s32.totalorder %s355, %s356
      %p365 = scmp.eq.s32.totalorder %s46, 0
      %p366 = por %p364, %p365
      %p367 = scmp.ne.s32.totalorder %s355, %s356
      %p368 = scmp.eq.s32.totalorder %s47, 1
      %p369 = por %p367, %p368
      %p371 = scmp.ne.s32.totalorder %s356, %s370
      %p372 = scmp.eq.s32.totalorder %s47, 0
      %p373 = por %p371, %p372
      %s375 = sadd.s32 %s374, 1
      %p378 = scmp.eq.s32.totalorder %s41, 1
      %p379 = scmp.ne.s32.totalorder %s374, %s376
      %p380 = scmp.eq.s32.totalorder %s41, 0
      %p381 = por %p379, %p380
      %p382 = scmp.ne.s32.totalorder %s374, %s376
      %p383 = scmp.eq.s32.totalorder %s46, 1
      %p384 = por %p382, %p383
      %p385 = scmp.ne.s32.totalorder %s376, %s377
      %p386 = scmp.eq.s32.totalorder %s46, 0
      %p387 = por %p385, %p386
      %p388 = scmp.ne.s32.totalorder %s376, %s377
      %p389 = scmp.eq.s32.totalorder %s47, 1
      %p390 = por %p388, %p389
      %p392 = scmp.ne.s32.totalorder %s377, %s391
      %p393 = scmp.eq.s32.totalorder %s47, 0
      %p394 = por %p392, %p393
      %s396 = sadd.s32 %s395, 1
      %p399 = scmp.eq.s32.totalorder %s41, 1
      %p400 = scmp.ne.s32.totalorder %s395, %s397
      %p401 = scmp.eq.s32.totalorder %s41, 0
      %p402 = por %p400, %p401
      %p403 = scmp.ne.s32.totalorder %s395, %s397
      %p404 = scmp.eq.s32.totalorder %s46, 1
      %p405 = por %p403, %p404
      %p406 = scmp.ne.s32.totalorder %s397, %s398
      %p407 = scmp.eq.s32.totalorder %s46, 0
      %p408 = por %p406, %p407
      %p409 = scmp.ne.s32.totalorder %s397, %s398
      %p410 = scmp.eq.s32.totalorder %s47, 1
      %p411 = por %p409, %p410
      %p413 = scmp.ne.s32.totalorder %s398, %s412
      %p414 = scmp.eq.s32.totalorder %s47, 0
      %p415 = por %p413, %p414
      %s417 = sadd.s32 %s416, 1
      %p420 = scmp.eq.s32.totalorder %s41, 1
      %p421 = scmp.ne.s32.totalorder %s416, %s418
      %p422 = scmp.eq.s32.totalorder %s41, 0
      %p423 = por %p421, %p422
      %p424 = scmp.ne.s32.totalorder %s416, %s418
      %p425 = scmp.eq.s32.totalorder %s46, 1
      %p426 = por %p424, %p425
      %p427 = scmp.ne.s32.totalorder %s418, %s419
      %p428 = scmp.eq.s32.totalorder %s46, 0
      %p429 = por %p427, %p428
      %p430 = scmp.ne.s32.totalorder %s418, %s419
      %p431 = scmp.eq.s32.totalorder %s47, 1
      %p432 = por %p430, %p431
      %p434 = scmp.ne.s32.totalorder %s419, %s433
      %p435 = scmp.eq.s32.totalorder %s47, 0
      %p436 = por %p434, %p435
      %s437 = ssub.s32 %s41, %s48
      %p438 = scmp.eq.s32.totalorder %s437, 0
      %s440 = sadd.s32 %s439, 1
      %s441 = scalar_select %p438, %s439, %s440
      %p444 = pneg %p438
      %p445 = scmp.eq.s32.totalorder %s41, 1
      %p446 = por %p444, %p445
      %p447 = scmp.ne.s32.totalorder %s439, %s442
      %p448 = scmp.eq.s32.totalorder %s41, 0
      %p449 = por %p447, %p448
      %p450 = scmp.ne.s32.totalorder %s439, %s442
      %p451 = scmp.eq.s32.totalorder %s46, 1
      %p452 = por %p450, %p451
      %p453 = scmp.ne.s32.totalorder %s442, %s443
      %p454 = scmp.eq.s32.totalorder %s46, 0
      %p455 = por %p453, %p454
      %p456 = scmp.ne.s32.totalorder %s442, %s443
      %p457 = scmp.eq.s32.totalorder %s47, 1
      %p458 = por %p456, %p457
      %p460 = scmp.ne.s32.totalorder %s443, %s459
      %p461 = scmp.eq.s32.totalorder %s47, 0
      %p462 = por %p460, %p461
      %p463 = scmp.le.s32.totalorder 1, %s41
      %p464 = scmp.lt.s32.totalorder %s41, 3
      %p465 = pnand %p463, %p464
      %p466 = pneg %p465
      // Predicated region
      $region9: #{transformer_encoder_forward.3} parent=5 // pred_check
        _
      $region10: #{transformer_encoder_forward.3} parent=5 // pred_check_branch
        %468 = sbr.rel (%p465) target = $region12
      $region11: #{transformer_encoder_forward.3} parent=5 // pred_region
        %s469 = ssub.s32 %s41, 1
        // Predicated region
        $region13: #{transformer_encoder_forward.3} parent=11 // pred_check
          %p470 = pneg %p114
        $region14: #{transformer_encoder_forward.3} parent=11 // pred_check_branch
          %472 = sbr.rel (%p470) target = $region16
        $region15: #{transformer_encoder_forward.3} parent=11 // pred_region
          %s474 = ssub.s32 16, 16
          %475 = vsyncadd [#allocation6], %s474
          %s477 = sshll.u32 [#allocation7], 4
          %s478 = int_to_ptr.vmem [resolvable:$true] %s477
          %480 = dma.hbm_to_vmem [thread:$0]  %s2, 16, %s478, [#allocation6]
        $region16: #{transformer_encoder_forward.3} parent=11 // pred_fallthru
          _
        // Predicated region
        $region17: #{transformer_encoder_forward.3} parent=11 // pred_check
          %p481 = pneg %p135
        $region18: #{transformer_encoder_forward.3} parent=11 // pred_check_branch
          %483 = sbr.rel (%p481) target = $region20
        $region19: #{transformer_encoder_forward.3} parent=11 // pred_region
          %s485 = ssub.s32 16, 16
          %486 = vsyncadd [#allocation9], %s485
          %s488 = sshll.u32 [#allocation8], 4
          %s489 = int_to_ptr.vmem [resolvable:$true] %s488
          %491 = dma.hbm_to_vmem [thread:$0]  %s3, 16, %s489, [#allocation9]
        $region20: #{transformer_encoder_forward.3} parent=11 // pred_fallthru
          _
        // Predicated region
        $region21: #{transformer_encoder_forward.3} parent=11 // pred_check
          %p492 = pneg %p156
        $region22: #{transformer_encoder_forward.3} parent=11 // pred_check_branch
          %494 = sbr.rel (%p492) target = $region24
        $region23: #{transformer_encoder_forward.3} parent=11 // pred_region
          %s496 = ssub.s32 256, 256
          %497 = vsyncadd [#allocation9], %s496
          %s498 = sshll.u32 [#allocation10], 4
          %s499 = int_to_ptr.vmem [resolvable:$true] %s498
          %504 = dma.hbm_to_vmem [thread:$0]  %s4, 256, %s499, [#allocation9], 64, 64, 4
        $region24: #{transformer_encoder_forward.3} parent=11 // pred_fallthru
          _
        // Predicated region
        $region25: #{transformer_encoder_forward.3} parent=11 // pred_check
          %p505 = pneg %p177
        $region26: #{transformer_encoder_forward.3} parent=11 // pred_check_branch
          %507 = sbr.rel (%p505) target = $region28
        $region27: #{transformer_encoder_forward.3} parent=11 // pred_region
          %s509 = ssub.s32 16, 16
          %510 = vsyncadd [#allocation12], %s509
          %s512 = sshll.u32 [#allocation11], 4
          %s513 = int_to_ptr.vmem [resolvable:$true] %s512
          %515 = dma.hbm_to_vmem [thread:$0]  %s5, 16, %s513, [#allocation12]
        $region28: #{transformer_encoder_forward.3} parent=11 // pred_fallthru
          _
        // Predicated region
        $region29: #{transformer_encoder_forward.3} parent=11 // pred_check
          %p516 = pneg %p198
        $region30: #{transformer_encoder_forward.3} parent=11 // pred_check_branch
          %518 = sbr.rel (%p516) target = $region32
        $region31: #{transformer_encoder_forward.3} parent=11 // pred_region
          %s520 = ssub.s32 256, 256
          %521 = vsyncadd [#allocation12], %s520
          %s522 = sshll.u32 [#allocation13], 4
          %s523 = int_to_ptr.vmem [resolvable:$true] %s522
          %528 = dma.hbm_to_vmem [thread:$0]  %s6, 256, %s523, [#allocation12], 64, 64, 4
        $region32: #{transformer_encoder_forward.3} parent=11 // pred_fallthru
          _
        // Predicated region
        $region33: #{transformer_encoder_forward.3} parent=11 // pred_check
          %p529 = pneg %p219
        $region34: #{transformer_encoder_forward.3} parent=11 // pred_check_branch
          %531 = sbr.rel (%p529) target = $region36
        $region35: #{transformer_encoder_forward.3} parent=11 // pred_region
          %s533 = ssub.s32 16, 16
          %534 = vsyncadd [#allocation15], %s533
          %s536 = sshll.u32 [#allocation14], 4
          %s537 = int_to_ptr.vmem [resolvable:$true] %s536
          %539 = dma.hbm_to_vmem [thread:$0]  %s7, 16, %s537, [#allocation15]
        $region36: #{transformer_encoder_forward.3} parent=11 // pred_fallthru
          _
        // Predicated region
        $region37: #{transformer_encoder_forward.3} parent=11 // pred_check
          %p540 = pneg %p240
        $region38: #{transformer_encoder_forward.3} parent=11 // pred_check_branch
          %542 = sbr.rel (%p540) target = $region40
        $region39: #{transformer_encoder_forward.3} parent=11 // pred_region
          %s544 = ssub.s32 256, 256
          %545 = vsyncadd [#allocation15], %s544
          %s546 = sshll.u32 [#allocation16], 4
          %s547 = int_to_ptr.vmem [resolvable:$true] %s546
          %552 = dma.hbm_to_vmem [thread:$0]  %s8, 256, %s547, [#allocation15], 64, 64, 4
        $region40: #{transformer_encoder_forward.3} parent=11 // pred_fallthru
          _
        // Predicated region
        $region41: #{transformer_encoder_forward.3} parent=11 // pred_check
          %p553 = pneg %p261
        $region42: #{transformer_encoder_forward.3} parent=11 // pred_check_branch
          %555 = sbr.rel (%p553) target = $region44
        $region43: #{transformer_encoder_forward.3} parent=11 // pred_region
          %s557 = ssub.s32 16, 16
          %558 = vsyncadd [#allocation18], %s557
          %s560 = sshll.u32 [#allocation17], 4
          %s561 = int_to_ptr.vmem [resolvable:$true] %s560
          %563 = dma.hbm_to_vmem [thread:$0]  %s9, 16, %s561, [#allocation18]
        $region44: #{transformer_encoder_forward.3} parent=11 // pred_fallthru
          _
        // Predicated region
        $region45: #{transformer_encoder_forward.3} parent=11 // pred_check
          %p564 = pneg %p282
        $region46: #{transformer_encoder_forward.3} parent=11 // pred_check_branch
          %566 = sbr.rel (%p564) target = $region48
        $region47: #{transformer_encoder_forward.3} parent=11 // pred_region
          %s568 = ssub.s32 16, 16
          %569 = vsyncadd [#allocation18], %s568
          %s571 = sshll.u32 [#allocation19], 4
          %s572 = int_to_ptr.vmem [resolvable:$true] %s571
          %574 = dma.hbm_to_vmem [thread:$0]  %s10, 16, %s572, [#allocation18]
        $region48: #{transformer_encoder_forward.3} parent=11 // pred_fallthru
          _
        // Predicated region
        $region49: #{transformer_encoder_forward.3} parent=11 // pred_check
          %p575 = pneg %p303
        $region50: #{transformer_encoder_forward.3} parent=11 // pred_check_branch
          %577 = sbr.rel (%p575) target = $region52
        $region51: #{transformer_encoder_forward.3} parent=11 // pred_region
          %s579 = ssub.s32 16, 16
          %580 = vsyncadd [#allocation21], %s579
          %s582 = sshll.u32 [#allocation20], 4
          %s583 = int_to_ptr.vmem [resolvable:$true] %s582
          %585 = dma.hbm_to_vmem [thread:$0]  %s11, 16, %s583, [#allocation21]
        $region52: #{transformer_encoder_forward.3} parent=11 // pred_fallthru
          _
        // Predicated region
        $region53: #{transformer_encoder_forward.3} parent=11 // pred_check
          %p586 = pneg %p324
        $region54: #{transformer_encoder_forward.3} parent=11 // pred_check_branch
          %588 = sbr.rel (%p586) target = $region56
        $region55: #{transformer_encoder_forward.3} parent=11 // pred_region
          %s590 = ssub.s32 256, 256
          %591 = vsyncadd [#allocation21], %s590
          %s592 = sshll.u32 [#allocation22], 4
          %s593 = int_to_ptr.vmem [resolvable:$true] %s592
          %598 = dma.hbm_to_vmem [thread:$0]  %s12, 256, %s593, [#allocation21], 64, 64, 4
        $region56: #{transformer_encoder_forward.3} parent=11 // pred_fallthru
          _
        // Predicated region
        $region57: #{transformer_encoder_forward.3} parent=11 // pred_check
          %p599 = pneg %p345
        $region58: #{transformer_encoder_forward.3} parent=11 // pred_check_branch
          %601 = sbr.rel (%p599) target = $region60
        $region59: #{transformer_encoder_forward.3} parent=11 // pred_region
          %s603 = ssub.s32 16, 16
          %604 = vsyncadd [#allocation24], %s603
          %s606 = sshll.u32 [#allocation23], 4
          %s607 = int_to_ptr.vmem [resolvable:$true] %s606
          %609 = dma.hbm_to_vmem [thread:$0]  %s13, 16, %s607, [#allocation24]
        $region60: #{transformer_encoder_forward.3} parent=11 // pred_fallthru
          _
        // Predicated region
        $region61: #{transformer_encoder_forward.3} parent=11 // pred_check
          %p610 = pneg %p366
        $region62: #{transformer_encoder_forward.3} parent=11 // pred_check_branch
          %612 = sbr.rel (%p610) target = $region64
        $region63: #{transformer_encoder_forward.3} parent=11 // pred_region
          %s614 = ssub.s32 1024, 1024
          %615 = vsyncadd [#allocation24], %s614
          %s616 = sshll.u32 [#allocation25], 4
          %s617 = int_to_ptr.vmem [resolvable:$true] %s616
          %622 = dma.hbm_to_vmem [thread:$0]  %s14, 1024, %s617, [#allocation24], 64, 64, 4
        $region64: #{transformer_encoder_forward.3} parent=11 // pred_fallthru
          _
        // Predicated region
        $region65: #{transformer_encoder_forward.3} parent=11 // pred_check
          %p623 = pneg %p387
        $region66: #{transformer_encoder_forward.3} parent=11 // pred_check_branch
          %625 = sbr.rel (%p623) target = $region68
        $region67: #{transformer_encoder_forward.3} parent=11 // pred_region
          %s627 = ssub.s32 16, 16
          %628 = vsyncadd [#allocation27], %s627
          %s630 = sshll.u32 [#allocation26], 4
          %s631 = int_to_ptr.vmem [resolvable:$true] %s630
          %633 = dma.hbm_to_vmem [thread:$0]  %s15, 16, %s631, [#allocation27]
        $region68: #{transformer_encoder_forward.3} parent=11 // pred_fallthru
          _
        // Predicated region
        $region69: #{transformer_encoder_forward.3} parent=11 // pred_check
          %p634 = pneg %p408
        $region70: #{transformer_encoder_forward.3} parent=11 // pred_check_branch
          %636 = sbr.rel (%p634) target = $region72
        $region71: #{transformer_encoder_forward.3} parent=11 // pred_region
          %s638 = ssub.s32 16, 16
          %639 = vsyncadd [#allocation27], %s638
          %s641 = sshll.u32 [#allocation28], 4
          %s642 = int_to_ptr.vmem [resolvable:$true] %s641
          %644 = dma.hbm_to_vmem [thread:$0]  %s16, 16, %s642, [#allocation27]
        $region72: #{transformer_encoder_forward.3} parent=11 // pred_fallthru
          _
        // Predicated region
        $region73: #{transformer_encoder_forward.3} parent=11 // pred_check
          %p645 = pneg %p429
        $region74: #{transformer_encoder_forward.3} parent=11 // pred_check_branch
          %647 = sbr.rel (%p645) target = $region76
        $region75: #{transformer_encoder_forward.3} parent=11 // pred_region
          %s649 = ssub.s32 16, 16
          %650 = vsyncadd [#allocation30], %s649
          %s652 = sshll.u32 [#allocation29], 4
          %s653 = int_to_ptr.vmem [resolvable:$true] %s652
          %655 = dma.hbm_to_vmem [thread:$0]  %s17, 16, %s653, [#allocation30]
        $region76: #{transformer_encoder_forward.3} parent=11 // pred_fallthru
          _
      $region12: #{transformer_encoder_forward.3} parent=5 // pred_fallthru
        _
      %p656 = scmp.lt.s32.totalorder %s41, 2
      // Predicated region
      $region77: #{transformer_encoder_forward.3} parent=5 // pred_check
        %p657 = pneg %p656
      $region78: #{transformer_encoder_forward.3} parent=5 // pred_check_branch
        %659 = sbr.rel (%p657) target = $region80
      $region79: #{transformer_encoder_forward.3} parent=5 // pred_region
        // Predicated region
        $region81: #{transformer_encoder_forward.3} parent=79 // pred_check
          %p660 = pneg %p61
        $region82: #{transformer_encoder_forward.3} parent=79 // pred_check_branch
          %662 = sbr.rel (%p660) target = $region84
        $region83: #{transformer_encoder_forward.3} parent=79 // pred_region
          %s663 = sand.u32 %s51, 1
          %s664 = scalar_lea.sflag [#allocation3], %s663
          %s665 = sand.u32 %s51, 1
          %s666 = smul.addr %s665, 8
          %s667 = scalar_lea.vmem [#allocation2], %s666
          %s669 = ssub.s32 128, 128
          %670 = vsyncadd %s664, %s669
          %s671 = smul.addr %s41, 128
          %s672 = scalar_lea.hbm %s0, %s671
          %s674 = sshll.u32 %s667, 4
          %s675 = int_to_ptr.vmem [resolvable:$true] %s674
          %677 = dma.hbm_to_vmem [thread:$0]  %s672, 128, %s675, %s664
        $region84: #{transformer_encoder_forward.3} parent=79 // pred_fallthru
          _
        // Predicated region
        $region85: #{transformer_encoder_forward.3} parent=79 // pred_check
          %p678 = pneg %p87
        $region86: #{transformer_encoder_forward.3} parent=79 // pred_check_branch
          %680 = sbr.rel (%p678) target = $region88
        $region87: #{transformer_encoder_forward.3} parent=79 // pred_region
          %s681 = sand.u32 %s41, 1
          %s682 = scalar_lea.sflag [#allocation6], %s681
          %s683 = sand.u32 %s77, 1
          %s684 = smul.addr %s683, 8
          %s685 = scalar_lea.vmem [#allocation5], %s684
          %s687 = ssub.s32 128, 128
          %688 = vsyncadd %s682, %s687
          %s689 = smul.addr %s41, 128
          %s690 = scalar_lea.hbm %s1, %s689
          %s692 = sshll.u32 %s685, 4
          %s693 = int_to_ptr.vmem [resolvable:$true] %s692
          %695 = dma.hbm_to_vmem [thread:$0]  %s690, 128, %s693, %s682
        $region88: #{transformer_encoder_forward.3} parent=79 // pred_fallthru
          _
      $region80: #{transformer_encoder_forward.3} parent=5 // pred_fallthru
        _
      %p696 = scmp.le.s32.totalorder 1, %s41
      %p697 = scmp.lt.s32.totalorder %s41, 3
      %p698 = pnand %p696, %p697
      %p699 = pneg %p698
      // Predicated region
      $region89: #{transformer_encoder_forward.3} parent=5 // pred_check
        _
      $region90: #{transformer_encoder_forward.3} parent=5 // pred_check_branch
        %701 = sbr.rel (%p698) target = $region92
      $region91: #{transformer_encoder_forward.3} parent=5 // pred_region
        %s702 = ssub.s32 %s41, 1
        %s703 = sand.u32 %s54, 1
        %s704 = scalar_lea.sflag [#allocation3], %s703
        %s705 = sand.u32 %s54, 1
        %s706 = smul.addr %s705, 8
        %s707 = scalar_lea.vmem [#allocation2], %s706
        // Predicated region
        $region93: #{transformer_encoder_forward.3} parent=91 // pred_check
          %p708 = pneg %p67
        $region94: #{transformer_encoder_forward.3} parent=91 // pred_check_branch
          %710 = sbr.rel (%p708) target = $region96
        $region95: #{transformer_encoder_forward.3} parent=91 // pred_region
          %711 = dma.done %s704, 128
        $region96: #{transformer_encoder_forward.3} parent=91 // pred_fallthru
          _
        %s712 = sand.u32 %s46, 1
        %s713 = scalar_lea.sflag [#allocation6], %s712
        %s714 = sand.u32 %s80, 1
        %s715 = smul.addr %s714, 8
        %s716 = scalar_lea.vmem [#allocation5], %s715
        // Predicated region
        $region97: #{transformer_encoder_forward.3} parent=91 // pred_check
          %p717 = pneg %p93
        $region98: #{transformer_encoder_forward.3} parent=91 // pred_check_branch
          %719 = sbr.rel (%p717) target = $region100
        $region99: #{transformer_encoder_forward.3} parent=91 // pred_region
          %720 = dma.done %s713, 128
        $region100: #{transformer_encoder_forward.3} parent=91 // pred_fallthru
          _
        // Predicated region
        $region101: #{transformer_encoder_forward.3} parent=91 // pred_check
          %p721 = pneg %p114
        $region102: #{transformer_encoder_forward.3} parent=91 // pred_check_branch
          %723 = sbr.rel (%p721) target = $region104
        $region103: #{transformer_encoder_forward.3} parent=91 // pred_region
          %724 = dma.done [#allocation6], 16
        $region104: #{transformer_encoder_forward.3} parent=91 // pred_fallthru
          _
        // Predicated region
        $region105: #{transformer_encoder_forward.3} parent=91 // pred_check
          %p725 = pneg %p135
        $region106: #{transformer_encoder_forward.3} parent=91 // pred_check_branch
          %727 = sbr.rel (%p725) target = $region108
        $region107: #{transformer_encoder_forward.3} parent=91 // pred_region
          %728 = dma.done [#allocation9], 16
        $region108: #{transformer_encoder_forward.3} parent=91 // pred_fallthru
          _
        // Predicated region
        $region109: #{transformer_encoder_forward.3} parent=91 // pred_check
          %p729 = pneg %p156
        $region110: #{transformer_encoder_forward.3} parent=91 // pred_check_branch
          %731 = sbr.rel (%p729) target = $region112
        $region111: #{transformer_encoder_forward.3} parent=91 // pred_region
          %732 = dma.done [#allocation9], 256
        $region112: #{transformer_encoder_forward.3} parent=91 // pred_fallthru
          _
        // Predicated region
        $region113: #{transformer_encoder_forward.3} parent=91 // pred_check
          %p733 = pneg %p177
        $region114: #{transformer_encoder_forward.3} parent=91 // pred_check_branch
          %735 = sbr.rel (%p733) target = $region116
        $region115: #{transformer_encoder_forward.3} parent=91 // pred_region
          %736 = dma.done [#allocation12], 16
        $region116: #{transformer_encoder_forward.3} parent=91 // pred_fallthru
          _
        // Predicated region
        $region117: #{transformer_encoder_forward.3} parent=91 // pred_check
          %p737 = pneg %p198
        $region118: #{transformer_encoder_forward.3} parent=91 // pred_check_branch
          %739 = sbr.rel (%p737) target = $region120
        $region119: #{transformer_encoder_forward.3} parent=91 // pred_region
          %740 = dma.done [#allocation12], 256
        $region120: #{transformer_encoder_forward.3} parent=91 // pred_fallthru
          _
        // Predicated region
        $region121: #{transformer_encoder_forward.3} parent=91 // pred_check
          %p741 = pneg %p219
        $region122: #{transformer_encoder_forward.3} parent=91 // pred_check_branch
          %743 = sbr.rel (%p741) target = $region124
        $region123: #{transformer_encoder_forward.3} parent=91 // pred_region
          %744 = dma.done [#allocation15], 16
        $region124: #{transformer_encoder_forward.3} parent=91 // pred_fallthru
          _
        // Predicated region
        $region125: #{transformer_encoder_forward.3} parent=91 // pred_check
          %p745 = pneg %p240
        $region126: #{transformer_encoder_forward.3} parent=91 // pred_check_branch
          %747 = sbr.rel (%p745) target = $region128
        $region127: #{transformer_encoder_forward.3} parent=91 // pred_region
          %748 = dma.done [#allocation15], 256
        $region128: #{transformer_encoder_forward.3} parent=91 // pred_fallthru
          _
        // Predicated region
        $region129: #{transformer_encoder_forward.3} parent=91 // pred_check
          %p749 = pneg %p261
        $region130: #{transformer_encoder_forward.3} parent=91 // pred_check_branch
          %751 = sbr.rel (%p749) target = $region132
        $region131: #{transformer_encoder_forward.3} parent=91 // pred_region
          %752 = dma.done [#allocation18], 16
        $region132: #{transformer_encoder_forward.3} parent=91 // pred_fallthru
          _
        // Predicated region
        $region133: #{transformer_encoder_forward.3} parent=91 // pred_check
          %p753 = pneg %p282
        $region134: #{transformer_encoder_forward.3} parent=91 // pred_check_branch
          %755 = sbr.rel (%p753) target = $region136
        $region135: #{transformer_encoder_forward.3} parent=91 // pred_region
          %756 = dma.done [#allocation18], 16
        $region136: #{transformer_encoder_forward.3} parent=91 // pred_fallthru
          _
        // Predicated region
        $region137: #{transformer_encoder_forward.3} parent=91 // pred_check
          %p757 = pneg %p303
        $region138: #{transformer_encoder_forward.3} parent=91 // pred_check_branch
          %759 = sbr.rel (%p757) target = $region140
        $region139: #{transformer_encoder_forward.3} parent=91 // pred_region
          %760 = dma.done [#allocation21], 16
        $region140: #{transformer_encoder_forward.3} parent=91 // pred_fallthru
          _
        // Predicated region
        $region141: #{transformer_encoder_forward.3} parent=91 // pred_check
          %p761 = pneg %p324
        $region142: #{transformer_encoder_forward.3} parent=91 // pred_check_branch
          %763 = sbr.rel (%p761) target = $region144
        $region143: #{transformer_encoder_forward.3} parent=91 // pred_region
          %764 = dma.done [#allocation21], 256
        $region144: #{transformer_encoder_forward.3} parent=91 // pred_fallthru
          _
        // Predicated region
        $region145: #{transformer_encoder_forward.3} parent=91 // pred_check
          %p765 = pneg %p345
        $region146: #{transformer_encoder_forward.3} parent=91 // pred_check_branch
          %767 = sbr.rel (%p765) target = $region148
        $region147: #{transformer_encoder_forward.3} parent=91 // pred_region
          %768 = dma.done [#allocation24], 16
        $region148: #{transformer_encoder_forward.3} parent=91 // pred_fallthru
          _
        // Predicated region
        $region149: #{transformer_encoder_forward.3} parent=91 // pred_check
          %p769 = pneg %p366
        $region150: #{transformer_encoder_forward.3} parent=91 // pred_check_branch
          %771 = sbr.rel (%p769) target = $region152
        $region151: #{transformer_encoder_forward.3} parent=91 // pred_region
          %772 = dma.done [#allocation24], 1024
        $region152: #{transformer_encoder_forward.3} parent=91 // pred_fallthru
          _
        // Predicated region
        $region153: #{transformer_encoder_forward.3} parent=91 // pred_check
          %p773 = pneg %p387
        $region154: #{transformer_encoder_forward.3} parent=91 // pred_check_branch
          %775 = sbr.rel (%p773) target = $region156
        $region155: #{transformer_encoder_forward.3} parent=91 // pred_region
          %776 = dma.done [#allocation27], 16
        $region156: #{transformer_encoder_forward.3} parent=91 // pred_fallthru
          _
        // Predicated region
        $region157: #{transformer_encoder_forward.3} parent=91 // pred_check
          %p777 = pneg %p408
        $region158: #{transformer_encoder_forward.3} parent=91 // pred_check_branch
          %779 = sbr.rel (%p777) target = $region160
        $region159: #{transformer_encoder_forward.3} parent=91 // pred_region
          %780 = dma.done [#allocation27], 16
        $region160: #{transformer_encoder_forward.3} parent=91 // pred_fallthru
          _
        // Predicated region
        $region161: #{transformer_encoder_forward.3} parent=91 // pred_check
          %p781 = pneg %p429
        $region162: #{transformer_encoder_forward.3} parent=91 // pred_check_branch
          %783 = sbr.rel (%p781) target = $region164
        $region163: #{transformer_encoder_forward.3} parent=91 // pred_region
          %784 = dma.done [#allocation30], 16
        $region164: #{transformer_encoder_forward.3} parent=91 // pred_fallthru
          _
        %s785 = sand.u32 %s54, 1
        %s786 = scalar_lea.sflag [#allocation3], %s785
        %s787 = sand.u32 %s54, 1
        %s788 = smul.addr %s787, 8
        %s789 = scalar_lea.vmem [#allocation2], %s788
        %p790 = pneg %p67
        %p791 = pneg %p64
        %s792 = sand.u32 %s46, 1
        %s793 = scalar_lea.sflag [#allocation6], %s792
        %s794 = sand.u32 %s80, 1
        %s795 = smul.addr %s794, 8
        %s796 = scalar_lea.vmem [#allocation5], %s795
        %p797 = pneg %p93
        %p798 = pneg %p90
        %p799 = pneg %p114
        %p800 = pneg %p111
        %p801 = pneg %p135
        %p802 = pneg %p132
        %p803 = pneg %p156
        %p804 = pneg %p153
        %p805 = pneg %p177
        %p806 = pneg %p174
        %p807 = pneg %p198
        %p808 = pneg %p195
        %p809 = pneg %p219
        %p810 = pneg %p216
        %p811 = pneg %p240
        %p812 = pneg %p237
        %p813 = pneg %p261
        %p814 = pneg %p258
        %p815 = pneg %p282
        %p816 = pneg %p279
        %p817 = pneg %p303
        %p818 = pneg %p300
        %p819 = pneg %p324
        %p820 = pneg %p321
        %p821 = pneg %p345
        %p822 = pneg %p342
        %p823 = pneg %p366
        %p824 = pneg %p363
        %p825 = pneg %p387
        %p826 = pneg %p384
        %p827 = pneg %p408
        %p828 = pneg %p405
        %p829 = pneg %p429
        %p830 = pneg %p426
        %p831 = pneg %p455
        %p832 = pneg %p452
        %s833 = sand.u32 %s442, 1
        %s834 = scalar_lea.sflag [#allocation4], %s833
        %s835 = sand.u32 %s442, 1
        %s836 = smul.addr %s835, 8
        %s837 = scalar_lea.vmem [#allocation31], %s836
        %v839 = vld [vmem:[%s707] sm:$0xff]
        %v840 = vld [vmem:[%s716] sm:$0xff]
        %v841 = vld [vmem:[#allocation7] sm:$0x1]
        %v842 = vld [vmem:[#allocation8] sm:$0x1]
        %vm843 = vcmask 261120
        %v844 = vsel %vm843, %v839, 0.0
        %845 = vadd.xlane.f32.xlu0 %v844
        %v846 = vpop.xlane.xlu0 %845
        %v847 = vrcp.pop 32.0
        %v848 = vmul.f32 %v846, %v847
        %v849 = vsub.f32 %v839, %v848
        %v850 = vmul.f32 %v849, %v849
        %v851 = vsel %vm843, %v850, 0.0
        %852 = vadd.xlane.f32.xlu0 %v851
        %v853 = vpop.xlane.xlu0 %852
        %v854 = vmul.f32 %v853, %v847
        %v855 = vadd.f32 %v854, 1e-05
        %v856 = vrsqrt.pop %v855
        %v857 = vmul.f32 %v849, %v856
        %v859 = vlaneseq
        %v860 = vshrl.u32 %v859, 7
        %v861 = vsub.s32 0, %v860
        %v862 = vrot.slane %v841, %v861
        %v864 = vmul.f32 %v857, %v862
        %v866 = vlaneseq
        %v867 = vshrl.u32 %v866, 7
        %v868 = vsub.s32 0, %v867
        %v869 = vrot.slane %v842, %v868
        %v871 = vadd.f32 %v864, %v869
        %v872 = vadd.f32 %v871, %v840
        %v873 = vld [vmem:[#allocation10] sm:$0xf]
        %v874 = vld [vmem:[#allocation10 + $0x4] sm:$0xf]
        %v875 = vld [vmem:[#allocation10 + $0x8] sm:$0xf]
        %v876 = vld [vmem:[#allocation10 + $0xc] sm:$0xf]
        %v877 = vld [vmem:[#allocation11] sm:$0x1]
        %v878 = vld [vmem:[#allocation13] sm:$0xf]
        %v879 = vld [vmem:[#allocation13 + $0x4] sm:$0xf]
        %v880 = vld [vmem:[#allocation13 + $0x8] sm:$0xf]
        %v881 = vld [vmem:[#allocation13 + $0xc] sm:$0xf]
        %v882 = vld [vmem:[#allocation14] sm:$0x1]
        %v883 = vld [vmem:[#allocation16] sm:$0xf]
        %v884 = vld [vmem:[#allocation16 + $0x4] sm:$0xf]
        %v885 = vld [vmem:[#allocation16 + $0x8] sm:$0xf]
        %v886 = vld [vmem:[#allocation16 + $0xc] sm:$0xf]
        %v887 = vld [vmem:[#allocation17] sm:$0x1]
        %v888 = vpack.c.bf16 %v872, %v872
        %v890 = vlaneseq
        %v891 = vshrl.u32 %v890, 7
        %v892 = vsub.s32 0, %v891
        %v893 = vrot.slane %v877, %v892
        %v899 = vunpack.c.l.b16 %v873
        %v900 = vunpack.c.l.b16 %v874
        %v901 = vunpack.c.l.b16 %v875
        %v902 = vunpack.c.l.b16 %v876
        %v903 = vpack.c.b16 %v900, %v899
        %v904 = vpack.c.b16 %v902, %v901
        %v908 = vsel %vm843, %v888, 0
        %910 = vmatprep.subr.bf16.mxu0 0
        %911 = vmatpush1.bf16.msra.mxu0 %v903
        %912 = vmatprep.subr.bf16.mxu0 0
        %913 = vmatpush1.bf16.msra.mxu0 %v904
        %914 = vmatprep.subr.bf16.mxu0 0
        %915 = vmatpush1.bf16.msra.mxu0 0
        %916 = vmatprep.subr.bf16.mxu0 0
        %917 = vmatpush1.bf16.msra.mxu0 0
        %918 = vmatprep.subr.bf16.mxu0 0
        %919 = vmatpush1.bf16.msra.mxu0 0
        %920 = vmatprep.subr.bf16.mxu0 0
        %921 = vmatpush1.bf16.msra.mxu0 0
        %922 = vmatprep.subr.bf16.mxu0 0
        %923 = vmatpush1.bf16.msra.mxu0 0
        %924 = vmatprep.subr.bf16.mxu0 0
        %925 = vmatpush1.bf16.msra.mxu0 0
        %926 = vmatprep.subr.bf16.mxu0 0
        %927 = vmatpush1.bf16.msra.mxu0 0
        %928 = vmatprep.subr.bf16.mxu0 0
        %929 = vmatpush1.bf16.msra.mxu0 0
        %930 = vmatprep.subr.bf16.mxu0 0
        %931 = vmatpush1.bf16.msra.mxu0 0
        %932 = vmatprep.subr.bf16.mxu0 0
        %933 = vmatpush1.bf16.msra.mxu0 0
        %934 = vmatprep.subr.bf16.mxu0 0
        %935 = vmatpush1.bf16.msra.mxu0 0
        %936 = vmatprep.subr.bf16.mxu0 0
        %937 = vmatpush1.bf16.msra.mxu0 0
        %938 = vmatprep.subr.bf16.mxu0 0
        %939 = vmatpush1.bf16.msra.mxu0 0
        %940 = vmatprep.subr.bf16.mxu0 0
        %941 = vmatpush1.bf16.msra.mxu0 0
        %942 = vmatprep.mubr.bf16.mxu0 0
        %943 = vmatmul.mubr.bf16.gmra.mrb[0].mxu0 %v908
        %v944 = vpop.f32.mrb[0].mxu0
        %v945 = vadd.f32 %v893, %v944
        %v946 = vpop.f32.mrb[0].mxu0
        %v947 = vpop.f32.mrb[0].mxu0
        %v948 = vpop.f32.mrb[0].mxu0
        %949 = vdwg.mxu0
        %v950 = vpack.c.bf16 %v871, %v871
        %v952 = vlaneseq
        %v953 = vshrl.u32 %v952, 7
        %v954 = vsub.s32 0, %v953
        %v955 = vrot.slane %v882, %v954
        %v961 = vunpack.c.l.b16 %v878
        %v962 = vunpack.c.l.b16 %v879
        %v963 = vunpack.c.l.b16 %v880
        %v964 = vunpack.c.l.b16 %v881
        %v965 = vpack.c.b16 %v962, %v961
        %v966 = vpack.c.b16 %v964, %v963
        %v970 = vsel %vm843, %v950, 0
        %972 = vmatprep.subr.bf16.mxu0 0
        %973 = vmatpush1.bf16.msra.mxu0 %v965
        %974 = vmatprep.subr.bf16.mxu0 0
        %975 = vmatpush1.bf16.msra.mxu0 %v966
        %976 = vmatprep.subr.bf16.mxu0 0
        %977 = vmatpush1.bf16.msra.mxu0 0
        %978 = vmatprep.subr.bf16.mxu0 0
        %979 = vmatpush1.bf16.msra.mxu0 0
        %980 = vmatprep.subr.bf16.mxu0 0
        %981 = vmatpush1.bf16.msra.mxu0 0
        %982 = vmatprep.subr.bf16.mxu0 0
        %983 = vmatpush1.bf16.msra.mxu0 0
        %984 = vmatprep.subr.bf16.mxu0 0
        %985 = vmatpush1.bf16.msra.mxu0 0
        %986 = vmatprep.subr.bf16.mxu0 0
        %987 = vmatpush1.bf16.msra.mxu0 0
        %988 = vmatprep.subr.bf16.mxu0 0
        %989 = vmatpush1.bf16.msra.mxu0 0
        %990 = vmatprep.subr.bf16.mxu0 0
        %991 = vmatpush1.bf16.msra.mxu0 0
        %992 = vmatprep.subr.bf16.mxu0 0
        %993 = vmatpush1.bf16.msra.mxu0 0
        %994 = vmatprep.subr.bf16.mxu0 0
        %995 = vmatpush1.bf16.msra.mxu0 0
        %996 = vmatprep.subr.bf16.mxu0 0
        %997 = vmatpush1.bf16.msra.mxu0 0
        %998 = vmatprep.subr.bf16.mxu0 0
        %999 = vmatpush1.bf16.msra.mxu0 0
        %1000 = vmatprep.subr.bf16.mxu0 0
        %1001 = vmatpush1.bf16.msra.mxu0 0
        %1002 = vmatprep.subr.bf16.mxu0 0
        %1003 = vmatpush1.bf16.msra.mxu0 0
        %1004 = vmatprep.mubr.bf16.mxu0 0
        %1005 = vmatmul.mubr.bf16.gmra.mrb[0].mxu0 %v970
        %v1006 = vpop.f32.mrb[0].mxu0
        %v1007 = vadd.f32 %v955, %v1006
        %v1008 = vpop.f32.mrb[0].mxu0
        %v1009 = vpop.f32.mrb[0].mxu0
        %v1010 = vpop.f32.mrb[0].mxu0
        %1011 = vdwg.mxu0
        %v1012 = vpack.c.bf16 %v945, %v945
        %v1013 = vpack.c.bf16 %v1007, %v1007
        %1015 = vrot.lane.b32.xlu0 %v1012, 96
        %v1016 = vpop.permute.xlu0 %1015
        %vm1017 = vcmask 64512
        %v1019 = vsel %vm1017, %v1012, 0
        %v1022 = vsel %vm1017, %v1016, 0
        %1024 = vmatprep.subr.bf16.mxu0 0
        %1025 = vmatpush1.bf16.xpose.msra.mxu0 %v1022
        %1026 = vmatprep.subr.bf16.mxu0 0
        %1027 = vmatpush1.bf16.xpose.msra.mxu0 0
        %1028 = vmatprep.subr.bf16.mxu0 0
        %1029 = vmatpush1.bf16.xpose.msra.mxu0 0
        %1030 = vmatprep.subr.bf16.mxu0 0
        %1031 = vmatpush1.bf16.xpose.msra.mxu0 0
        %1032 = vmatprep.subr.bf16.mxu0 0
        %1033 = vmatpush1.bf16.xpose.msra.mxu0 0
        %1034 = vmatprep.subr.bf16.mxu0 0
        %1035 = vmatpush1.bf16.xpose.msra.mxu0 0
        %1036 = vmatprep.subr.bf16.mxu0 0
        %1037 = vmatpush1.bf16.xpose.msra.mxu0 0
        %1038 = vmatprep.subr.bf16.mxu0 0
        %1039 = vmatpush1.bf16.xpose.msra.mxu0 0
        %1040 = vmatprep.subr.bf16.mxu0 0
        %1041 = vmatpush1.bf16.xpose.msra.mxu0 0
        %1042 = vmatprep.subr.bf16.mxu0 0
        %1043 = vmatpush1.bf16.xpose.msra.mxu0 0
        %1044 = vmatprep.subr.bf16.mxu0 0
        %1045 = vmatpush1.bf16.xpose.msra.mxu0 0
        %1046 = vmatprep.subr.bf16.mxu0 0
        %1047 = vmatpush1.bf16.xpose.msra.mxu0 0
        %1048 = vmatprep.subr.bf16.mxu0 0
        %1049 = vmatpush1.bf16.xpose.msra.mxu0 0
        %1050 = vmatprep.subr.bf16.mxu0 0
        %1051 = vmatpush1.bf16.xpose.msra.mxu0 0
        %1052 = vmatprep.subr.bf16.mxu0 0
        %1053 = vmatpush1.bf16.xpose.msra.mxu0 0
        %1054 = vmatprep.subr.bf16.mxu0 0
        %1055 = vmatpush1.bf16.xpose.msra.mxu0 0
        %1056 = vmatprep.mubr.bf16.mxu0 0
        %1057 = vmatmul.mubr.bf16.gmra.mrb[0].mxu0 %v1019
        %v1058 = vpop.f32.mrb[0].mxu0
        %v1059 = vadd.f32 0.0, %v1058
        %v1060 = vpop.f32.mrb[0].mxu0
        %v1061 = vpop.f32.mrb[0].mxu0
        %v1062 = vpop.f32.mrb[0].mxu0
        %1063 = vdwg.mxu0
        %v1064 = vsel %vm1017, %v1059, -inf
        %1065 = vmax.xlane.f32.xlu0 %v1064
        %v1066 = vpop.xlane.xlu0 %1065
        %v1067 = vsub.f32 %v1059, %v1066
        %v1068 = vmul.f32 %v1067, 1.442695
        %v1069 = vpow.pop %v1068
        %v1070 = vsel %vm1017, %v1069, 0.0
        %1071 = vadd.xlane.f32.xlu0 %v1070
        %v1072 = vpop.xlane.xlu0 %1071
        %v1073 = vrcp.pop %v1072
        %v1074 = vmul.f32 %v1069, %v1073
        %v1075 = vpack.c.bf16 %v1074, %v1074
        %v1077 = vsel %vm1017, %v1075, 0
        %vm1079 = vcmask 1043456
        %v1081 = vsel %vm1079, %v1013, 0
        %1083 = vmatprep.subr.bf16.mxu0 0
        %1084 = vmatpush1.bf16.msra.mxu0 %v1081
        %1085 = vmatprep.subr.bf16.mxu0 0
        %1086 = vmatpush1.bf16.msra.mxu0 0
        %1087 = vmatprep.subr.bf16.mxu0 0
        %1088 = vmatpush1.bf16.msra.mxu0 0
        %1089 = vmatprep.subr.bf16.mxu0 0
        %1090 = vmatpush1.bf16.msra.mxu0 0
        %1091 = vmatprep.subr.bf16.mxu0 0
        %1092 = vmatpush1.bf16.msra.mxu0 0
        %1093 = vmatprep.subr.bf16.mxu0 0
        %1094 = vmatpush1.bf16.msra.mxu0 0
        %1095 = vmatprep.subr.bf16.mxu0 0
        %1096 = vmatpush1.bf16.msra.mxu0 0
        %1097 = vmatprep.subr.bf16.mxu0 0
        %1098 = vmatpush1.bf16.msra.mxu0 0
        %1099 = vmatprep.subr.bf16.mxu0 0
        %1100 = vmatpush1.bf16.msra.mxu0 0
        %1101 = vmatprep.subr.bf16.mxu0 0
        %1102 = vmatpush1.bf16.msra.mxu0 0
        %1103 = vmatprep.subr.bf16.mxu0 0
        %1104 = vmatpush1.bf16.msra.mxu0 0
        %1105 = vmatprep.subr.bf16.mxu0 0
        %1106 = vmatpush1.bf16.msra.mxu0 0
        %1107 = vmatprep.subr.bf16.mxu0 0
        %1108 = vmatpush1.bf16.msra.mxu0 0
        %1109 = vmatprep.subr.bf16.mxu0 0
        %1110 = vmatpush1.bf16.msra.mxu0 0
        %1111 = vmatprep.subr.bf16.mxu0 0
        %1112 = vmatpush1.bf16.msra.mxu0 0
        %1113 = vmatprep.subr.bf16.mxu0 0
        %1114 = vmatpush1.bf16.msra.mxu0 0
        %1115 = vmatprep.mubr.bf16.mxu0 0
        %1116 = vmatmul.mubr.bf16.gmra.mrb[0].mxu0 %v1077
        %v1117 = vpop.f32.mrb[0].mxu0
        %v1118 = vadd.f32 0.0, %v1117
        %v1119 = vpop.f32.mrb[0].mxu0
        %v1120 = vpop.f32.mrb[0].mxu0
        %v1121 = vpop.f32.mrb[0].mxu0
        %1122 = vdwg.mxu0
        %1123 = vrot.lane.b32.xlu0 %v1012, 120
        %v1124 = vpop.permute.xlu0 %1123
        %1125 = vrot.lane.b32.xlu0 %v1012, 88
        %v1126 = vpop.permute.xlu0 %1125
        %v1128 = vsel %vm1017, %v1124, 0
        %v1131 = vsel %vm1017, %v1126, 0
        %1133 = vmatprep.subr.bf16.mxu0 0
        %1134 = vmatpush1.bf16.xpose.msra.mxu0 %v1131
        %1135 = vmatprep.subr.bf16.mxu0 0
        %1136 = vmatpush1.bf16.xpose.msra.mxu0 0
        %1137 = vmatprep.subr.bf16.mxu0 0
        %1138 = vmatpush1.bf16.xpose.msra.mxu0 0
        %1139 = vmatprep.subr.bf16.mxu0 0
        %1140 = vmatpush1.bf16.xpose.msra.mxu0 0
        %1141 = vmatprep.subr.bf16.mxu0 0
        %1142 = vmatpush1.bf16.xpose.msra.mxu0 0
        %1143 = vmatprep.subr.bf16.mxu0 0
        %1144 = vmatpush1.bf16.xpose.msra.mxu0 0
        %1145 = vmatprep.subr.bf16.mxu0 0
        %1146 = vmatpush1.bf16.xpose.msra.mxu0 0
        %1147 = vmatprep.subr.bf16.mxu0 0
        %1148 = vmatpush1.bf16.xpose.msra.mxu0 0
        %1149 = vmatprep.subr.bf16.mxu0 0
        %1150 = vmatpush1.bf16.xpose.msra.mxu0 0
        %1151 = vmatprep.subr.bf16.mxu0 0
        %1152 = vmatpush1.bf16.xpose.msra.mxu0 0
        %1153 = vmatprep.subr.bf16.mxu0 0
        %1154 = vmatpush1.bf16.xpose.msra.mxu0 0
        %1155 = vmatprep.subr.bf16.mxu0 0
        %1156 = vmatpush1.bf16.xpose.msra.mxu0 0
        %1157 = vmatprep.subr.bf16.mxu0 0
        %1158 = vmatpush1.bf16.xpose.msra.mxu0 0
        %1159 = vmatprep.subr.bf16.mxu0 0
        %1160 = vmatpush1.bf16.xpose.msra.mxu0 0
        %1161 = vmatprep.subr.bf16.mxu0 0
        %1162 = vmatpush1.bf16.xpose.msra.mxu0 0
        %1163 = vmatprep.subr.bf16.mxu0 0
        %1164 = vmatpush1.bf16.xpose.msra.mxu0 0
        %1165 = vmatprep.mubr.bf16.mxu0 0
        %1166 = vmatmul.mubr.bf16.gmra.mrb[0].mxu0 %v1128
        %v1167 = vpop.f32.mrb[0].mxu0
        %v1168 = vadd.f32 0.0, %v1167
        %v1169 = vpop.f32.mrb[0].mxu0
        %v1170 = vpop.f32.mrb[0].mxu0
        %v1171 = vpop.f32.mrb[0].mxu0
        %1172 = vdwg.mxu0
        %v1173 = vsel %vm1017, %v1168, -inf
        %1174 = vmax.xlane.f32.xlu0 %v1173
        %v1175 = vpop.xlane.xlu0 %1174
        %v1176 = vsub.f32 %v1168, %v1175
        %v1177 = vmul.f32 %v1176, 1.442695
        %v1178 = vpow.pop %v1177
        %v1179 = vsel %vm1017, %v1178, 0.0
        %1180 = vadd.xlane.f32.xlu0 %v1179
        %v1181 = vpop.xlane.xlu0 %1180
        %v1182 = vrcp.pop %v1181
        %v1183 = vmul.f32 %v1178, %v1182
        %v1184 = vpack.c.bf16 %v1183, %v1183
        %1186 = vrot.lane.b32.xlu0 %v1013, 120
        %v1187 = vpop.permute.xlu0 %1186
        %v1189 = vsel %vm1017, %v1184, 0
        %v1192 = vsel %vm1079, %v1187, 0
        %1194 = vmatprep.subr.bf16.mxu0 0
        %1195 = vmatpush1.bf16.msra.mxu0 %v1192
        %1196 = vmatprep.subr.bf16.mxu0 0
        %1197 = vmatpush1.bf16.msra.mxu0 0
        %1198 = vmatprep.subr.bf16.mxu0 0
        %1199 = vmatpush1.bf16.msra.mxu0 0
        %1200 = vmatprep.subr.bf16.mxu0 0
        %1201 = vmatpush1.bf16.msra.mxu0 0
        %1202 = vmatprep.subr.bf16.mxu0 0
        %1203 = vmatpush1.bf16.msra.mxu0 0
        %1204 = vmatprep.subr.bf16.mxu0 0
        %1205 = vmatpush1.bf16.msra.mxu0 0
        %1206 = vmatprep.subr.bf16.mxu0 0
        %1207 = vmatpush1.bf16.msra.mxu0 0
        %1208 = vmatprep.subr.bf16.mxu0 0
        %1209 = vmatpush1.bf16.msra.mxu0 0
        %1210 = vmatprep.subr.bf16.mxu0 0
        %1211 = vmatpush1.bf16.msra.mxu0 0
        %1212 = vmatprep.subr.bf16.mxu0 0
        %1213 = vmatpush1.bf16.msra.mxu0 0
        %1214 = vmatprep.subr.bf16.mxu0 0
        %1215 = vmatpush1.bf16.msra.mxu0 0
        %1216 = vmatprep.subr.bf16.mxu0 0
        %1217 = vmatpush1.bf16.msra.mxu0 0
        %1218 = vmatprep.subr.bf16.mxu0 0
        %1219 = vmatpush1.bf16.msra.mxu0 0
        %1220 = vmatprep.subr.bf16.mxu0 0
        %1221 = vmatpush1.bf16.msra.mxu0 0
        %1222 = vmatprep.subr.bf16.mxu0 0
        %1223 = vmatpush1.bf16.msra.mxu0 0
        %1224 = vmatprep.subr.bf16.mxu0 0
        %1225 = vmatpush1.bf16.msra.mxu0 0
        %1226 = vmatprep.mubr.bf16.mxu0 0
        %1227 = vmatmul.mubr.bf16.gmra.mrb[0].mxu0 %v1189
        %v1228 = vpop.f32.mrb[0].mxu0
        %v1229 = vadd.f32 0.0, %v1228
        %v1230 = vpop.f32.mrb[0].mxu0
        %v1231 = vpop.f32.mrb[0].mxu0
        %v1232 = vpop.f32.mrb[0].mxu0
        %1233 = vdwg.mxu0
        %1234 = vrot.lane.b32.xlu0 %v1012, 112
        %v1235 = vpop.permute.xlu0 %1234
        %1236 = vrot.lane.b32.xlu0 %v1012, 80
        %v1237 = vpop.permute.xlu0 %1236
        %v1239 = vsel %vm1017, %v1235, 0
        %v1242 = vsel %vm1017, %v1237, 0
        %1244 = vmatprep.subr.bf16.mxu0 0
        %1245 = vmatpush1.bf16.xpose.msra.mxu0 %v1242
        %1246 = vmatprep.subr.bf16.mxu0 0
        %1247 = vmatpush1.bf16.xpose.msra.mxu0 0
        %1248 = vmatprep.subr.bf16.mxu0 0
        %1249 = vmatpush1.bf16.xpose.msra.mxu0 0
        %1250 = vmatprep.subr.bf16.mxu0 0
        %1251 = vmatpush1.bf16.xpose.msra.mxu0 0
        %1252 = vmatprep.subr.bf16.mxu0 0
        %1253 = vmatpush1.bf16.xpose.msra.mxu0 0
        %1254 = vmatprep.subr.bf16.mxu0 0
        %1255 = vmatpush1.bf16.xpose.msra.mxu0 0
        %1256 = vmatprep.subr.bf16.mxu0 0
        %1257 = vmatpush1.bf16.xpose.msra.mxu0 0
        %1258 = vmatprep.subr.bf16.mxu0 0
        %1259 = vmatpush1.bf16.xpose.msra.mxu0 0
        %1260 = vmatprep.subr.bf16.mxu0 0
        %1261 = vmatpush1.bf16.xpose.msra.mxu0 0
        %1262 = vmatprep.subr.bf16.mxu0 0
        %1263 = vmatpush1.bf16.xpose.msra.mxu0 0
        %1264 = vmatprep.subr.bf16.mxu0 0
        %1265 = vmatpush1.bf16.xpose.msra.mxu0 0
        %1266 = vmatprep.subr.bf16.mxu0 0
        %1267 = vmatpush1.bf16.xpose.msra.mxu0 0
        %1268 = vmatprep.subr.bf16.mxu0 0
        %1269 = vmatpush1.bf16.xpose.msra.mxu0 0
        %1270 = vmatprep.subr.bf16.mxu0 0
        %1271 = vmatpush1.bf16.xpose.msra.mxu0 0
        %1272 = vmatprep.subr.bf16.mxu0 0
        %1273 = vmatpush1.bf16.xpose.msra.mxu0 0
        %1274 = vmatprep.subr.bf16.mxu0 0
        %1275 = vmatpush1.bf16.xpose.msra.mxu0 0
        %1276 = vmatprep.mubr.bf16.mxu0 0
        %1277 = vmatmul.mubr.bf16.gmra.mrb[0].mxu0 %v1239
        %v1278 = vpop.f32.mrb[0].mxu0
        %v1279 = vadd.f32 0.0, %v1278
        %v1280 = vpop.f32.mrb[0].mxu0
        %v1281 = vpop.f32.mrb[0].mxu0
        %v1282 = vpop.f32.mrb[0].mxu0
        %1283 = vdwg.mxu0
        %v1284 = vsel %vm1017, %v1279, -inf
        %1285 = vmax.xlane.f32.xlu0 %v1284
        %v1286 = vpop.xlane.xlu0 %1285
        %v1287 = vsub.f32 %v1279, %v1286
        %v1288 = vmul.f32 %v1287, 1.442695
        %v1289 = vpow.pop %v1288
        %v1290 = vsel %vm1017, %v1289, 0.0
        %1291 = vadd.xlane.f32.xlu0 %v1290
        %v1292 = vpop.xlane.xlu0 %1291
        %v1293 = vrcp.pop %v1292
        %v1294 = vmul.f32 %v1289, %v1293
        %v1295 = vpack.c.bf16 %v1294, %v1294
        %1296 = vrot.lane.b32.xlu0 %v1013, 112
        %v1297 = vpop.permute.xlu0 %1296
        %v1299 = vsel %vm1017, %v1295, 0
        %v1302 = vsel %vm1079, %v1297, 0
        %1304 = vmatprep.subr.bf16.mxu0 0
        %1305 = vmatpush1.bf16.msra.mxu0 %v1302
        %1306 = vmatprep.subr.bf16.mxu0 0
        %1307 = vmatpush1.bf16.msra.mxu0 0
        %1308 = vmatprep.subr.bf16.mxu0 0
        %1309 = vmatpush1.bf16.msra.mxu0 0
        %1310 = vmatprep.subr.bf16.mxu0 0
        %1311 = vmatpush1.bf16.msra.mxu0 0
        %1312 = vmatprep.subr.bf16.mxu0 0
        %1313 = vmatpush1.bf16.msra.mxu0 0
        %1314 = vmatprep.subr.bf16.mxu0 0
        %1315 = vmatpush1.bf16.msra.mxu0 0
        %1316 = vmatprep.subr.bf16.mxu0 0
        %1317 = vmatpush1.bf16.msra.mxu0 0
        %1318 = vmatprep.subr.bf16.mxu0 0
        %1319 = vmatpush1.bf16.msra.mxu0 0
        %1320 = vmatprep.subr.bf16.mxu0 0
        %1321 = vmatpush1.bf16.msra.mxu0 0
        %1322 = vmatprep.subr.bf16.mxu0 0
        %1323 = vmatpush1.bf16.msra.mxu0 0
        %1324 = vmatprep.subr.bf16.mxu0 0
        %1325 = vmatpush1.bf16.msra.mxu0 0
        %1326 = vmatprep.subr.bf16.mxu0 0
        %1327 = vmatpush1.bf16.msra.mxu0 0
        %1328 = vmatprep.subr.bf16.mxu0 0
        %1329 = vmatpush1.bf16.msra.mxu0 0
        %1330 = vmatprep.subr.bf16.mxu0 0
        %1331 = vmatpush1.bf16.msra.mxu0 0
        %1332 = vmatprep.subr.bf16.mxu0 0
        %1333 = vmatpush1.bf16.msra.mxu0 0
        %1334 = vmatprep.subr.bf16.mxu0 0
        %1335 = vmatpush1.bf16.msra.mxu0 0
        %1336 = vmatprep.mubr.bf16.mxu0 0
        %1337 = vmatmul.mubr.bf16.gmra.mrb[0].mxu0 %v1299
        %v1338 = vpop.f32.mrb[0].mxu0
        %v1339 = vadd.f32 0.0, %v1338
        %v1340 = vpop.f32.mrb[0].mxu0
        %v1341 = vpop.f32.mrb[0].mxu0
        %v1342 = vpop.f32.mrb[0].mxu0
        %1343 = vdwg.mxu0
        %1344 = vrot.lane.b32.xlu0 %v1012, 104
        %v1345 = vpop.permute.xlu0 %1344
        %1346 = vrot.lane.b32.xlu0 %v1012, 72
        %v1347 = vpop.permute.xlu0 %1346
        %v1349 = vsel %vm1017, %v1345, 0
        %v1352 = vsel %vm1017, %v1347, 0
        %1354 = vmatprep.subr.bf16.mxu0 0
        %1355 = vmatpush1.bf16.xpose.msra.mxu0 %v1352
        %1356 = vmatprep.subr.bf16.mxu0 0
        %1357 = vmatpush1.bf16.xpose.msra.mxu0 0
        %1358 = vmatprep.subr.bf16.mxu0 0
        %1359 = vmatpush1.bf16.xpose.msra.mxu0 0
        %1360 = vmatprep.subr.bf16.mxu0 0
        %1361 = vmatpush1.bf16.xpose.msra.mxu0 0
        %1362 = vmatprep.subr.bf16.mxu0 0
        %1363 = vmatpush1.bf16.xpose.msra.mxu0 0
        %1364 = vmatprep.subr.bf16.mxu0 0
        %1365 = vmatpush1.bf16.xpose.msra.mxu0 0
        %1366 = vmatprep.subr.bf16.mxu0 0
        %1367 = vmatpush1.bf16.xpose.msra.mxu0 0
        %1368 = vmatprep.subr.bf16.mxu0 0
        %1369 = vmatpush1.bf16.xpose.msra.mxu0 0
        %1370 = vmatprep.subr.bf16.mxu0 0
        %1371 = vmatpush1.bf16.xpose.msra.mxu0 0
        %1372 = vmatprep.subr.bf16.mxu0 0
        %1373 = vmatpush1.bf16.xpose.msra.mxu0 0
        %1374 = vmatprep.subr.bf16.mxu0 0
        %1375 = vmatpush1.bf16.xpose.msra.mxu0 0
        %1376 = vmatprep.subr.bf16.mxu0 0
        %1377 = vmatpush1.bf16.xpose.msra.mxu0 0
        %1378 = vmatprep.subr.bf16.mxu0 0
        %1379 = vmatpush1.bf16.xpose.msra.mxu0 0
        %1380 = vmatprep.subr.bf16.mxu0 0
        %1381 = vmatpush1.bf16.xpose.msra.mxu0 0
        %1382 = vmatprep.subr.bf16.mxu0 0
        %1383 = vmatpush1.bf16.xpose.msra.mxu0 0
        %1384 = vmatprep.subr.bf16.mxu0 0
        %1385 = vmatpush1.bf16.xpose.msra.mxu0 0
        %1386 = vmatprep.mubr.bf16.mxu0 0
        %1387 = vmatmul.mubr.bf16.gmra.mrb[0].mxu0 %v1349
        %v1388 = vpop.f32.mrb[0].mxu0
        %v1389 = vadd.f32 0.0, %v1388
        %v1390 = vpop.f32.mrb[0].mxu0
        %v1391 = vpop.f32.mrb[0].mxu0
        %v1392 = vpop.f32.mrb[0].mxu0
        %1393 = vdwg.mxu0
        %v1394 = vsel %vm1017, %v1389, -inf
        %1395 = vmax.xlane.f32.xlu0 %v1394
        %v1396 = vpop.xlane.xlu0 %1395
        %v1397 = vsub.f32 %v1389, %v1396
        %v1398 = vmul.f32 %v1397, 1.442695
        %v1399 = vpow.pop %v1398
        %v1400 = vsel %vm1017, %v1399, 0.0
        %1401 = vadd.xlane.f32.xlu0 %v1400
        %v1402 = vpop.xlane.xlu0 %1401
        %v1403 = vrcp.pop %v1402
        %v1404 = vmul.f32 %v1399, %v1403
        %v1405 = vpack.c.bf16 %v1404, %v1404
        %1406 = vrot.lane.b32.xlu0 %v1013, 104
        %v1407 = vpop.permute.xlu0 %1406
        %v1409 = vsel %vm1017, %v1405, 0
        %v1412 = vsel %vm1079, %v1407, 0
        %1414 = vmatprep.subr.bf16.mxu0 0
        %1415 = vmatpush1.bf16.msra.mxu0 %v1412
        %1416 = vmatprep.subr.bf16.mxu0 0
        %1417 = vmatpush1.bf16.msra.mxu0 0
        %1418 = vmatprep.subr.bf16.mxu0 0
        %1419 = vmatpush1.bf16.msra.mxu0 0
        %1420 = vmatprep.subr.bf16.mxu0 0
        %1421 = vmatpush1.bf16.msra.mxu0 0
        %1422 = vmatprep.subr.bf16.mxu0 0
        %1423 = vmatpush1.bf16.msra.mxu0 0
        %1424 = vmatprep.subr.bf16.mxu0 0
        %1425 = vmatpush1.bf16.msra.mxu0 0
        %1426 = vmatprep.subr.bf16.mxu0 0
        %1427 = vmatpush1.bf16.msra.mxu0 0
        %1428 = vmatprep.subr.bf16.mxu0 0
        %1429 = vmatpush1.bf16.msra.mxu0 0
        %1430 = vmatprep.subr.bf16.mxu0 0
        %1431 = vmatpush1.bf16.msra.mxu0 0
        %1432 = vmatprep.subr.bf16.mxu0 0
        %1433 = vmatpush1.bf16.msra.mxu0 0
        %1434 = vmatprep.subr.bf16.mxu0 0
        %1435 = vmatpush1.bf16.msra.mxu0 0
        %1436 = vmatprep.subr.bf16.mxu0 0
        %1437 = vmatpush1.bf16.msra.mxu0 0
        %1438 = vmatprep.subr.bf16.mxu0 0
        %1439 = vmatpush1.bf16.msra.mxu0 0
        %1440 = vmatprep.subr.bf16.mxu0 0
        %1441 = vmatpush1.bf16.msra.mxu0 0
        %1442 = vmatprep.subr.bf16.mxu0 0
        %1443 = vmatpush1.bf16.msra.mxu0 0
        %1444 = vmatprep.subr.bf16.mxu0 0
        %1445 = vmatpush1.bf16.msra.mxu0 0
        %1446 = vmatprep.mubr.bf16.mxu0 0
        %1447 = vmatmul.mubr.bf16.gmra.mrb[0].mxu0 %v1409
        %v1448 = vpop.f32.mrb[0].mxu0
        %v1449 = vadd.f32 0.0, %v1448
        %v1450 = vpop.f32.mrb[0].mxu0
        %v1451 = vpop.f32.mrb[0].mxu0
        %v1452 = vpop.f32.mrb[0].mxu0
        %1453 = vdwg.mxu0
        %1455 = vrot.lane.b32.xlu0 %v1229, 8
        %v1456 = vpop.permute.xlu0 %1455
        %1459 = vrot.lane.b32.xlu0 %v1339, 16
        %v1460 = vpop.permute.xlu0 %1459
        %1463 = vrot.lane.b32.xlu0 %v1449, 24
        %v1464 = vpop.permute.xlu0 %1463
        %v1466 = vsel %vm1017, %v1118, %v1456
        %vm1467 = vcmask 130048
        %v1468 = vsel %vm1467, %v1466, %v1460
        %vm1469 = vcmask 195584
        %v1470 = vsel %vm1469, %v1468, %v1464
        %v1471 = vpack.c.bf16 %v1470, %v1470
        %v1473 = vlaneseq
        %v1474 = vshrl.u32 %v1473, 7
        %v1475 = vsub.s32 0, %v1474
        %v1476 = vrot.slane %v887, %v1475
        %v1482 = vunpack.c.l.b16 %v883
        %v1483 = vunpack.c.l.b16 %v884
        %v1484 = vunpack.c.l.b16 %v885
        %v1485 = vunpack.c.l.b16 %v886
        %v1486 = vpack.c.b16 %v1483, %v1482
        %v1487 = vpack.c.b16 %v1485, %v1484
        %v1491 = vsel %vm843, %v1471, 0
        %1493 = vmatprep.subr.bf16.mxu0 0
        %1494 = vmatpush1.bf16.msra.mxu0 %v1486
        %1495 = vmatprep.subr.bf16.mxu0 0
        %1496 = vmatpush1.bf16.msra.mxu0 %v1487
        %1497 = vmatprep.subr.bf16.mxu0 0
        %1498 = vmatpush1.bf16.msra.mxu0 0
        %1499 = vmatprep.subr.bf16.mxu0 0
        %1500 = vmatpush1.bf16.msra.mxu0 0
        %1501 = vmatprep.subr.bf16.mxu0 0
        %1502 = vmatpush1.bf16.msra.mxu0 0
        %1503 = vmatprep.subr.bf16.mxu0 0
        %1504 = vmatpush1.bf16.msra.mxu0 0
        %1505 = vmatprep.subr.bf16.mxu0 0
        %1506 = vmatpush1.bf16.msra.mxu0 0
        %1507 = vmatprep.subr.bf16.mxu0 0
        %1508 = vmatpush1.bf16.msra.mxu0 0
        %1509 = vmatprep.subr.bf16.mxu0 0
        %1510 = vmatpush1.bf16.msra.mxu0 0
        %1511 = vmatprep.subr.bf16.mxu0 0
        %1512 = vmatpush1.bf16.msra.mxu0 0
        %1513 = vmatprep.subr.bf16.mxu0 0
        %1514 = vmatpush1.bf16.msra.mxu0 0
        %1515 = vmatprep.subr.bf16.mxu0 0
        %1516 = vmatpush1.bf16.msra.mxu0 0
        %1517 = vmatprep.subr.bf16.mxu0 0
        %1518 = vmatpush1.bf16.msra.mxu0 0
        %1519 = vmatprep.subr.bf16.mxu0 0
        %1520 = vmatpush1.bf16.msra.mxu0 0
        %1521 = vmatprep.subr.bf16.mxu0 0
        %1522 = vmatpush1.bf16.msra.mxu0 0
        %1523 = vmatprep.subr.bf16.mxu0 0
        %1524 = vmatpush1.bf16.msra.mxu0 0
        %1525 = vmatprep.mubr.bf16.mxu0 0
        %1526 = vmatmul.mubr.bf16.gmra.mrb[0].mxu0 %v1491
        %v1527 = vpop.f32.mrb[0].mxu0
        %v1528 = vadd.f32 %v1476, %v1527
        %v1529 = vpop.f32.mrb[0].mxu0
        %v1530 = vpop.f32.mrb[0].mxu0
        %v1531 = vpop.f32.mrb[0].mxu0
        %1532 = vdwg.mxu0
        %v1533 = vadd.f32 %v839, %v1528
        %v1534 = vld [vmem:[#allocation19] sm:$0x1]
        %v1535 = vld [vmem:[#allocation20] sm:$0x1]
        %v1536 = vsel %vm843, %v1533, 0.0
        %1537 = vadd.xlane.f32.xlu0 %v1536
        %v1538 = vpop.xlane.xlu0 %1537
        %v1539 = vmul.f32 %v1538, %v847
        %v1540 = vsub.f32 %v1533, %v1539
        %v1541 = vmul.f32 %v1540, %v1540
        %v1542 = vsel %vm843, %v1541, 0.0
        %1543 = vadd.xlane.f32.xlu0 %v1542
        %v1544 = vpop.xlane.xlu0 %1543
        %v1545 = vmul.f32 %v1544, %v847
        %v1546 = vadd.f32 %v1545, 1e-05
        %v1547 = vrsqrt.pop %v1546
        %v1548 = vmul.f32 %v1540, %v1547
        %v1550 = vlaneseq
        %v1551 = vshrl.u32 %v1550, 7
        %v1552 = vsub.s32 0, %v1551
        %v1553 = vrot.slane %v1534, %v1552
        %v1555 = vmul.f32 %v1548, %v1553
        %v1557 = vlaneseq
        %v1558 = vshrl.u32 %v1557, 7
        %v1559 = vsub.s32 0, %v1558
        %v1560 = vrot.slane %v1535, %v1559
        %v1562 = vadd.f32 %v1555, %v1560
        %v1563 = vpack.c.bf16 %v1562, %v1562
        %v1564 = vld [vmem:[#allocation22] sm:$0xf]
        %v1565 = vld [vmem:[#allocation22 + $0x4] sm:$0xf]
        %v1566 = vld [vmem:[#allocation22 + $0x8] sm:$0xf]
        %v1567 = vld [vmem:[#allocation22 + $0xc] sm:$0xf]
        %v1568 = vld [vmem:[#allocation23] sm:$0x1]
        %v1570 = vlaneseq
        %v1571 = vshrl.u32 %v1570, 7
        %v1572 = vsub.s32 0, %v1571
        %v1573 = vrot.slane %v1568, %v1572
        %v1579 = vunpack.c.l.b16 %v1564
        %v1580 = vunpack.c.l.b16 %v1565
        %v1581 = vunpack.c.l.b16 %v1566
        %v1582 = vunpack.c.l.b16 %v1567
        %v1583 = vpack.c.b16 %v1580, %v1579
        %v1584 = vpack.c.b16 %v1582, %v1581
        %v1588 = vsel %vm843, %v1563, 0
        %1590 = vmatprep.subr.bf16.mxu0 0
        %1591 = vmatpush1.bf16.msra.mxu0 %v1583
        %1592 = vmatprep.subr.bf16.mxu0 0
        %1593 = vmatpush1.bf16.msra.mxu0 %v1584
        %1594 = vmatprep.subr.bf16.mxu0 0
        %1595 = vmatpush1.bf16.msra.mxu0 0
        %1596 = vmatprep.subr.bf16.mxu0 0
        %1597 = vmatpush1.bf16.msra.mxu0 0
        %1598 = vmatprep.subr.bf16.mxu0 0
        %1599 = vmatpush1.bf16.msra.mxu0 0
        %1600 = vmatprep.subr.bf16.mxu0 0
        %1601 = vmatpush1.bf16.msra.mxu0 0
        %1602 = vmatprep.subr.bf16.mxu0 0
        %1603 = vmatpush1.bf16.msra.mxu0 0
        %1604 = vmatprep.subr.bf16.mxu0 0
        %1605 = vmatpush1.bf16.msra.mxu0 0
        %1606 = vmatprep.subr.bf16.mxu0 0
        %1607 = vmatpush1.bf16.msra.mxu0 0
        %1608 = vmatprep.subr.bf16.mxu0 0
        %1609 = vmatpush1.bf16.msra.mxu0 0
        %1610 = vmatprep.subr.bf16.mxu0 0
        %1611 = vmatpush1.bf16.msra.mxu0 0
        %1612 = vmatprep.subr.bf16.mxu0 0
        %1613 = vmatpush1.bf16.msra.mxu0 0
        %1614 = vmatprep.subr.bf16.mxu0 0
        %1615 = vmatpush1.bf16.msra.mxu0 0
        %1616 = vmatprep.subr.bf16.mxu0 0
        %1617 = vmatpush1.bf16.msra.mxu0 0
        %1618 = vmatprep.subr.bf16.mxu0 0
        %1619 = vmatpush1.bf16.msra.mxu0 0
        %1620 = vmatprep.subr.bf16.mxu0 0
        %1621 = vmatpush1.bf16.msra.mxu0 0
        %1622 = vmatprep.mubr.bf16.mxu0 0
        %1623 = vmatmul.mubr.bf16.gmra.mrb[0].mxu0 %v1588
        %v1624 = vpop.f32.mrb[0].mxu0
        %v1625 = vadd.f32 %v1573, %v1624
        %v1626 = vpop.f32.mrb[0].mxu0
        %v1627 = vpop.f32.mrb[0].mxu0
        %v1628 = vpop.f32.mrb[0].mxu0
        %1629 = vdwg.mxu0
        %v1630 = vmax.f32 %v1625, 0.0
        %v1631 = vpack.c.bf16 %v1630, %v1630
        %v1632 = vld [vmem:[#allocation25] sm:$0xf]
        %v1633 = vld [vmem:[#allocation25 + $0x4] sm:$0xf]
        %v1634 = vld [vmem:[#allocation25 + $0x8] sm:$0xf]
        %v1635 = vld [vmem:[#allocation25 + $0xc] sm:$0xf]
        %v1636 = vld [vmem:[#allocation25 + $0x10] sm:$0xf]
        %v1637 = vld [vmem:[#allocation25 + $0x14] sm:$0xf]
        %v1638 = vld [vmem:[#allocation25 + $0x18] sm:$0xf]
        %v1639 = vld [vmem:[#allocation25 + $0x1c] sm:$0xf]
        %v1640 = vld [vmem:[#allocation25 + $0x20] sm:$0xf]
        %v1641 = vld [vmem:[#allocation25 + $0x24] sm:$0xf]
        %v1642 = vld [vmem:[#allocation25 + $0x28] sm:$0xf]
        %v1643 = vld [vmem:[#allocation25 + $0x2c] sm:$0xf]
        %v1644 = vld [vmem:[#allocation25 + $0x30] sm:$0xf]
        %v1645 = vld [vmem:[#allocation25 + $0x34] sm:$0xf]
        %v1646 = vld [vmem:[#allocation25 + $0x38] sm:$0xf]
        %v1647 = vld [vmem:[#allocation25 + $0x3c] sm:$0xf]
        %v1648 = vld [vmem:[#allocation26] sm:$0x1]
        %v1650 = vlaneseq
        %v1651 = vshrl.u32 %v1650, 7
        %v1652 = vsub.s32 0, %v1651
        %v1653 = vrot.slane %v1648, %v1652
        %v1671 = vunpack.c.l.b16 %v1632
        %v1672 = vunpack.c.l.b16 %v1633
        %v1673 = vunpack.c.l.b16 %v1634
        %v1674 = vunpack.c.l.b16 %v1635
        %v1675 = vunpack.c.l.b16 %v1636
        %v1676 = vunpack.c.l.b16 %v1637
        %v1677 = vunpack.c.l.b16 %v1638
        %v1678 = vunpack.c.l.b16 %v1639
        %v1679 = vunpack.c.l.b16 %v1640
        %v1680 = vunpack.c.l.b16 %v1641
        %v1681 = vunpack.c.l.b16 %v1642
        %v1682 = vunpack.c.l.b16 %v1643
        %v1683 = vunpack.c.l.b16 %v1644
        %v1684 = vunpack.c.l.b16 %v1645
        %v1685 = vunpack.c.l.b16 %v1646
        %v1686 = vunpack.c.l.b16 %v1647
        %v1687 = vpack.c.b16 %v1672, %v1671
        %v1688 = vpack.c.b16 %v1674, %v1673
        %v1689 = vpack.c.b16 %v1676, %v1675
        %v1690 = vpack.c.b16 %v1678, %v1677
        %v1691 = vpack.c.b16 %v1680, %v1679
        %v1692 = vpack.c.b16 %v1682, %v1681
        %v1693 = vpack.c.b16 %v1684, %v1683
        %v1694 = vpack.c.b16 %v1686, %v1685
        %1703 = vmatprep.subr.bf16.mxu0 0
        %1704 = vmatpush1.bf16.msra.mxu0 %v1687
        %1705 = vmatprep.subr.bf16.mxu0 0
        %1706 = vmatpush1.bf16.msra.mxu0 %v1688
        %1707 = vmatprep.subr.bf16.mxu0 0
        %1708 = vmatpush1.bf16.msra.mxu0 %v1689
        %1709 = vmatprep.subr.bf16.mxu0 0
        %1710 = vmatpush1.bf16.msra.mxu0 %v1690
        %1711 = vmatprep.subr.bf16.mxu0 0
        %1712 = vmatpush1.bf16.msra.mxu0 %v1691
        %1713 = vmatprep.subr.bf16.mxu0 0
        %1714 = vmatpush1.bf16.msra.mxu0 %v1692
        %1715 = vmatprep.subr.bf16.mxu0 0
        %1716 = vmatpush1.bf16.msra.mxu0 %v1693
        %1717 = vmatprep.subr.bf16.mxu0 0
        %1718 = vmatpush1.bf16.msra.mxu0 %v1694
        %1719 = vmatprep.subr.bf16.mxu0 0
        %1720 = vmatpush1.bf16.msra.mxu0 0
        %1721 = vmatprep.subr.bf16.mxu0 0
        %1722 = vmatpush1.bf16.msra.mxu0 0
        %1723 = vmatprep.subr.bf16.mxu0 0
        %1724 = vmatpush1.bf16.msra.mxu0 0
        %1725 = vmatprep.subr.bf16.mxu0 0
        %1726 = vmatpush1.bf16.msra.mxu0 0
        %1727 = vmatprep.subr.bf16.mxu0 0
        %1728 = vmatpush1.bf16.msra.mxu0 0
        %1729 = vmatprep.subr.bf16.mxu0 0
        %1730 = vmatpush1.bf16.msra.mxu0 0
        %1731 = vmatprep.subr.bf16.mxu0 0
        %1732 = vmatpush1.bf16.msra.mxu0 0
        %1733 = vmatprep.subr.bf16.mxu0 0
        %1734 = vmatpush1.bf16.msra.mxu0 0
        %1735 = vmatprep.mubr.bf16.mxu0 0
        %1736 = vmatmul.mubr.bf16.gmra.mrb[0].mxu0 %v1631
        %v1737 = vpop.f32.mrb[0].mxu0
        %v1738 = vadd.f32 %v1653, %v1737
        %v1739 = vpop.f32.mrb[0].mxu0
        %v1740 = vpop.f32.mrb[0].mxu0
        %v1741 = vpop.f32.mrb[0].mxu0
        %1742 = vdwg.mxu0
        %v1743 = vadd.f32 %v1533, %v1738
        %v1744 = vld [vmem:[#allocation28] sm:$0x1]
        %v1745 = vld [vmem:[#allocation29] sm:$0x1]
        %v1746 = vsel %vm843, %v1743, 0.0
        %1747 = vadd.xlane.f32.xlu0 %v1746
        %v1748 = vpop.xlane.xlu0 %1747
        %v1749 = vmul.f32 %v1748, %v847
        %v1750 = vsub.f32 %v1743, %v1749
        %v1751 = vmul.f32 %v1750, %v1750
        %v1752 = vsel %vm843, %v1751, 0.0
        %1753 = vadd.xlane.f32.xlu0 %v1752
        %v1754 = vpop.xlane.xlu0 %1753
        %v1755 = vmul.f32 %v1754, %v847
        %v1756 = vadd.f32 %v1755, 1e-05
        %v1757 = vrsqrt.pop %v1756
        %v1758 = vmul.f32 %v1750, %v1757
        %v1760 = vlaneseq
        %v1761 = vshrl.u32 %v1760, 7
        %v1762 = vsub.s32 0, %v1761
        %v1763 = vrot.slane %v1744, %v1762
        %v1765 = vmul.f32 %v1758, %v1763
        %v1767 = vlaneseq
        %v1768 = vshrl.u32 %v1767, 7
        %v1769 = vsub.s32 0, %v1768
        %v1770 = vrot.slane %v1745, %v1769
        %v1772 = vadd.f32 %v1765, %v1770
        %1773 = vst.msk [vmem:[%s837] sm:$0xff] %vm843, %v1772
        %s1774 = sand.u32 %s442, 1
        %s1775 = scalar_lea.sflag [#allocation4], %s1774
        %s1776 = sand.u32 %s442, 1
        %s1777 = smul.addr %s1776, 8
        %s1778 = scalar_lea.vmem [#allocation31], %s1777
        // Predicated region
        $region165: #{transformer_encoder_forward.3} parent=91 // pred_check
          %p1779 = pneg %p452
        $region166: #{transformer_encoder_forward.3} parent=91 // pred_check_branch
          %1781 = sbr.rel (%p1779) target = $region168
        $region167: #{transformer_encoder_forward.3} parent=91 // pred_region
          %s1783 = ssub.s32 128, 128
          %1784 = vsyncadd %s1775, %s1783
          %s1785 = smul.addr %s46, 128
          %s1786 = scalar_lea.hbm %s18, %s1785
          %s1788 = sshll.u32 %s1778, 4
          %s1789 = int_to_ptr.vmem [resolvable:$true] %s1788
          %1791 = dma.vmem_to_hbm [thread:$0]  %s1789, 128, %s1786, %s1775
        $region168: #{transformer_encoder_forward.3} parent=91 // pred_fallthru
          _
      $region92: #{transformer_encoder_forward.3} parent=5 // pred_fallthru
        _
      %p1792 = scmp.le.s32.totalorder 2, %s41
      // Predicated region
      $region169: #{transformer_encoder_forward.3} parent=5 // pred_check
        %p1793 = pneg %p1792
      $region170: #{transformer_encoder_forward.3} parent=5 // pred_check_branch
        %1795 = sbr.rel (%p1793) target = $region172
      $region171: #{transformer_encoder_forward.3} parent=5 // pred_region
        %s1796 = ssub.s32 %s41, 2
        // Predicated region
        $region173: #{transformer_encoder_forward.3} parent=171 // pred_check
          %p1797 = pneg %p458
        $region174: #{transformer_encoder_forward.3} parent=171 // pred_check_branch
          %1799 = sbr.rel (%p1797) target = $region176
        $region175: #{transformer_encoder_forward.3} parent=171 // pred_region
          %s1800 = sand.u32 %s443, 1
          %s1801 = scalar_lea.sflag [#allocation4], %s1800
          %s1802 = sand.u32 %s443, 1
          %s1803 = smul.addr %s1802, 8
          %s1804 = scalar_lea.vmem [#allocation31], %s1803
          %1805 = dma.done %s1801, 128
        $region176: #{transformer_encoder_forward.3} parent=171 // pred_fallthru
          _
      $region172: #{transformer_encoder_forward.3} parent=5 // pred_fallthru
        _
    $region6: #{transformer_encoder_forward.3} parent=1 // loop_footer
      %s45 = sadd.s32 1, %s41
    $region7: #{transformer_encoder_forward.3} parent=1 // loop_footer_branch
      %40 = sbr.rel target = $region3
    $region8: #{transformer_encoder_forward.3} parent=1 // loop_exit
      _
    %1806 = vsyncpa [#allocation3], 1
    %s1807 = scalar_lea.sflag [#allocation3], 1
    %1808 = vsyncpa %s1807, 1
    %1809 = vsyncpa [#allocation6], 1
    %s1810 = scalar_lea.sflag [#allocation6], 1
    %1811 = vsyncpa %s1810, 1
    %1812 = vsyncpa [#allocation9], 1
    %1813 = vsyncpa [#allocation12], 1
    %1814 = vsyncpa [#allocation15], 1
    %1815 = vsyncpa [#allocation18], 1
    %1816 = vsyncpa [#allocation21], 1
    %1817 = vsyncpa [#allocation24], 1
    %1818 = vsyncpa [#allocation27], 1
    %1819 = vsyncpa [#allocation30], 1
    %1820 = vsyncpa [#allocation4], 1
    %s1821 = scalar_lea.sflag [#allocation4], 1
    %1822 = vsyncpa %s1821, 1

// kernel: transformer_encoder_forward.2
$region0: #{transformer_encoder_forward.2}
  #allocation0 [shape = 'u32[]', space=smem, size = 0x4, offset = 0x4, fixed_abs, tag = 'smem constant byte address 0x4 - core index']
  #allocation1 [shape = 'u32[144,128]{1,0:T(1,128)}', space=vmem, size = 0x12000, scoped, tag = 'internal scratch']
  %s0 = inlined_call_operand.hbm [shape: f32[2,8,32], index: 0, kind: input, shape index: {}, may-alias: {0,16}]
  %s1 = inlined_call_operand.hbm [shape: f32[2,8,32], index: 1, kind: input, shape index: {}]
  %s2 = inlined_call_operand.hbm [shape: f32[1,32], index: 2, kind: input, shape index: {}]
  %s3 = inlined_call_operand.hbm [shape: f32[1,32], index: 3, kind: input, shape index: {}]
  %s4 = inlined_call_operand.hbm [shape: bf16[32,64], index: 4, kind: input, shape index: {}]
  %s5 = inlined_call_operand.hbm [shape: f32[1,64], index: 5, kind: input, shape index: {}]
  %s6 = inlined_call_operand.hbm [shape: bf16[32,32], index: 6, kind: input, shape index: {}]
  %s7 = inlined_call_operand.hbm [shape: f32[1,32], index: 7, kind: input, shape index: {}]
  %s8 = inlined_call_operand.hbm [shape: bf16[32,32], index: 8, kind: input, shape index: {}]
  %s9 = inlined_call_operand.hbm [shape: f32[1,32], index: 9, kind: input, shape index: {}]
  %s10 = inlined_call_operand.hbm [shape: f32[1,32], index: 10, kind: input, shape index: {}]
  %s11 = inlined_call_operand.hbm [shape: f32[1,32], index: 11, kind: input, shape index: {}]
  %s12 = inlined_call_operand.hbm [shape: bf16[32,128], index: 12, kind: input, shape index: {}]
  %s13 = inlined_call_operand.hbm [shape: f32[1,128], index: 13, kind: input, shape index: {}]
  %s14 = inlined_call_operand.hbm [shape: bf16[128,32], index: 14, kind: input, shape index: {}]
  %s15 = inlined_call_operand.hbm [shape: f32[1,32], index: 15, kind: input, shape index: {}]
  %s16 = inlined_call_operand.hbm [shape: f32[2,8,32], index: 16, kind: output, shape index: {}, may-alias: {0,16}]
  %s17 = sld [smem:[#allocation0]]
  $region161: #{transformer_encoder_forward.2} parent=0
    _
  %s19 = ssub.s32 1, %s17
  %s20 = scalar_select 0, %s19, %s17
  $region1: #{transformer_encoder_forward.2} parent=0
    #allocation2 [shape = 'u8[8192]{0}', space=vmem, size = 0x2000, scoped, tag = 'input window, operand 0']
    #allocation3 [shape = 's32[2]{0}', space=sflag, size = 0x8, scoped, tag = 'scoped memory for transformer_encoder_forward.2']
    #allocation4 [shape = 's32[2]{0}', space=sflag, size = 0x8, scoped, tag = 'scoped memory for transformer_encoder_forward.2']
    #allocation5 [shape = 'u8[8192]{0}', space=vmem, size = 0x2000, scoped, tag = 'input window, operand 1']
    #allocation6 [shape = 's32[2]{0}', space=sflag, size = 0x8, scoped, tag = 'scoped memory for transformer_encoder_forward.2']
    #allocation7 [shape = 'u8[512]{0}', space=vmem, size = 0x400, scoped, tag = 'input window, operand 2, single buffered']
    #allocation8 [shape = 'u8[512]{0}', space=vmem, size = 0x400, scoped, tag = 'input window, operand 3, single buffered']
    #allocation9 [shape = 's32[1]{0}', space=sflag, size = 0x4, scoped, tag = 'scoped memory for transformer_encoder_forward.2']
    #allocation10 [shape = 'u8[8192]{0}', space=vmem, size = 0x2000, scoped, tag = 'input window, operand 4, single buffered']
    #allocation11 [shape = 'u8[512]{0}', space=vmem, size = 0x400, scoped, tag = 'input window, operand 5, single buffered']
    #allocation12 [shape = 's32[1]{0}', space=sflag, size = 0x4, scoped, tag = 'scoped memory for transformer_encoder_forward.2']
    #allocation13 [shape = 'u8[8192]{0}', space=vmem, size = 0x2000, scoped, tag = 'input window, operand 6, single buffered']
    #allocation14 [shape = 'u8[512]{0}', space=vmem, size = 0x400, scoped, tag = 'input window, operand 7, single buffered']
    #allocation15 [shape = 's32[1]{0}', space=sflag, size = 0x4, scoped, tag = 'scoped memory for transformer_encoder_forward.2']
    #allocation16 [shape = 'u8[8192]{0}', space=vmem, size = 0x2000, scoped, tag = 'input window, operand 8, single buffered']
    #allocation17 [shape = 'u8[512]{0}', space=vmem, size = 0x400, scoped, tag = 'input window, operand 9, single buffered']
    #allocation18 [shape = 's32[1]{0}', space=sflag, size = 0x4, scoped, tag = 'scoped memory for transformer_encoder_forward.2']
    #allocation19 [shape = 'u8[512]{0}', space=vmem, size = 0x400, scoped, tag = 'input window, operand 10, single buffered']
    #allocation20 [shape = 'u8[512]{0}', space=vmem, size = 0x400, scoped, tag = 'input window, operand 11, single buffered']
    #allocation21 [shape = 's32[1]{0}', space=sflag, size = 0x4, scoped, tag = 'scoped memory for transformer_encoder_forward.2']
    #allocation22 [shape = 'u8[8192]{0}', space=vmem, size = 0x2000, scoped, tag = 'input window, operand 12, single buffered']
    #allocation23 [shape = 'u8[512]{0}', space=vmem, size = 0x400, scoped, tag = 'input window, operand 13, single buffered']
    #allocation24 [shape = 's32[1]{0}', space=sflag, size = 0x4, scoped, tag = 'scoped memory for transformer_encoder_forward.2']
    #allocation25 [shape = 'u8[32768]{0}', space=vmem, size = 0x8000, scoped, tag = 'input window, operand 14, single buffered']
    #allocation26 [shape = 'u8[512]{0}', space=vmem, size = 0x400, scoped, tag = 'input window, operand 15, single buffered']
    #allocation27 [shape = 's32[1]{0}', space=sflag, size = 0x4, scoped, tag = 'scoped memory for transformer_encoder_forward.2']
    #allocation28 [shape = 'u8[8192]{0}', space=vmem, size = 0x2000, scoped, tag = 'output window, operand 0']
    %21 = vsyncpa [#allocation3], 0
    %s22 = scalar_lea.sflag [#allocation3], 1
    %23 = vsyncpa %s22, 0
    %24 = vsyncpa [#allocation6], 0
    %s25 = scalar_lea.sflag [#allocation6], 1
    %26 = vsyncpa %s25, 0
    %27 = vsyncpa [#allocation9], 0
    %28 = vsyncpa [#allocation12], 0
    %29 = vsyncpa [#allocation15], 0
    %30 = vsyncpa [#allocation18], 0
    %31 = vsyncpa [#allocation21], 0
    %32 = vsyncpa [#allocation24], 0
    %33 = vsyncpa [#allocation27], 0
    %34 = vsyncpa [#allocation4], 0
    %s35 = scalar_lea.sflag [#allocation4], 1
    %36 = vsyncpa %s35, 0
    loop: start=0, step=1, limit=4
    $region2: #{transformer_encoder_forward.2} parent=1 // loop_pre_header
      _
    $region3: #{transformer_encoder_forward.2} parent=1 // loop_header
      %s38 = sphi 0, %s42
      %p39 = scmp.ge.s32.totalorder %s38, 4
      %s48 = sphi 0, %s50
      %s51 = sphi 0, %s48
      %s52 = sphi 0, %s51
      %s68 = sphi 0, %s52
      %s74 = sphi 0, %s76
      %s77 = sphi 0, %s74
      %s78 = sphi 0, %s77
      %s94 = sphi 0, %s78
      %s98 = sphi 0, %s98
      %s100 = sphi 0, %s98
      %s101 = sphi 0, %s100
      %s115 = sphi 0, %s101
      %s119 = sphi 0, %s119
      %s121 = sphi 0, %s119
      %s122 = sphi 0, %s121
      %s136 = sphi 0, %s122
      %s140 = sphi 0, %s140
      %s142 = sphi 0, %s140
      %s143 = sphi 0, %s142
      %s157 = sphi 0, %s143
      %s161 = sphi 0, %s161
      %s163 = sphi 0, %s161
      %s164 = sphi 0, %s163
      %s178 = sphi 0, %s164
      %s182 = sphi 0, %s182
      %s184 = sphi 0, %s182
      %s185 = sphi 0, %s184
      %s199 = sphi 0, %s185
      %s203 = sphi 0, %s203
      %s205 = sphi 0, %s203
      %s206 = sphi 0, %s205
      %s220 = sphi 0, %s206
      %s224 = sphi 0, %s224
      %s226 = sphi 0, %s224
      %s227 = sphi 0, %s226
      %s241 = sphi 0, %s227
      %s245 = sphi 0, %s245
      %s247 = sphi 0, %s245
      %s248 = sphi 0, %s247
      %s262 = sphi 0, %s248
      %s266 = sphi 0, %s266
      %s268 = sphi 0, %s266
      %s269 = sphi 0, %s268
      %s283 = sphi 0, %s269
      %s287 = sphi 0, %s287
      %s289 = sphi 0, %s287
      %s290 = sphi 0, %s289
      %s304 = sphi 0, %s290
      %s308 = sphi 0, %s308
      %s310 = sphi 0, %s308
      %s311 = sphi 0, %s310
      %s325 = sphi 0, %s311
      %s329 = sphi 0, %s329
      %s331 = sphi 0, %s329
      %s332 = sphi 0, %s331
      %s346 = sphi 0, %s332
      %s350 = sphi 0, %s350
      %s352 = sphi 0, %s350
      %s353 = sphi 0, %s352
      %s367 = sphi 0, %s353
      %s371 = sphi 0, %s371
      %s373 = sphi 0, %s371
      %s374 = sphi 0, %s373
      %s388 = sphi 0, %s374
      %s394 = sphi 0, %s396
      %s397 = sphi 0, %s394
      %s398 = sphi 0, %s397
      %s414 = sphi 0, %s398
    $region4: #{transformer_encoder_forward.2} parent=1 // loop_header_branch
      %41 = sbr.rel (%p39) target = $region8
    $region5: #{transformer_encoder_forward.2} parent=1 // loop_body
      %s43 = ssub.s32 %s38, 1
      %s44 = ssub.s32 %s38, 2
      %s45 = sadd.s32 %s38, 1
      %s46 = ssub.s32 %s38, %s45
      %p47 = scmp.eq.s32.totalorder %s46, 0
      %s49 = sadd.s32 %s48, 1
      %s50 = scalar_select %p47, %s48, %s49
      %p53 = pneg %p47
      %p54 = scmp.eq.s32.totalorder %s38, 1
      %p55 = por %p53, %p54
      %p56 = scmp.ne.s32.totalorder %s48, %s51
      %p57 = scmp.eq.s32.totalorder %s38, 0
      %p58 = por %p56, %p57
      %p59 = scmp.ne.s32.totalorder %s48, %s51
      %p60 = scmp.eq.s32.totalorder %s43, 1
      %p61 = por %p59, %p60
      %p62 = scmp.ne.s32.totalorder %s51, %s52
      %p63 = scmp.eq.s32.totalorder %s43, 0
      %p64 = por %p62, %p63
      %p65 = scmp.ne.s32.totalorder %s51, %s52
      %p66 = scmp.eq.s32.totalorder %s44, 1
      %p67 = por %p65, %p66
      %p69 = scmp.ne.s32.totalorder %s52, %s68
      %p70 = scmp.eq.s32.totalorder %s44, 0
      %p71 = por %p69, %p70
      %s72 = ssub.s32 %s38, %s45
      %p73 = scmp.eq.s32.totalorder %s72, 0
      %s75 = sadd.s32 %s74, 1
      %s76 = scalar_select %p73, %s74, %s75
      %p79 = pneg %p73
      %p80 = scmp.eq.s32.totalorder %s38, 1
      %p81 = por %p79, %p80
      %p82 = scmp.ne.s32.totalorder %s74, %s77
      %p83 = scmp.eq.s32.totalorder %s38, 0
      %p84 = por %p82, %p83
      %p85 = scmp.ne.s32.totalorder %s74, %s77
      %p86 = scmp.eq.s32.totalorder %s43, 1
      %p87 = por %p85, %p86
      %p88 = scmp.ne.s32.totalorder %s77, %s78
      %p89 = scmp.eq.s32.totalorder %s43, 0
      %p90 = por %p88, %p89
      %p91 = scmp.ne.s32.totalorder %s77, %s78
      %p92 = scmp.eq.s32.totalorder %s44, 1
      %p93 = por %p91, %p92
      %p95 = scmp.ne.s32.totalorder %s78, %s94
      %p96 = scmp.eq.s32.totalorder %s44, 0
      %p97 = por %p95, %p96
      %s99 = sadd.s32 %s98, 1
      %p102 = scmp.eq.s32.totalorder %s38, 1
      %p103 = scmp.ne.s32.totalorder %s98, %s100
      %p104 = scmp.eq.s32.totalorder %s38, 0
      %p105 = por %p103, %p104
      %p106 = scmp.ne.s32.totalorder %s98, %s100
      %p107 = scmp.eq.s32.totalorder %s43, 1
      %p108 = por %p106, %p107
      %p109 = scmp.ne.s32.totalorder %s100, %s101
      %p110 = scmp.eq.s32.totalorder %s43, 0
      %p111 = por %p109, %p110
      %p112 = scmp.ne.s32.totalorder %s100, %s101
      %p113 = scmp.eq.s32.totalorder %s44, 1
      %p114 = por %p112, %p113
      %p116 = scmp.ne.s32.totalorder %s101, %s115
      %p117 = scmp.eq.s32.totalorder %s44, 0
      %p118 = por %p116, %p117
      %s120 = sadd.s32 %s119, 1
      %p123 = scmp.eq.s32.totalorder %s38, 1
      %p124 = scmp.ne.s32.totalorder %s119, %s121
      %p125 = scmp.eq.s32.totalorder %s38, 0
      %p126 = por %p124, %p125
      %p127 = scmp.ne.s32.totalorder %s119, %s121
      %p128 = scmp.eq.s32.totalorder %s43, 1
      %p129 = por %p127, %p128
      %p130 = scmp.ne.s32.totalorder %s121, %s122
      %p131 = scmp.eq.s32.totalorder %s43, 0
      %p132 = por %p130, %p131
      %p133 = scmp.ne.s32.totalorder %s121, %s122
      %p134 = scmp.eq.s32.totalorder %s44, 1
      %p135 = por %p133, %p134
      %p137 = scmp.ne.s32.totalorder %s122, %s136
      %p138 = scmp.eq.s32.totalorder %s44, 0
      %p139 = por %p137, %p138
      %s141 = sadd.s32 %s140, 1
      %p144 = scmp.eq.s32.totalorder %s38, 1
      %p145 = scmp.ne.s32.totalorder %s140, %s142
      %p146 = scmp.eq.s32.totalorder %s38, 0
      %p147 = por %p145, %p146
      %p148 = scmp.ne.s32.totalorder %s140, %s142
      %p149 = scmp.eq.s32.totalorder %s43, 1
      %p150 = por %p148, %p149
      %p151 = scmp.ne.s32.totalorder %s142, %s143
      %p152 = scmp.eq.s32.totalorder %s43, 0
      %p153 = por %p151, %p152
      %p154 = scmp.ne.s32.totalorder %s142, %s143
      %p155 = scmp.eq.s32.totalorder %s44, 1
      %p156 = por %p154, %p155
      %p158 = scmp.ne.s32.totalorder %s143, %s157
      %p159 = scmp.eq.s32.totalorder %s44, 0
      %p160 = por %p158, %p159
      %s162 = sadd.s32 %s161, 1
      %p165 = scmp.eq.s32.totalorder %s38, 1
      %p166 = scmp.ne.s32.totalorder %s161, %s163
      %p167 = scmp.eq.s32.totalorder %s38, 0
      %p168 = por %p166, %p167
      %p169 = scmp.ne.s32.totalorder %s161, %s163
      %p170 = scmp.eq.s32.totalorder %s43, 1
      %p171 = por %p169, %p170
      %p172 = scmp.ne.s32.totalorder %s163, %s164
      %p173 = scmp.eq.s32.totalorder %s43, 0
      %p174 = por %p172, %p173
      %p175 = scmp.ne.s32.totalorder %s163, %s164
      %p176 = scmp.eq.s32.totalorder %s44, 1
      %p177 = por %p175, %p176
      %p179 = scmp.ne.s32.totalorder %s164, %s178
      %p180 = scmp.eq.s32.totalorder %s44, 0
      %p181 = por %p179, %p180
      %s183 = sadd.s32 %s182, 1
      %p186 = scmp.eq.s32.totalorder %s38, 1
      %p187 = scmp.ne.s32.totalorder %s182, %s184
      %p188 = scmp.eq.s32.totalorder %s38, 0
      %p189 = por %p187, %p188
      %p190 = scmp.ne.s32.totalorder %s182, %s184
      %p191 = scmp.eq.s32.totalorder %s43, 1
      %p192 = por %p190, %p191
      %p193 = scmp.ne.s32.totalorder %s184, %s185
      %p194 = scmp.eq.s32.totalorder %s43, 0
      %p195 = por %p193, %p194
      %p196 = scmp.ne.s32.totalorder %s184, %s185
      %p197 = scmp.eq.s32.totalorder %s44, 1
      %p198 = por %p196, %p197
      %p200 = scmp.ne.s32.totalorder %s185, %s199
      %p201 = scmp.eq.s32.totalorder %s44, 0
      %p202 = por %p200, %p201
      %s204 = sadd.s32 %s203, 1
      %p207 = scmp.eq.s32.totalorder %s38, 1
      %p208 = scmp.ne.s32.totalorder %s203, %s205
      %p209 = scmp.eq.s32.totalorder %s38, 0
      %p210 = por %p208, %p209
      %p211 = scmp.ne.s32.totalorder %s203, %s205
      %p212 = scmp.eq.s32.totalorder %s43, 1
      %p213 = por %p211, %p212
      %p214 = scmp.ne.s32.totalorder %s205, %s206
      %p215 = scmp.eq.s32.totalorder %s43, 0
      %p216 = por %p214, %p215
      %p217 = scmp.ne.s32.totalorder %s205, %s206
      %p218 = scmp.eq.s32.totalorder %s44, 1
      %p219 = por %p217, %p218
      %p221 = scmp.ne.s32.totalorder %s206, %s220
      %p222 = scmp.eq.s32.totalorder %s44, 0
      %p223 = por %p221, %p222
      %s225 = sadd.s32 %s224, 1
      %p228 = scmp.eq.s32.totalorder %s38, 1
      %p229 = scmp.ne.s32.totalorder %s224, %s226
      %p230 = scmp.eq.s32.totalorder %s38, 0
      %p231 = por %p229, %p230
      %p232 = scmp.ne.s32.totalorder %s224, %s226
      %p233 = scmp.eq.s32.totalorder %s43, 1
      %p234 = por %p232, %p233
      %p235 = scmp.ne.s32.totalorder %s226, %s227
      %p236 = scmp.eq.s32.totalorder %s43, 0
      %p237 = por %p235, %p236
      %p238 = scmp.ne.s32.totalorder %s226, %s227
      %p239 = scmp.eq.s32.totalorder %s44, 1
      %p240 = por %p238, %p239
      %p242 = scmp.ne.s32.totalorder %s227, %s241
      %p243 = scmp.eq.s32.totalorder %s44, 0
      %p244 = por %p242, %p243
      %s246 = sadd.s32 %s245, 1
      %p249 = scmp.eq.s32.totalorder %s38, 1
      %p250 = scmp.ne.s32.totalorder %s245, %s247
      %p251 = scmp.eq.s32.totalorder %s38, 0
      %p252 = por %p250, %p251
      %p253 = scmp.ne.s32.totalorder %s245, %s247
      %p254 = scmp.eq.s32.totalorder %s43, 1
      %p255 = por %p253, %p254
      %p256 = scmp.ne.s32.totalorder %s247, %s248
      %p257 = scmp.eq.s32.totalorder %s43, 0
      %p258 = por %p256, %p257
      %p259 = scmp.ne.s32.totalorder %s247, %s248
      %p260 = scmp.eq.s32.totalorder %s44, 1
      %p261 = por %p259, %p260
      %p263 = scmp.ne.s32.totalorder %s248, %s262
      %p264 = scmp.eq.s32.totalorder %s44, 0
      %p265 = por %p263, %p264
      %s267 = sadd.s32 %s266, 1
      %p270 = scmp.eq.s32.totalorder %s38, 1
      %p271 = scmp.ne.s32.totalorder %s266, %s268
      %p272 = scmp.eq.s32.totalorder %s38, 0
      %p273 = por %p271, %p272
      %p274 = scmp.ne.s32.totalorder %s266, %s268
      %p275 = scmp.eq.s32.totalorder %s43, 1
      %p276 = por %p274, %p275
      %p277 = scmp.ne.s32.totalorder %s268, %s269
      %p278 = scmp.eq.s32.totalorder %s43, 0
      %p279 = por %p277, %p278
      %p280 = scmp.ne.s32.totalorder %s268, %s269
      %p281 = scmp.eq.s32.totalorder %s44, 1
      %p282 = por %p280, %p281
      %p284 = scmp.ne.s32.totalorder %s269, %s283
      %p285 = scmp.eq.s32.totalorder %s44, 0
      %p286 = por %p284, %p285
      %s288 = sadd.s32 %s287, 1
      %p291 = scmp.eq.s32.totalorder %s38, 1
      %p292 = scmp.ne.s32.totalorder %s287, %s289
      %p293 = scmp.eq.s32.totalorder %s38, 0
      %p294 = por %p292, %p293
      %p295 = scmp.ne.s32.totalorder %s287, %s289
      %p296 = scmp.eq.s32.totalorder %s43, 1
      %p297 = por %p295, %p296
      %p298 = scmp.ne.s32.totalorder %s289, %s290
      %p299 = scmp.eq.s32.totalorder %s43, 0
      %p300 = por %p298, %p299
      %p301 = scmp.ne.s32.totalorder %s289, %s290
      %p302 = scmp.eq.s32.totalorder %s44, 1
      %p303 = por %p301, %p302
      %p305 = scmp.ne.s32.totalorder %s290, %s304
      %p306 = scmp.eq.s32.totalorder %s44, 0
      %p307 = por %p305, %p306
      %s309 = sadd.s32 %s308, 1
      %p312 = scmp.eq.s32.totalorder %s38, 1
      %p313 = scmp.ne.s32.totalorder %s308, %s310
      %p314 = scmp.eq.s32.totalorder %s38, 0
      %p315 = por %p313, %p314
      %p316 = scmp.ne.s32.totalorder %s308, %s310
      %p317 = scmp.eq.s32.totalorder %s43, 1
      %p318 = por %p316, %p317
      %p319 = scmp.ne.s32.totalorder %s310, %s311
      %p320 = scmp.eq.s32.totalorder %s43, 0
      %p321 = por %p319, %p320
      %p322 = scmp.ne.s32.totalorder %s310, %s311
      %p323 = scmp.eq.s32.totalorder %s44, 1
      %p324 = por %p322, %p323
      %p326 = scmp.ne.s32.totalorder %s311, %s325
      %p327 = scmp.eq.s32.totalorder %s44, 0
      %p328 = por %p326, %p327
      %s330 = sadd.s32 %s329, 1
      %p333 = scmp.eq.s32.totalorder %s38, 1
      %p334 = scmp.ne.s32.totalorder %s329, %s331
      %p335 = scmp.eq.s32.totalorder %s38, 0
      %p336 = por %p334, %p335
      %p337 = scmp.ne.s32.totalorder %s329, %s331
      %p338 = scmp.eq.s32.totalorder %s43, 1
      %p339 = por %p337, %p338
      %p340 = scmp.ne.s32.totalorder %s331, %s332
      %p341 = scmp.eq.s32.totalorder %s43, 0
      %p342 = por %p340, %p341
      %p343 = scmp.ne.s32.totalorder %s331, %s332
      %p344 = scmp.eq.s32.totalorder %s44, 1
      %p345 = por %p343, %p344
      %p347 = scmp.ne.s32.totalorder %s332, %s346
      %p348 = scmp.eq.s32.totalorder %s44, 0
      %p349 = por %p347, %p348
      %s351 = sadd.s32 %s350, 1
      %p354 = scmp.eq.s32.totalorder %s38, 1
      %p355 = scmp.ne.s32.totalorder %s350, %s352
      %p356 = scmp.eq.s32.totalorder %s38, 0
      %p357 = por %p355, %p356
      %p358 = scmp.ne.s32.totalorder %s350, %s352
      %p359 = scmp.eq.s32.totalorder %s43, 1
      %p360 = por %p358, %p359
      %p361 = scmp.ne.s32.totalorder %s352, %s353
      %p362 = scmp.eq.s32.totalorder %s43, 0
      %p363 = por %p361, %p362
      %p364 = scmp.ne.s32.totalorder %s352, %s353
      %p365 = scmp.eq.s32.totalorder %s44, 1
      %p366 = por %p364, %p365
      %p368 = scmp.ne.s32.totalorder %s353, %s367
      %p369 = scmp.eq.s32.totalorder %s44, 0
      %p370 = por %p368, %p369
      %s372 = sadd.s32 %s371, 1
      %p375 = scmp.eq.s32.totalorder %s38, 1
      %p376 = scmp.ne.s32.totalorder %s371, %s373
      %p377 = scmp.eq.s32.totalorder %s38, 0
      %p378 = por %p376, %p377
      %p379 = scmp.ne.s32.totalorder %s371, %s373
      %p380 = scmp.eq.s32.totalorder %s43, 1
      %p381 = por %p379, %p380
      %p382 = scmp.ne.s32.totalorder %s373, %s374
      %p383 = scmp.eq.s32.totalorder %s43, 0
      %p384 = por %p382, %p383
      %p385 = scmp.ne.s32.totalorder %s373, %s374
      %p386 = scmp.eq.s32.totalorder %s44, 1
      %p387 = por %p385, %p386
      %p389 = scmp.ne.s32.totalorder %s374, %s388
      %p390 = scmp.eq.s32.totalorder %s44, 0
      %p391 = por %p389, %p390
      %s392 = ssub.s32 %s38, %s45
      %p393 = scmp.eq.s32.totalorder %s392, 0
      %s395 = sadd.s32 %s394, 1
      %s396 = scalar_select %p393, %s394, %s395
      %p399 = pneg %p393
      %p400 = scmp.eq.s32.totalorder %s38, 1
      %p401 = por %p399, %p400
      %p402 = scmp.ne.s32.totalorder %s394, %s397
      %p403 = scmp.eq.s32.totalorder %s38, 0
      %p404 = por %p402, %p403
      %p405 = scmp.ne.s32.totalorder %s394, %s397
      %p406 = scmp.eq.s32.totalorder %s43, 1
      %p407 = por %p405, %p406
      %p408 = scmp.ne.s32.totalorder %s397, %s398
      %p409 = scmp.eq.s32.totalorder %s43, 0
      %p410 = por %p408, %p409
      %p411 = scmp.ne.s32.totalorder %s397, %s398
      %p412 = scmp.eq.s32.totalorder %s44, 1
      %p413 = por %p411, %p412
      %p415 = scmp.ne.s32.totalorder %s398, %s414
      %p416 = scmp.eq.s32.totalorder %s44, 0
      %p417 = por %p415, %p416
      %p418 = scmp.le.s32.totalorder 1, %s38
      %p419 = scmp.lt.s32.totalorder %s38, 3
      %p420 = pnand %p418, %p419
      %p421 = pneg %p420
      // Predicated region
      $region9: #{transformer_encoder_forward.2} parent=5 // pred_check
        _
      $region10: #{transformer_encoder_forward.2} parent=5 // pred_check_branch
        %423 = sbr.rel (%p420) target = $region12
      $region11: #{transformer_encoder_forward.2} parent=5 // pred_region
        %s424 = ssub.s32 %s38, 1
        // Predicated region
        $region13: #{transformer_encoder_forward.2} parent=11 // pred_check
          %p425 = pneg %p111
        $region14: #{transformer_encoder_forward.2} parent=11 // pred_check_branch
          %427 = sbr.rel (%p425) target = $region16
        $region15: #{transformer_encoder_forward.2} parent=11 // pred_region
          %s429 = ssub.s32 16, 16
          %430 = vsyncadd [#allocation6], %s429
          %s432 = sshll.u32 [#allocation7], 4
          %s433 = int_to_ptr.vmem [resolvable:$true] %s432
          %435 = dma.hbm_to_vmem [thread:$0]  %s2, 16, %s433, [#allocation6]
        $region16: #{transformer_encoder_forward.2} parent=11 // pred_fallthru
          _
        // Predicated region
        $region17: #{transformer_encoder_forward.2} parent=11 // pred_check
          %p436 = pneg %p132
        $region18: #{transformer_encoder_forward.2} parent=11 // pred_check_branch
          %438 = sbr.rel (%p436) target = $region20
        $region19: #{transformer_encoder_forward.2} parent=11 // pred_region
          %s440 = ssub.s32 16, 16
          %441 = vsyncadd [#allocation9], %s440
          %s443 = sshll.u32 [#allocation8], 4
          %s444 = int_to_ptr.vmem [resolvable:$true] %s443
          %446 = dma.hbm_to_vmem [thread:$0]  %s3, 16, %s444, [#allocation9]
        $region20: #{transformer_encoder_forward.2} parent=11 // pred_fallthru
          _
        // Predicated region
        $region21: #{transformer_encoder_forward.2} parent=11 // pred_check
          %p447 = pneg %p153
        $region22: #{transformer_encoder_forward.2} parent=11 // pred_check_branch
          %449 = sbr.rel (%p447) target = $region24
        $region23: #{transformer_encoder_forward.2} parent=11 // pred_region
          %s451 = ssub.s32 256, 256
          %452 = vsyncadd [#allocation9], %s451
          %s453 = sshll.u32 [#allocation10], 4
          %s454 = int_to_ptr.vmem [resolvable:$true] %s453
          %459 = dma.hbm_to_vmem [thread:$0]  %s4, 256, %s454, [#allocation9], 64, 64, 4
        $region24: #{transformer_encoder_forward.2} parent=11 // pred_fallthru
          _
        // Predicated region
        $region25: #{transformer_encoder_forward.2} parent=11 // pred_check
          %p460 = pneg %p174
        $region26: #{transformer_encoder_forward.2} parent=11 // pred_check_branch
          %462 = sbr.rel (%p460) target = $region28
        $region27: #{transformer_encoder_forward.2} parent=11 // pred_region
          %s464 = ssub.s32 16, 16
          %465 = vsyncadd [#allocation12], %s464
          %s467 = sshll.u32 [#allocation11], 4
          %s468 = int_to_ptr.vmem [resolvable:$true] %s467
          %470 = dma.hbm_to_vmem [thread:$0]  %s5, 16, %s468, [#allocation12]
        $region28: #{transformer_encoder_forward.2} parent=11 // pred_fallthru
          _
        // Predicated region
        $region29: #{transformer_encoder_forward.2} parent=11 // pred_check
          %p471 = pneg %p195
        $region30: #{transformer_encoder_forward.2} parent=11 // pred_check_branch
          %473 = sbr.rel (%p471) target = $region32
        $region31: #{transformer_encoder_forward.2} parent=11 // pred_region
          %s475 = ssub.s32 256, 256
          %476 = vsyncadd [#allocation12], %s475
          %s477 = sshll.u32 [#allocation13], 4
          %s478 = int_to_ptr.vmem [resolvable:$true] %s477
          %483 = dma.hbm_to_vmem [thread:$0]  %s6, 256, %s478, [#allocation12], 64, 64, 4
        $region32: #{transformer_encoder_forward.2} parent=11 // pred_fallthru
          _
        // Predicated region
        $region33: #{transformer_encoder_forward.2} parent=11 // pred_check
          %p484 = pneg %p216
        $region34: #{transformer_encoder_forward.2} parent=11 // pred_check_branch
          %486 = sbr.rel (%p484) target = $region36
        $region35: #{transformer_encoder_forward.2} parent=11 // pred_region
          %s488 = ssub.s32 16, 16
          %489 = vsyncadd [#allocation15], %s488
          %s491 = sshll.u32 [#allocation14], 4
          %s492 = int_to_ptr.vmem [resolvable:$true] %s491
          %494 = dma.hbm_to_vmem [thread:$0]  %s7, 16, %s492, [#allocation15]
        $region36: #{transformer_encoder_forward.2} parent=11 // pred_fallthru
          _
        // Predicated region
        $region37: #{transformer_encoder_forward.2} parent=11 // pred_check
          %p495 = pneg %p237
        $region38: #{transformer_encoder_forward.2} parent=11 // pred_check_branch
          %497 = sbr.rel (%p495) target = $region40
        $region39: #{transformer_encoder_forward.2} parent=11 // pred_region
          %s499 = ssub.s32 256, 256
          %500 = vsyncadd [#allocation15], %s499
          %s501 = sshll.u32 [#allocation16], 4
          %s502 = int_to_ptr.vmem [resolvable:$true] %s501
          %507 = dma.hbm_to_vmem [thread:$0]  %s8, 256, %s502, [#allocation15], 64, 64, 4
        $region40: #{transformer_encoder_forward.2} parent=11 // pred_fallthru
          _
        // Predicated region
        $region41: #{transformer_encoder_forward.2} parent=11 // pred_check
          %p508 = pneg %p258
        $region42: #{transformer_encoder_forward.2} parent=11 // pred_check_branch
          %510 = sbr.rel (%p508) target = $region44
        $region43: #{transformer_encoder_forward.2} parent=11 // pred_region
          %s512 = ssub.s32 16, 16
          %513 = vsyncadd [#allocation18], %s512
          %s515 = sshll.u32 [#allocation17], 4
          %s516 = int_to_ptr.vmem [resolvable:$true] %s515
          %518 = dma.hbm_to_vmem [thread:$0]  %s9, 16, %s516, [#allocation18]
        $region44: #{transformer_encoder_forward.2} parent=11 // pred_fallthru
          _
        // Predicated region
        $region45: #{transformer_encoder_forward.2} parent=11 // pred_check
          %p519 = pneg %p279
        $region46: #{transformer_encoder_forward.2} parent=11 // pred_check_branch
          %521 = sbr.rel (%p519) target = $region48
        $region47: #{transformer_encoder_forward.2} parent=11 // pred_region
          %s523 = ssub.s32 16, 16
          %524 = vsyncadd [#allocation18], %s523
          %s526 = sshll.u32 [#allocation19], 4
          %s527 = int_to_ptr.vmem [resolvable:$true] %s526
          %529 = dma.hbm_to_vmem [thread:$0]  %s10, 16, %s527, [#allocation18]
        $region48: #{transformer_encoder_forward.2} parent=11 // pred_fallthru
          _
        // Predicated region
        $region49: #{transformer_encoder_forward.2} parent=11 // pred_check
          %p530 = pneg %p300
        $region50: #{transformer_encoder_forward.2} parent=11 // pred_check_branch
          %532 = sbr.rel (%p530) target = $region52
        $region51: #{transformer_encoder_forward.2} parent=11 // pred_region
          %s534 = ssub.s32 16, 16
          %535 = vsyncadd [#allocation21], %s534
          %s537 = sshll.u32 [#allocation20], 4
          %s538 = int_to_ptr.vmem [resolvable:$true] %s537
          %540 = dma.hbm_to_vmem [thread:$0]  %s11, 16, %s538, [#allocation21]
        $region52: #{transformer_encoder_forward.2} parent=11 // pred_fallthru
          _
        // Predicated region
        $region53: #{transformer_encoder_forward.2} parent=11 // pred_check
          %p541 = pneg %p321
        $region54: #{transformer_encoder_forward.2} parent=11 // pred_check_branch
          %543 = sbr.rel (%p541) target = $region56
        $region55: #{transformer_encoder_forward.2} parent=11 // pred_region
          %s545 = ssub.s32 256, 256
          %546 = vsyncadd [#allocation21], %s545
          %s547 = sshll.u32 [#allocation22], 4
          %s548 = int_to_ptr.vmem [resolvable:$true] %s547
          %553 = dma.hbm_to_vmem [thread:$0]  %s12, 256, %s548, [#allocation21], 64, 64, 4
        $region56: #{transformer_encoder_forward.2} parent=11 // pred_fallthru
          _
        // Predicated region
        $region57: #{transformer_encoder_forward.2} parent=11 // pred_check
          %p554 = pneg %p342
        $region58: #{transformer_encoder_forward.2} parent=11 // pred_check_branch
          %556 = sbr.rel (%p554) target = $region60
        $region59: #{transformer_encoder_forward.2} parent=11 // pred_region
          %s558 = ssub.s32 16, 16
          %559 = vsyncadd [#allocation24], %s558
          %s561 = sshll.u32 [#allocation23], 4
          %s562 = int_to_ptr.vmem [resolvable:$true] %s561
          %564 = dma.hbm_to_vmem [thread:$0]  %s13, 16, %s562, [#allocation24]
        $region60: #{transformer_encoder_forward.2} parent=11 // pred_fallthru
          _
        // Predicated region
        $region61: #{transformer_encoder_forward.2} parent=11 // pred_check
          %p565 = pneg %p363
        $region62: #{transformer_encoder_forward.2} parent=11 // pred_check_branch
          %567 = sbr.rel (%p565) target = $region64
        $region63: #{transformer_encoder_forward.2} parent=11 // pred_region
          %s569 = ssub.s32 1024, 1024
          %570 = vsyncadd [#allocation24], %s569
          %s571 = sshll.u32 [#allocation25], 4
          %s572 = int_to_ptr.vmem [resolvable:$true] %s571
          %577 = dma.hbm_to_vmem [thread:$0]  %s14, 1024, %s572, [#allocation24], 64, 64, 4
        $region64: #{transformer_encoder_forward.2} parent=11 // pred_fallthru
          _
        // Predicated region
        $region65: #{transformer_encoder_forward.2} parent=11 // pred_check
          %p578 = pneg %p384
        $region66: #{transformer_encoder_forward.2} parent=11 // pred_check_branch
          %580 = sbr.rel (%p578) target = $region68
        $region67: #{transformer_encoder_forward.2} parent=11 // pred_region
          %s582 = ssub.s32 16, 16
          %583 = vsyncadd [#allocation27], %s582
          %s585 = sshll.u32 [#allocation26], 4
          %s586 = int_to_ptr.vmem [resolvable:$true] %s585
          %588 = dma.hbm_to_vmem [thread:$0]  %s15, 16, %s586, [#allocation27]
        $region68: #{transformer_encoder_forward.2} parent=11 // pred_fallthru
          _
      $region12: #{transformer_encoder_forward.2} parent=5 // pred_fallthru
        _
      %p589 = scmp.lt.s32.totalorder %s38, 2
      // Predicated region
      $region69: #{transformer_encoder_forward.2} parent=5 // pred_check
        %p590 = pneg %p589
      $region70: #{transformer_encoder_forward.2} parent=5 // pred_check_branch
        %592 = sbr.rel (%p590) target = $region72
      $region71: #{transformer_encoder_forward.2} parent=5 // pred_region
        // Predicated region
        $region73: #{transformer_encoder_forward.2} parent=71 // pred_check
          %p593 = pneg %p58
        $region74: #{transformer_encoder_forward.2} parent=71 // pred_check_branch
          %595 = sbr.rel (%p593) target = $region76
        $region75: #{transformer_encoder_forward.2} parent=71 // pred_region
          %s596 = sand.u32 %s48, 1
          %s597 = scalar_lea.sflag [#allocation3], %s596
          %s598 = sand.u32 %s48, 1
          %s599 = smul.addr %s598, 8
          %s600 = scalar_lea.vmem [#allocation2], %s599
          %s602 = ssub.s32 128, 128
          %603 = vsyncadd %s597, %s602
          %s604 = smul.addr %s38, 128
          %s605 = scalar_lea.hbm %s0, %s604
          %s607 = sshll.u32 %s600, 4
          %s608 = int_to_ptr.vmem [resolvable:$true] %s607
          %610 = dma.hbm_to_vmem [thread:$0]  %s605, 128, %s608, %s597
        $region76: #{transformer_encoder_forward.2} parent=71 // pred_fallthru
          _
        // Predicated region
        $region77: #{transformer_encoder_forward.2} parent=71 // pred_check
          %p611 = pneg %p84
        $region78: #{transformer_encoder_forward.2} parent=71 // pred_check_branch
          %613 = sbr.rel (%p611) target = $region80
        $region79: #{transformer_encoder_forward.2} parent=71 // pred_region
          %s614 = sand.u32 %s38, 1
          %s615 = scalar_lea.sflag [#allocation6], %s614
          %s616 = sand.u32 %s74, 1
          %s617 = smul.addr %s616, 8
          %s618 = scalar_lea.vmem [#allocation5], %s617
          %s620 = ssub.s32 128, 128
          %621 = vsyncadd %s615, %s620
          %s622 = smul.addr %s38, 128
          %s623 = scalar_lea.hbm %s1, %s622
          %s625 = sshll.u32 %s618, 4
          %s626 = int_to_ptr.vmem [resolvable:$true] %s625
          %628 = dma.hbm_to_vmem [thread:$0]  %s623, 128, %s626, %s615
        $region80: #{transformer_encoder_forward.2} parent=71 // pred_fallthru
          _
      $region72: #{transformer_encoder_forward.2} parent=5 // pred_fallthru
        _
      %p629 = scmp.le.s32.totalorder 1, %s38
      %p630 = scmp.lt.s32.totalorder %s38, 3
      %p631 = pnand %p629, %p630
      %p632 = pneg %p631
      // Predicated region
      $region81: #{transformer_encoder_forward.2} parent=5 // pred_check
        _
      $region82: #{transformer_encoder_forward.2} parent=5 // pred_check_branch
        %634 = sbr.rel (%p631) target = $region84
      $region83: #{transformer_encoder_forward.2} parent=5 // pred_region
        %s635 = ssub.s32 %s38, 1
        %s636 = sand.u32 %s51, 1
        %s637 = scalar_lea.sflag [#allocation3], %s636
        %s638 = sand.u32 %s51, 1
        %s639 = smul.addr %s638, 8
        %s640 = scalar_lea.vmem [#allocation2], %s639
        // Predicated region
        $region85: #{transformer_encoder_forward.2} parent=83 // pred_check
          %p641 = pneg %p64
        $region86: #{transformer_encoder_forward.2} parent=83 // pred_check_branch
          %643 = sbr.rel (%p641) target = $region88
        $region87: #{transformer_encoder_forward.2} parent=83 // pred_region
          %644 = dma.done %s637, 128
        $region88: #{transformer_encoder_forward.2} parent=83 // pred_fallthru
          _
        %s645 = sand.u32 %s43, 1
        %s646 = scalar_lea.sflag [#allocation6], %s645
        %s647 = sand.u32 %s77, 1
        %s648 = smul.addr %s647, 8
        %s649 = scalar_lea.vmem [#allocation5], %s648
        // Predicated region
        $region89: #{transformer_encoder_forward.2} parent=83 // pred_check
          %p650 = pneg %p90
        $region90: #{transformer_encoder_forward.2} parent=83 // pred_check_branch
          %652 = sbr.rel (%p650) target = $region92
        $region91: #{transformer_encoder_forward.2} parent=83 // pred_region
          %653 = dma.done %s646, 128
        $region92: #{transformer_encoder_forward.2} parent=83 // pred_fallthru
          _
        // Predicated region
        $region93: #{transformer_encoder_forward.2} parent=83 // pred_check
          %p654 = pneg %p111
        $region94: #{transformer_encoder_forward.2} parent=83 // pred_check_branch
          %656 = sbr.rel (%p654) target = $region96
        $region95: #{transformer_encoder_forward.2} parent=83 // pred_region
          %657 = dma.done [#allocation6], 16
        $region96: #{transformer_encoder_forward.2} parent=83 // pred_fallthru
          _
        // Predicated region
        $region97: #{transformer_encoder_forward.2} parent=83 // pred_check
          %p658 = pneg %p132
        $region98: #{transformer_encoder_forward.2} parent=83 // pred_check_branch
          %660 = sbr.rel (%p658) target = $region100
        $region99: #{transformer_encoder_forward.2} parent=83 // pred_region
          %661 = dma.done [#allocation9], 16
        $region100: #{transformer_encoder_forward.2} parent=83 // pred_fallthru
          _
        // Predicated region
        $region101: #{transformer_encoder_forward.2} parent=83 // pred_check
          %p662 = pneg %p153
        $region102: #{transformer_encoder_forward.2} parent=83 // pred_check_branch
          %664 = sbr.rel (%p662) target = $region104
        $region103: #{transformer_encoder_forward.2} parent=83 // pred_region
          %665 = dma.done [#allocation9], 256
        $region104: #{transformer_encoder_forward.2} parent=83 // pred_fallthru
          _
        // Predicated region
        $region105: #{transformer_encoder_forward.2} parent=83 // pred_check
          %p666 = pneg %p174
        $region106: #{transformer_encoder_forward.2} parent=83 // pred_check_branch
          %668 = sbr.rel (%p666) target = $region108
        $region107: #{transformer_encoder_forward.2} parent=83 // pred_region
          %669 = dma.done [#allocation12], 16
        $region108: #{transformer_encoder_forward.2} parent=83 // pred_fallthru
          _
        // Predicated region
        $region109: #{transformer_encoder_forward.2} parent=83 // pred_check
          %p670 = pneg %p195
        $region110: #{transformer_encoder_forward.2} parent=83 // pred_check_branch
          %672 = sbr.rel (%p670) target = $region112
        $region111: #{transformer_encoder_forward.2} parent=83 // pred_region
          %673 = dma.done [#allocation12], 256
        $region112: #{transformer_encoder_forward.2} parent=83 // pred_fallthru
          _
        // Predicated region
        $region113: #{transformer_encoder_forward.2} parent=83 // pred_check
          %p674 = pneg %p216
        $region114: #{transformer_encoder_forward.2} parent=83 // pred_check_branch
          %676 = sbr.rel (%p674) target = $region116
        $region115: #{transformer_encoder_forward.2} parent=83 // pred_region
          %677 = dma.done [#allocation15], 16
        $region116: #{transformer_encoder_forward.2} parent=83 // pred_fallthru
          _
        // Predicated region
        $region117: #{transformer_encoder_forward.2} parent=83 // pred_check
          %p678 = pneg %p237
        $region118: #{transformer_encoder_forward.2} parent=83 // pred_check_branch
          %680 = sbr.rel (%p678) target = $region120
        $region119: #{transformer_encoder_forward.2} parent=83 // pred_region
          %681 = dma.done [#allocation15], 256
        $region120: #{transformer_encoder_forward.2} parent=83 // pred_fallthru
          _
        // Predicated region
        $region121: #{transformer_encoder_forward.2} parent=83 // pred_check
          %p682 = pneg %p258
        $region122: #{transformer_encoder_forward.2} parent=83 // pred_check_branch
          %684 = sbr.rel (%p682) target = $region124
        $region123: #{transformer_encoder_forward.2} parent=83 // pred_region
          %685 = dma.done [#allocation18], 16
        $region124: #{transformer_encoder_forward.2} parent=83 // pred_fallthru
          _
        // Predicated region
        $region125: #{transformer_encoder_forward.2} parent=83 // pred_check
          %p686 = pneg %p279
        $region126: #{transformer_encoder_forward.2} parent=83 // pred_check_branch
          %688 = sbr.rel (%p686) target = $region128
        $region127: #{transformer_encoder_forward.2} parent=83 // pred_region
          %689 = dma.done [#allocation18], 16
        $region128: #{transformer_encoder_forward.2} parent=83 // pred_fallthru
          _
        // Predicated region
        $region129: #{transformer_encoder_forward.2} parent=83 // pred_check
          %p690 = pneg %p300
        $region130: #{transformer_encoder_forward.2} parent=83 // pred_check_branch
          %692 = sbr.rel (%p690) target = $region132
        $region131: #{transformer_encoder_forward.2} parent=83 // pred_region
          %693 = dma.done [#allocation21], 16
        $region132: #{transformer_encoder_forward.2} parent=83 // pred_fallthru
          _
        // Predicated region
        $region133: #{transformer_encoder_forward.2} parent=83 // pred_check
          %p694 = pneg %p321
        $region134: #{transformer_encoder_forward.2} parent=83 // pred_check_branch
          %696 = sbr.rel (%p694) target = $region136
        $region135: #{transformer_encoder_forward.2} parent=83 // pred_region
          %697 = dma.done [#allocation21], 256
        $region136: #{transformer_encoder_forward.2} parent=83 // pred_fallthru
          _
        // Predicated region
        $region137: #{transformer_encoder_forward.2} parent=83 // pred_check
          %p698 = pneg %p342
        $region138: #{transformer_encoder_forward.2} parent=83 // pred_check_branch
          %700 = sbr.rel (%p698) target = $region140
        $region139: #{transformer_encoder_forward.2} parent=83 // pred_region
          %701 = dma.done [#allocation24], 16
        $region140: #{transformer_encoder_forward.2} parent=83 // pred_fallthru
          _
        // Predicated region
        $region141: #{transformer_encoder_forward.2} parent=83 // pred_check
          %p702 = pneg %p363
        $region142: #{transformer_encoder_forward.2} parent=83 // pred_check_branch
          %704 = sbr.rel (%p702) target = $region144
        $region143: #{transformer_encoder_forward.2} parent=83 // pred_region
          %705 = dma.done [#allocation24], 1024
        $region144: #{transformer_encoder_forward.2} parent=83 // pred_fallthru
          _
        // Predicated region
        $region145: #{transformer_encoder_forward.2} parent=83 // pred_check
          %p706 = pneg %p384
        $region146: #{transformer_encoder_forward.2} parent=83 // pred_check_branch
          %708 = sbr.rel (%p706) target = $region148
        $region147: #{transformer_encoder_forward.2} parent=83 // pred_region
          %709 = dma.done [#allocation27], 16
        $region148: #{transformer_encoder_forward.2} parent=83 // pred_fallthru
          _
        %s710 = sand.u32 %s51, 1
        %s711 = scalar_lea.sflag [#allocation3], %s710
        %s712 = sand.u32 %s51, 1
        %s713 = smul.addr %s712, 8
        %s714 = scalar_lea.vmem [#allocation2], %s713
        %p715 = pneg %p64
        %p716 = pneg %p61
        %s717 = sand.u32 %s43, 1
        %s718 = scalar_lea.sflag [#allocation6], %s717
        %s719 = sand.u32 %s77, 1
        %s720 = smul.addr %s719, 8
        %s721 = scalar_lea.vmem [#allocation5], %s720
        %p722 = pneg %p90
        %p723 = pneg %p87
        %p724 = pneg %p111
        %p725 = pneg %p108
        %p726 = pneg %p132
        %p727 = pneg %p129
        %p728 = pneg %p153
        %p729 = pneg %p150
        %p730 = pneg %p174
        %p731 = pneg %p171
        %p732 = pneg %p195
        %p733 = pneg %p192
        %p734 = pneg %p216
        %p735 = pneg %p213
        %p736 = pneg %p237
        %p737 = pneg %p234
        %p738 = pneg %p258
        %p739 = pneg %p255
        %p740 = pneg %p279
        %p741 = pneg %p276
        %p742 = pneg %p300
        %p743 = pneg %p297
        %p744 = pneg %p321
        %p745 = pneg %p318
        %p746 = pneg %p342
        %p747 = pneg %p339
        %p748 = pneg %p363
        %p749 = pneg %p360
        %p750 = pneg %p384
        %p751 = pneg %p381
        %p752 = pneg %p410
        %p753 = pneg %p407
        %s754 = sand.u32 %s397, 1
        %s755 = scalar_lea.sflag [#allocation4], %s754
        %s756 = sand.u32 %s397, 1
        %s757 = smul.addr %s756, 8
        %s758 = scalar_lea.vmem [#allocation28], %s757
        %v760 = vld [vmem:[%s640] sm:$0xff]
        %v761 = vld [vmem:[%s649] sm:$0xff]
        %v762 = vld [vmem:[#allocation7] sm:$0x1]
        %v763 = vld [vmem:[#allocation8] sm:$0x1]
        %vm764 = vcmask 261120
        %v765 = vsel %vm764, %v760, 0.0
        %766 = vadd.xlane.f32.xlu0 %v765
        %v767 = vpop.xlane.xlu0 %766
        %v768 = vrcp.pop 32.0
        %v769 = vmul.f32 %v767, %v768
        %v770 = vsub.f32 %v760, %v769
        %v771 = vmul.f32 %v770, %v770
        %v772 = vsel %vm764, %v771, 0.0
        %773 = vadd.xlane.f32.xlu0 %v772
        %v774 = vpop.xlane.xlu0 %773
        %v775 = vmul.f32 %v774, %v768
        %v776 = vadd.f32 %v775, 1e-05
        %v777 = vrsqrt.pop %v776
        %v778 = vmul.f32 %v770, %v777
        %v780 = vlaneseq
        %v781 = vshrl.u32 %v780, 7
        %v782 = vsub.s32 0, %v781
        %v783 = vrot.slane %v762, %v782
        %v785 = vmul.f32 %v778, %v783
        %v787 = vlaneseq
        %v788 = vshrl.u32 %v787, 7
        %v789 = vsub.s32 0, %v788
        %v790 = vrot.slane %v763, %v789
        %v792 = vadd.f32 %v785, %v790
        %v793 = vadd.f32 %v792, %v761
        %v794 = vld [vmem:[#allocation10] sm:$0xf]
        %v795 = vld [vmem:[#allocation10 + $0x4] sm:$0xf]
        %v796 = vld [vmem:[#allocation10 + $0x8] sm:$0xf]
        %v797 = vld [vmem:[#allocation10 + $0xc] sm:$0xf]
        %v798 = vld [vmem:[#allocation11] sm:$0x1]
        %v799 = vld [vmem:[#allocation13] sm:$0xf]
        %v800 = vld [vmem:[#allocation13 + $0x4] sm:$0xf]
        %v801 = vld [vmem:[#allocation13 + $0x8] sm:$0xf]
        %v802 = vld [vmem:[#allocation13 + $0xc] sm:$0xf]
        %v803 = vld [vmem:[#allocation14] sm:$0x1]
        %v804 = vld [vmem:[#allocation16] sm:$0xf]
        %v805 = vld [vmem:[#allocation16 + $0x4] sm:$0xf]
        %v806 = vld [vmem:[#allocation16 + $0x8] sm:$0xf]
        %v807 = vld [vmem:[#allocation16 + $0xc] sm:$0xf]
        %v808 = vld [vmem:[#allocation17] sm:$0x1]
        %v809 = vpack.c.bf16 %v793, %v793
        %v811 = vlaneseq
        %v812 = vshrl.u32 %v811, 7
        %v813 = vsub.s32 0, %v812
        %v814 = vrot.slane %v798, %v813
        %v820 = vunpack.c.l.b16 %v794
        %v821 = vunpack.c.l.b16 %v795
        %v822 = vunpack.c.l.b16 %v796
        %v823 = vunpack.c.l.b16 %v797
        %v824 = vpack.c.b16 %v821, %v820
        %v825 = vpack.c.b16 %v823, %v822
        %v829 = vsel %vm764, %v809, 0
        %831 = vmatprep.subr.bf16.mxu0 0
        %832 = vmatpush1.bf16.msra.mxu0 %v824
        %833 = vmatprep.subr.bf16.mxu0 0
        %834 = vmatpush1.bf16.msra.mxu0 %v825
        %835 = vmatprep.subr.bf16.mxu0 0
        %836 = vmatpush1.bf16.msra.mxu0 0
        %837 = vmatprep.subr.bf16.mxu0 0
        %838 = vmatpush1.bf16.msra.mxu0 0
        %839 = vmatprep.subr.bf16.mxu0 0
        %840 = vmatpush1.bf16.msra.mxu0 0
        %841 = vmatprep.subr.bf16.mxu0 0
        %842 = vmatpush1.bf16.msra.mxu0 0
        %843 = vmatprep.subr.bf16.mxu0 0
        %844 = vmatpush1.bf16.msra.mxu0 0
        %845 = vmatprep.subr.bf16.mxu0 0
        %846 = vmatpush1.bf16.msra.mxu0 0
        %847 = vmatprep.subr.bf16.mxu0 0
        %848 = vmatpush1.bf16.msra.mxu0 0
        %849 = vmatprep.subr.bf16.mxu0 0
        %850 = vmatpush1.bf16.msra.mxu0 0
        %851 = vmatprep.subr.bf16.mxu0 0
        %852 = vmatpush1.bf16.msra.mxu0 0
        %853 = vmatprep.subr.bf16.mxu0 0
        %854 = vmatpush1.bf16.msra.mxu0 0
        %855 = vmatprep.subr.bf16.mxu0 0
        %856 = vmatpush1.bf16.msra.mxu0 0
        %857 = vmatprep.subr.bf16.mxu0 0
        %858 = vmatpush1.bf16.msra.mxu0 0
        %859 = vmatprep.subr.bf16.mxu0 0
        %860 = vmatpush1.bf16.msra.mxu0 0
        %861 = vmatprep.subr.bf16.mxu0 0
        %862 = vmatpush1.bf16.msra.mxu0 0
        %863 = vmatprep.mubr.bf16.mxu0 0
        %864 = vmatmul.mubr.bf16.gmra.mrb[0].mxu0 %v829
        %v865 = vpop.f32.mrb[0].mxu0
        %v866 = vadd.f32 %v814, %v865
        %v867 = vpop.f32.mrb[0].mxu0
        %v868 = vpop.f32.mrb[0].mxu0
        %v869 = vpop.f32.mrb[0].mxu0
        %870 = vdwg.mxu0
        %v871 = vpack.c.bf16 %v792, %v792
        %v873 = vlaneseq
        %v874 = vshrl.u32 %v873, 7
        %v875 = vsub.s32 0, %v874
        %v876 = vrot.slane %v803, %v875
        %v882 = vunpack.c.l.b16 %v799
        %v883 = vunpack.c.l.b16 %v800
        %v884 = vunpack.c.l.b16 %v801
        %v885 = vunpack.c.l.b16 %v802
        %v886 = vpack.c.b16 %v883, %v882
        %v887 = vpack.c.b16 %v885, %v884
        %v891 = vsel %vm764, %v871, 0
        %893 = vmatprep.subr.bf16.mxu0 0
        %894 = vmatpush1.bf16.msra.mxu0 %v886
        %895 = vmatprep.subr.bf16.mxu0 0
        %896 = vmatpush1.bf16.msra.mxu0 %v887
        %897 = vmatprep.subr.bf16.mxu0 0
        %898 = vmatpush1.bf16.msra.mxu0 0
        %899 = vmatprep.subr.bf16.mxu0 0
        %900 = vmatpush1.bf16.msra.mxu0 0
        %901 = vmatprep.subr.bf16.mxu0 0
        %902 = vmatpush1.bf16.msra.mxu0 0
        %903 = vmatprep.subr.bf16.mxu0 0
        %904 = vmatpush1.bf16.msra.mxu0 0
        %905 = vmatprep.subr.bf16.mxu0 0
        %906 = vmatpush1.bf16.msra.mxu0 0
        %907 = vmatprep.subr.bf16.mxu0 0
        %908 = vmatpush1.bf16.msra.mxu0 0
        %909 = vmatprep.subr.bf16.mxu0 0
        %910 = vmatpush1.bf16.msra.mxu0 0
        %911 = vmatprep.subr.bf16.mxu0 0
        %912 = vmatpush1.bf16.msra.mxu0 0
        %913 = vmatprep.subr.bf16.mxu0 0
        %914 = vmatpush1.bf16.msra.mxu0 0
        %915 = vmatprep.subr.bf16.mxu0 0
        %916 = vmatpush1.bf16.msra.mxu0 0
        %917 = vmatprep.subr.bf16.mxu0 0
        %918 = vmatpush1.bf16.msra.mxu0 0
        %919 = vmatprep.subr.bf16.mxu0 0
        %920 = vmatpush1.bf16.msra.mxu0 0
        %921 = vmatprep.subr.bf16.mxu0 0
        %922 = vmatpush1.bf16.msra.mxu0 0
        %923 = vmatprep.subr.bf16.mxu0 0
        %924 = vmatpush1.bf16.msra.mxu0 0
        %925 = vmatprep.mubr.bf16.mxu0 0
        %926 = vmatmul.mubr.bf16.gmra.mrb[0].mxu0 %v891
        %v927 = vpop.f32.mrb[0].mxu0
        %v928 = vadd.f32 %v876, %v927
        %v929 = vpop.f32.mrb[0].mxu0
        %v930 = vpop.f32.mrb[0].mxu0
        %v931 = vpop.f32.mrb[0].mxu0
        %932 = vdwg.mxu0
        %v933 = vpack.c.bf16 %v866, %v866
        %v934 = vpack.c.bf16 %v928, %v928
        %936 = vrot.lane.b32.xlu0 %v933, 96
        %v937 = vpop.permute.xlu0 %936
        %vm938 = vcmask 64512
        %v940 = vsel %vm938, %v933, 0
        %v943 = vsel %vm938, %v937, 0
        %945 = vmatprep.subr.bf16.mxu0 0
        %946 = vmatpush1.bf16.xpose.msra.mxu0 %v943
        %947 = vmatprep.subr.bf16.mxu0 0
        %948 = vmatpush1.bf16.xpose.msra.mxu0 0
        %949 = vmatprep.subr.bf16.mxu0 0
        %950 = vmatpush1.bf16.xpose.msra.mxu0 0
        %951 = vmatprep.subr.bf16.mxu0 0
        %952 = vmatpush1.bf16.xpose.msra.mxu0 0
        %953 = vmatprep.subr.bf16.mxu0 0
        %954 = vmatpush1.bf16.xpose.msra.mxu0 0
        %955 = vmatprep.subr.bf16.mxu0 0
        %956 = vmatpush1.bf16.xpose.msra.mxu0 0
        %957 = vmatprep.subr.bf16.mxu0 0
        %958 = vmatpush1.bf16.xpose.msra.mxu0 0
        %959 = vmatprep.subr.bf16.mxu0 0
        %960 = vmatpush1.bf16.xpose.msra.mxu0 0
        %961 = vmatprep.subr.bf16.mxu0 0
        %962 = vmatpush1.bf16.xpose.msra.mxu0 0
        %963 = vmatprep.subr.bf16.mxu0 0
        %964 = vmatpush1.bf16.xpose.msra.mxu0 0
        %965 = vmatprep.subr.bf16.mxu0 0
        %966 = vmatpush1.bf16.xpose.msra.mxu0 0
        %967 = vmatprep.subr.bf16.mxu0 0
        %968 = vmatpush1.bf16.xpose.msra.mxu0 0
        %969 = vmatprep.subr.bf16.mxu0 0
        %970 = vmatpush1.bf16.xpose.msra.mxu0 0
        %971 = vmatprep.subr.bf16.mxu0 0
        %972 = vmatpush1.bf16.xpose.msra.mxu0 0
        %973 = vmatprep.subr.bf16.mxu0 0
        %974 = vmatpush1.bf16.xpose.msra.mxu0 0
        %975 = vmatprep.subr.bf16.mxu0 0
        %976 = vmatpush1.bf16.xpose.msra.mxu0 0
        %977 = vmatprep.mubr.bf16.mxu0 0
        %978 = vmatmul.mubr.bf16.gmra.mrb[0].mxu0 %v940
        %v979 = vpop.f32.mrb[0].mxu0
        %v980 = vadd.f32 0.0, %v979
        %v981 = vpop.f32.mrb[0].mxu0
        %v982 = vpop.f32.mrb[0].mxu0
        %v983 = vpop.f32.mrb[0].mxu0
        %984 = vdwg.mxu0
        %v985 = vsel %vm938, %v980, -inf
        %986 = vmax.xlane.f32.xlu0 %v985
        %v987 = vpop.xlane.xlu0 %986
        %v988 = vsub.f32 %v980, %v987
        %v989 = vmul.f32 %v988, 1.442695
        %v990 = vpow.pop %v989
        %v991 = vsel %vm938, %v990, 0.0
        %992 = vadd.xlane.f32.xlu0 %v991
        %v993 = vpop.xlane.xlu0 %992
        %v994 = vrcp.pop %v993
        %v995 = vmul.f32 %v990, %v994
        %v996 = vpack.c.bf16 %v995, %v995
        %v998 = vsel %vm938, %v996, 0
        %vm1000 = vcmask 1043456
        %v1002 = vsel %vm1000, %v934, 0
        %1004 = vmatprep.subr.bf16.mxu0 0
        %1005 = vmatpush1.bf16.msra.mxu0 %v1002
        %1006 = vmatprep.subr.bf16.mxu0 0
        %1007 = vmatpush1.bf16.msra.mxu0 0
        %1008 = vmatprep.subr.bf16.mxu0 0
        %1009 = vmatpush1.bf16.msra.mxu0 0
        %1010 = vmatprep.subr.bf16.mxu0 0
        %1011 = vmatpush1.bf16.msra.mxu0 0
        %1012 = vmatprep.subr.bf16.mxu0 0
        %1013 = vmatpush1.bf16.msra.mxu0 0
        %1014 = vmatprep.subr.bf16.mxu0 0
        %1015 = vmatpush1.bf16.msra.mxu0 0
        %1016 = vmatprep.subr.bf16.mxu0 0
        %1017 = vmatpush1.bf16.msra.mxu0 0
        %1018 = vmatprep.subr.bf16.mxu0 0
        %1019 = vmatpush1.bf16.msra.mxu0 0
        %1020 = vmatprep.subr.bf16.mxu0 0
        %1021 = vmatpush1.bf16.msra.mxu0 0
        %1022 = vmatprep.subr.bf16.mxu0 0
        %1023 = vmatpush1.bf16.msra.mxu0 0
        %1024 = vmatprep.subr.bf16.mxu0 0
        %1025 = vmatpush1.bf16.msra.mxu0 0
        %1026 = vmatprep.subr.bf16.mxu0 0
        %1027 = vmatpush1.bf16.msra.mxu0 0
        %1028 = vmatprep.subr.bf16.mxu0 0
        %1029 = vmatpush1.bf16.msra.mxu0 0
        %1030 = vmatprep.subr.bf16.mxu0 0
        %1031 = vmatpush1.bf16.msra.mxu0 0
        %1032 = vmatprep.subr.bf16.mxu0 0
        %1033 = vmatpush1.bf16.msra.mxu0 0
        %1034 = vmatprep.subr.bf16.mxu0 0
        %1035 = vmatpush1.bf16.msra.mxu0 0
        %1036 = vmatprep.mubr.bf16.mxu0 0
        %1037 = vmatmul.mubr.bf16.gmra.mrb[0].mxu0 %v998
        %v1038 = vpop.f32.mrb[0].mxu0
        %v1039 = vadd.f32 0.0, %v1038
        %v1040 = vpop.f32.mrb[0].mxu0
        %v1041 = vpop.f32.mrb[0].mxu0
        %v1042 = vpop.f32.mrb[0].mxu0
        %1043 = vdwg.mxu0
        %1044 = vrot.lane.b32.xlu0 %v933, 120
        %v1045 = vpop.permute.xlu0 %1044
        %1046 = vrot.lane.b32.xlu0 %v933, 88
        %v1047 = vpop.permute.xlu0 %1046
        %v1049 = vsel %vm938, %v1045, 0
        %v1052 = vsel %vm938, %v1047, 0
        %1054 = vmatprep.subr.bf16.mxu0 0
        %1055 = vmatpush1.bf16.xpose.msra.mxu0 %v1052
        %1056 = vmatprep.subr.bf16.mxu0 0
        %1057 = vmatpush1.bf16.xpose.msra.mxu0 0
        %1058 = vmatprep.subr.bf16.mxu0 0
        %1059 = vmatpush1.bf16.xpose.msra.mxu0 0
        %1060 = vmatprep.subr.bf16.mxu0 0
        %1061 = vmatpush1.bf16.xpose.msra.mxu0 0
        %1062 = vmatprep.subr.bf16.mxu0 0
        %1063 = vmatpush1.bf16.xpose.msra.mxu0 0
        %1064 = vmatprep.subr.bf16.mxu0 0
        %1065 = vmatpush1.bf16.xpose.msra.mxu0 0
        %1066 = vmatprep.subr.bf16.mxu0 0
        %1067 = vmatpush1.bf16.xpose.msra.mxu0 0
        %1068 = vmatprep.subr.bf16.mxu0 0
        %1069 = vmatpush1.bf16.xpose.msra.mxu0 0
        %1070 = vmatprep.subr.bf16.mxu0 0
        %1071 = vmatpush1.bf16.xpose.msra.mxu0 0
        %1072 = vmatprep.subr.bf16.mxu0 0
        %1073 = vmatpush1.bf16.xpose.msra.mxu0 0
        %1074 = vmatprep.subr.bf16.mxu0 0
        %1075 = vmatpush1.bf16.xpose.msra.mxu0 0
        %1076 = vmatprep.subr.bf16.mxu0 0
        %1077 = vmatpush1.bf16.xpose.msra.mxu0 0
        %1078 = vmatprep.subr.bf16.mxu0 0
        %1079 = vmatpush1.bf16.xpose.msra.mxu0 0
        %1080 = vmatprep.subr.bf16.mxu0 0
        %1081 = vmatpush1.bf16.xpose.msra.mxu0 0
        %1082 = vmatprep.subr.bf16.mxu0 0
        %1083 = vmatpush1.bf16.xpose.msra.mxu0 0
        %1084 = vmatprep.subr.bf16.mxu0 0
        %1085 = vmatpush1.bf16.xpose.msra.mxu0 0
        %1086 = vmatprep.mubr.bf16.mxu0 0
        %1087 = vmatmul.mubr.bf16.gmra.mrb[0].mxu0 %v1049
        %v1088 = vpop.f32.mrb[0].mxu0
        %v1089 = vadd.f32 0.0, %v1088
        %v1090 = vpop.f32.mrb[0].mxu0
        %v1091 = vpop.f32.mrb[0].mxu0
        %v1092 = vpop.f32.mrb[0].mxu0
        %1093 = vdwg.mxu0
        %v1094 = vsel %vm938, %v1089, -inf
        %1095 = vmax.xlane.f32.xlu0 %v1094
        %v1096 = vpop.xlane.xlu0 %1095
        %v1097 = vsub.f32 %v1089, %v1096
        %v1098 = vmul.f32 %v1097, 1.442695
        %v1099 = vpow.pop %v1098
        %v1100 = vsel %vm938, %v1099, 0.0
        %1101 = vadd.xlane.f32.xlu0 %v1100
        %v1102 = vpop.xlane.xlu0 %1101
        %v1103 = vrcp.pop %v1102
        %v1104 = vmul.f32 %v1099, %v1103
        %v1105 = vpack.c.bf16 %v1104, %v1104
        %1107 = vrot.lane.b32.xlu0 %v934, 120
        %v1108 = vpop.permute.xlu0 %1107
        %v1110 = vsel %vm938, %v1105, 0
        %v1113 = vsel %vm1000, %v1108, 0
        %1115 = vmatprep.subr.bf16.mxu0 0
        %1116 = vmatpush1.bf16.msra.mxu0 %v1113
        %1117 = vmatprep.subr.bf16.mxu0 0
        %1118 = vmatpush1.bf16.msra.mxu0 0
        %1119 = vmatprep.subr.bf16.mxu0 0
        %1120 = vmatpush1.bf16.msra.mxu0 0
        %1121 = vmatprep.subr.bf16.mxu0 0
        %1122 = vmatpush1.bf16.msra.mxu0 0
        %1123 = vmatprep.subr.bf16.mxu0 0
        %1124 = vmatpush1.bf16.msra.mxu0 0
        %1125 = vmatprep.subr.bf16.mxu0 0
        %1126 = vmatpush1.bf16.msra.mxu0 0
        %1127 = vmatprep.subr.bf16.mxu0 0
        %1128 = vmatpush1.bf16.msra.mxu0 0
        %1129 = vmatprep.subr.bf16.mxu0 0
        %1130 = vmatpush1.bf16.msra.mxu0 0
        %1131 = vmatprep.subr.bf16.mxu0 0
        %1132 = vmatpush1.bf16.msra.mxu0 0
        %1133 = vmatprep.subr.bf16.mxu0 0
        %1134 = vmatpush1.bf16.msra.mxu0 0
        %1135 = vmatprep.subr.bf16.mxu0 0
        %1136 = vmatpush1.bf16.msra.mxu0 0
        %1137 = vmatprep.subr.bf16.mxu0 0
        %1138 = vmatpush1.bf16.msra.mxu0 0
        %1139 = vmatprep.subr.bf16.mxu0 0
        %1140 = vmatpush1.bf16.msra.mxu0 0
        %1141 = vmatprep.subr.bf16.mxu0 0
        %1142 = vmatpush1.bf16.msra.mxu0 0
        %1143 = vmatprep.subr.bf16.mxu0 0
        %1144 = vmatpush1.bf16.msra.mxu0 0
        %1145 = vmatprep.subr.bf16.mxu0 0
        %1146 = vmatpush1.bf16.msra.mxu0 0
        %1147 = vmatprep.mubr.bf16.mxu0 0
        %1148 = vmatmul.mubr.bf16.gmra.mrb[0].mxu0 %v1110
        %v1149 = vpop.f32.mrb[0].mxu0
        %v1150 = vadd.f32 0.0, %v1149
        %v1151 = vpop.f32.mrb[0].mxu0
        %v1152 = vpop.f32.mrb[0].mxu0
        %v1153 = vpop.f32.mrb[0].mxu0
        %1154 = vdwg.mxu0
        %1155 = vrot.lane.b32.xlu0 %v933, 112
        %v1156 = vpop.permute.xlu0 %1155
        %1157 = vrot.lane.b32.xlu0 %v933, 80
        %v1158 = vpop.permute.xlu0 %1157
        %v1160 = vsel %vm938, %v1156, 0
        %v1163 = vsel %vm938, %v1158, 0
        %1165 = vmatprep.subr.bf16.mxu0 0
        %1166 = vmatpush1.bf16.xpose.msra.mxu0 %v1163
        %1167 = vmatprep.subr.bf16.mxu0 0
        %1168 = vmatpush1.bf16.xpose.msra.mxu0 0
        %1169 = vmatprep.subr.bf16.mxu0 0
        %1170 = vmatpush1.bf16.xpose.msra.mxu0 0
        %1171 = vmatprep.subr.bf16.mxu0 0
        %1172 = vmatpush1.bf16.xpose.msra.mxu0 0
        %1173 = vmatprep.subr.bf16.mxu0 0
        %1174 = vmatpush1.bf16.xpose.msra.mxu0 0
        %1175 = vmatprep.subr.bf16.mxu0 0
        %1176 = vmatpush1.bf16.xpose.msra.mxu0 0
        %1177 = vmatprep.subr.bf16.mxu0 0
        %1178 = vmatpush1.bf16.xpose.msra.mxu0 0
        %1179 = vmatprep.subr.bf16.mxu0 0
        %1180 = vmatpush1.bf16.xpose.msra.mxu0 0
        %1181 = vmatprep.subr.bf16.mxu0 0
        %1182 = vmatpush1.bf16.xpose.msra.mxu0 0
        %1183 = vmatprep.subr.bf16.mxu0 0
        %1184 = vmatpush1.bf16.xpose.msra.mxu0 0
        %1185 = vmatprep.subr.bf16.mxu0 0
        %1186 = vmatpush1.bf16.xpose.msra.mxu0 0
        %1187 = vmatprep.subr.bf16.mxu0 0
        %1188 = vmatpush1.bf16.xpose.msra.mxu0 0
        %1189 = vmatprep.subr.bf16.mxu0 0
        %1190 = vmatpush1.bf16.xpose.msra.mxu0 0
        %1191 = vmatprep.subr.bf16.mxu0 0
        %1192 = vmatpush1.bf16.xpose.msra.mxu0 0
        %1193 = vmatprep.subr.bf16.mxu0 0
        %1194 = vmatpush1.bf16.xpose.msra.mxu0 0
        %1195 = vmatprep.subr.bf16.mxu0 0
        %1196 = vmatpush1.bf16.xpose.msra.mxu0 0
        %1197 = vmatprep.mubr.bf16.mxu0 0
        %1198 = vmatmul.mubr.bf16.gmra.mrb[0].mxu0 %v1160
        %v1199 = vpop.f32.mrb[0].mxu0
        %v1200 = vadd.f32 0.0, %v1199
        %v1201 = vpop.f32.mrb[0].mxu0
        %v1202 = vpop.f32.mrb[0].mxu0
        %v1203 = vpop.f32.mrb[0].mxu0
        %1204 = vdwg.mxu0
        %v1205 = vsel %vm938, %v1200, -inf
        %1206 = vmax.xlane.f32.xlu0 %v1205
        %v1207 = vpop.xlane.xlu0 %1206
        %v1208 = vsub.f32 %v1200, %v1207
        %v1209 = vmul.f32 %v1208, 1.442695
        %v1210 = vpow.pop %v1209
        %v1211 = vsel %vm938, %v1210, 0.0
        %1212 = vadd.xlane.f32.xlu0 %v1211
        %v1213 = vpop.xlane.xlu0 %1212
        %v1214 = vrcp.pop %v1213
        %v1215 = vmul.f32 %v1210, %v1214
        %v1216 = vpack.c.bf16 %v1215, %v1215
        %1217 = vrot.lane.b32.xlu0 %v934, 112
        %v1218 = vpop.permute.xlu0 %1217
        %v1220 = vsel %vm938, %v1216, 0
        %v1223 = vsel %vm1000, %v1218, 0
        %1225 = vmatprep.subr.bf16.mxu0 0
        %1226 = vmatpush1.bf16.msra.mxu0 %v1223
        %1227 = vmatprep.subr.bf16.mxu0 0
        %1228 = vmatpush1.bf16.msra.mxu0 0
        %1229 = vmatprep.subr.bf16.mxu0 0
        %1230 = vmatpush1.bf16.msra.mxu0 0
        %1231 = vmatprep.subr.bf16.mxu0 0
        %1232 = vmatpush1.bf16.msra.mxu0 0
        %1233 = vmatprep.subr.bf16.mxu0 0
        %1234 = vmatpush1.bf16.msra.mxu0 0
        %1235 = vmatprep.subr.bf16.mxu0 0
        %1236 = vmatpush1.bf16.msra.mxu0 0
        %1237 = vmatprep.subr.bf16.mxu0 0
        %1238 = vmatpush1.bf16.msra.mxu0 0
        %1239 = vmatprep.subr.bf16.mxu0 0
        %1240 = vmatpush1.bf16.msra.mxu0 0
        %1241 = vmatprep.subr.bf16.mxu0 0
        %1242 = vmatpush1.bf16.msra.mxu0 0
        %1243 = vmatprep.subr.bf16.mxu0 0
        %1244 = vmatpush1.bf16.msra.mxu0 0
        %1245 = vmatprep.subr.bf16.mxu0 0
        %1246 = vmatpush1.bf16.msra.mxu0 0
        %1247 = vmatprep.subr.bf16.mxu0 0
        %1248 = vmatpush1.bf16.msra.mxu0 0
        %1249 = vmatprep.subr.bf16.mxu0 0
        %1250 = vmatpush1.bf16.msra.mxu0 0
        %1251 = vmatprep.subr.bf16.mxu0 0
        %1252 = vmatpush1.bf16.msra.mxu0 0
        %1253 = vmatprep.subr.bf16.mxu0 0
        %1254 = vmatpush1.bf16.msra.mxu0 0
        %1255 = vmatprep.subr.bf16.mxu0 0
        %1256 = vmatpush1.bf16.msra.mxu0 0
        %1257 = vmatprep.mubr.bf16.mxu0 0
        %1258 = vmatmul.mubr.bf16.gmra.mrb[0].mxu0 %v1220
        %v1259 = vpop.f32.mrb[0].mxu0
        %v1260 = vadd.f32 0.0, %v1259
        %v1261 = vpop.f32.mrb[0].mxu0
        %v1262 = vpop.f32.mrb[0].mxu0
        %v1263 = vpop.f32.mrb[0].mxu0
        %1264 = vdwg.mxu0
        %1265 = vrot.lane.b32.xlu0 %v933, 104
        %v1266 = vpop.permute.xlu0 %1265
        %1267 = vrot.lane.b32.xlu0 %v933, 72
        %v1268 = vpop.permute.xlu0 %1267
        %v1270 = vsel %vm938, %v1266, 0
        %v1273 = vsel %vm938, %v1268, 0
        %1275 = vmatprep.subr.bf16.mxu0 0
        %1276 = vmatpush1.bf16.xpose.msra.mxu0 %v1273
        %1277 = vmatprep.subr.bf16.mxu0 0
        %1278 = vmatpush1.bf16.xpose.msra.mxu0 0
        %1279 = vmatprep.subr.bf16.mxu0 0
        %1280 = vmatpush1.bf16.xpose.msra.mxu0 0
        %1281 = vmatprep.subr.bf16.mxu0 0
        %1282 = vmatpush1.bf16.xpose.msra.mxu0 0
        %1283 = vmatprep.subr.bf16.mxu0 0
        %1284 = vmatpush1.bf16.xpose.msra.mxu0 0
        %1285 = vmatprep.subr.bf16.mxu0 0
        %1286 = vmatpush1.bf16.xpose.msra.mxu0 0
        %1287 = vmatprep.subr.bf16.mxu0 0
        %1288 = vmatpush1.bf16.xpose.msra.mxu0 0
        %1289 = vmatprep.subr.bf16.mxu0 0
        %1290 = vmatpush1.bf16.xpose.msra.mxu0 0
        %1291 = vmatprep.subr.bf16.mxu0 0
        %1292 = vmatpush1.bf16.xpose.msra.mxu0 0
        %1293 = vmatprep.subr.bf16.mxu0 0
        %1294 = vmatpush1.bf16.xpose.msra.mxu0 0
        %1295 = vmatprep.subr.bf16.mxu0 0
        %1296 = vmatpush1.bf16.xpose.msra.mxu0 0
        %1297 = vmatprep.subr.bf16.mxu0 0
        %1298 = vmatpush1.bf16.xpose.msra.mxu0 0
        %1299 = vmatprep.subr.bf16.mxu0 0
        %1300 = vmatpush1.bf16.xpose.msra.mxu0 0
        %1301 = vmatprep.subr.bf16.mxu0 0
        %1302 = vmatpush1.bf16.xpose.msra.mxu0 0
        %1303 = vmatprep.subr.bf16.mxu0 0
        %1304 = vmatpush1.bf16.xpose.msra.mxu0 0
        %1305 = vmatprep.subr.bf16.mxu0 0
        %1306 = vmatpush1.bf16.xpose.msra.mxu0 0
        %1307 = vmatprep.mubr.bf16.mxu0 0
        %1308 = vmatmul.mubr.bf16.gmra.mrb[0].mxu0 %v1270
        %v1309 = vpop.f32.mrb[0].mxu0
        %v1310 = vadd.f32 0.0, %v1309
        %v1311 = vpop.f32.mrb[0].mxu0
        %v1312 = vpop.f32.mrb[0].mxu0
        %v1313 = vpop.f32.mrb[0].mxu0
        %1314 = vdwg.mxu0
        %v1315 = vsel %vm938, %v1310, -inf
        %1316 = vmax.xlane.f32.xlu0 %v1315
        %v1317 = vpop.xlane.xlu0 %1316
        %v1318 = vsub.f32 %v1310, %v1317
        %v1319 = vmul.f32 %v1318, 1.442695
        %v1320 = vpow.pop %v1319
        %v1321 = vsel %vm938, %v1320, 0.0
        %1322 = vadd.xlane.f32.xlu0 %v1321
        %v1323 = vpop.xlane.xlu0 %1322
        %v1324 = vrcp.pop %v1323
        %v1325 = vmul.f32 %v1320, %v1324
        %v1326 = vpack.c.bf16 %v1325, %v1325
        %1327 = vrot.lane.b32.xlu0 %v934, 104
        %v1328 = vpop.permute.xlu0 %1327
        %v1330 = vsel %vm938, %v1326, 0
        %v1333 = vsel %vm1000, %v1328, 0
        %1335 = vmatprep.subr.bf16.mxu0 0
        %1336 = vmatpush1.bf16.msra.mxu0 %v1333
        %1337 = vmatprep.subr.bf16.mxu0 0
        %1338 = vmatpush1.bf16.msra.mxu0 0
        %1339 = vmatprep.subr.bf16.mxu0 0
        %1340 = vmatpush1.bf16.msra.mxu0 0
        %1341 = vmatprep.subr.bf16.mxu0 0
        %1342 = vmatpush1.bf16.msra.mxu0 0
        %1343 = vmatprep.subr.bf16.mxu0 0
        %1344 = vmatpush1.bf16.msra.mxu0 0
        %1345 = vmatprep.subr.bf16.mxu0 0
        %1346 = vmatpush1.bf16.msra.mxu0 0
        %1347 = vmatprep.subr.bf16.mxu0 0
        %1348 = vmatpush1.bf16.msra.mxu0 0
        %1349 = vmatprep.subr.bf16.mxu0 0
        %1350 = vmatpush1.bf16.msra.mxu0 0
        %1351 = vmatprep.subr.bf16.mxu0 0
        %1352 = vmatpush1.bf16.msra.mxu0 0
        %1353 = vmatprep.subr.bf16.mxu0 0
        %1354 = vmatpush1.bf16.msra.mxu0 0
        %1355 = vmatprep.subr.bf16.mxu0 0
        %1356 = vmatpush1.bf16.msra.mxu0 0
        %1357 = vmatprep.subr.bf16.mxu0 0
        %1358 = vmatpush1.bf16.msra.mxu0 0
        %1359 = vmatprep.subr.bf16.mxu0 0
        %1360 = vmatpush1.bf16.msra.mxu0 0
        %1361 = vmatprep.subr.bf16.mxu0 0
        %1362 = vmatpush1.bf16.msra.mxu0 0
        %1363 = vmatprep.subr.bf16.mxu0 0
        %1364 = vmatpush1.bf16.msra.mxu0 0
        %1365 = vmatprep.subr.bf16.mxu0 0
        %1366 = vmatpush1.bf16.msra.mxu0 0
        %1367 = vmatprep.mubr.bf16.mxu0 0
        %1368 = vmatmul.mubr.bf16.gmra.mrb[0].mxu0 %v1330
        %v1369 = vpop.f32.mrb[0].mxu0
        %v1370 = vadd.f32 0.0, %v1369
        %v1371 = vpop.f32.mrb[0].mxu0
        %v1372 = vpop.f32.mrb[0].mxu0
        %v1373 = vpop.f32.mrb[0].mxu0
        %1374 = vdwg.mxu0
        %1376 = vrot.lane.b32.xlu0 %v1150, 8
        %v1377 = vpop.permute.xlu0 %1376
        %1380 = vrot.lane.b32.xlu0 %v1260, 16
        %v1381 = vpop.permute.xlu0 %1380
        %1384 = vrot.lane.b32.xlu0 %v1370, 24
        %v1385 = vpop.permute.xlu0 %1384
        %v1387 = vsel %vm938, %v1039, %v1377
        %vm1388 = vcmask 130048
        %v1389 = vsel %vm1388, %v1387, %v1381
        %vm1390 = vcmask 195584
        %v1391 = vsel %vm1390, %v1389, %v1385
        %v1392 = vpack.c.bf16 %v1391, %v1391
        %v1394 = vlaneseq
        %v1395 = vshrl.u32 %v1394, 7
        %v1396 = vsub.s32 0, %v1395
        %v1397 = vrot.slane %v808, %v1396
        %v1403 = vunpack.c.l.b16 %v804
        %v1404 = vunpack.c.l.b16 %v805
        %v1405 = vunpack.c.l.b16 %v806
        %v1406 = vunpack.c.l.b16 %v807
        %v1407 = vpack.c.b16 %v1404, %v1403
        %v1408 = vpack.c.b16 %v1406, %v1405
        %v1412 = vsel %vm764, %v1392, 0
        %1414 = vmatprep.subr.bf16.mxu0 0
        %1415 = vmatpush1.bf16.msra.mxu0 %v1407
        %1416 = vmatprep.subr.bf16.mxu0 0
        %1417 = vmatpush1.bf16.msra.mxu0 %v1408
        %1418 = vmatprep.subr.bf16.mxu0 0
        %1419 = vmatpush1.bf16.msra.mxu0 0
        %1420 = vmatprep.subr.bf16.mxu0 0
        %1421 = vmatpush1.bf16.msra.mxu0 0
        %1422 = vmatprep.subr.bf16.mxu0 0
        %1423 = vmatpush1.bf16.msra.mxu0 0
        %1424 = vmatprep.subr.bf16.mxu0 0
        %1425 = vmatpush1.bf16.msra.mxu0 0
        %1426 = vmatprep.subr.bf16.mxu0 0
        %1427 = vmatpush1.bf16.msra.mxu0 0
        %1428 = vmatprep.subr.bf16.mxu0 0
        %1429 = vmatpush1.bf16.msra.mxu0 0
        %1430 = vmatprep.subr.bf16.mxu0 0
        %1431 = vmatpush1.bf16.msra.mxu0 0
        %1432 = vmatprep.subr.bf16.mxu0 0
        %1433 = vmatpush1.bf16.msra.mxu0 0
        %1434 = vmatprep.subr.bf16.mxu0 0
        %1435 = vmatpush1.bf16.msra.mxu0 0
        %1436 = vmatprep.subr.bf16.mxu0 0
        %1437 = vmatpush1.bf16.msra.mxu0 0
        %1438 = vmatprep.subr.bf16.mxu0 0
        %1439 = vmatpush1.bf16.msra.mxu0 0
        %1440 = vmatprep.subr.bf16.mxu0 0
        %1441 = vmatpush1.bf16.msra.mxu0 0
        %1442 = vmatprep.subr.bf16.mxu0 0
        %1443 = vmatpush1.bf16.msra.mxu0 0
        %1444 = vmatprep.subr.bf16.mxu0 0
        %1445 = vmatpush1.bf16.msra.mxu0 0
        %1446 = vmatprep.mubr.bf16.mxu0 0
        %1447 = vmatmul.mubr.bf16.gmra.mrb[0].mxu0 %v1412
        %v1448 = vpop.f32.mrb[0].mxu0
        %v1449 = vadd.f32 %v1397, %v1448
        %v1450 = vpop.f32.mrb[0].mxu0
        %v1451 = vpop.f32.mrb[0].mxu0
        %v1452 = vpop.f32.mrb[0].mxu0
        %1453 = vdwg.mxu0
        %v1454 = vadd.f32 %v760, %v1449
        %v1455 = vld [vmem:[#allocation19] sm:$0x1]
        %v1456 = vld [vmem:[#allocation20] sm:$0x1]
        %v1457 = vsel %vm764, %v1454, 0.0
        %1458 = vadd.xlane.f32.xlu0 %v1457
        %v1459 = vpop.xlane.xlu0 %1458
        %v1460 = vmul.f32 %v1459, %v768
        %v1461 = vsub.f32 %v1454, %v1460
        %v1462 = vmul.f32 %v1461, %v1461
        %v1463 = vsel %vm764, %v1462, 0.0
        %1464 = vadd.xlane.f32.xlu0 %v1463
        %v1465 = vpop.xlane.xlu0 %1464
        %v1466 = vmul.f32 %v1465, %v768
        %v1467 = vadd.f32 %v1466, 1e-05
        %v1468 = vrsqrt.pop %v1467
        %v1469 = vmul.f32 %v1461, %v1468
        %v1471 = vlaneseq
        %v1472 = vshrl.u32 %v1471, 7
        %v1473 = vsub.s32 0, %v1472
        %v1474 = vrot.slane %v1455, %v1473
        %v1476 = vmul.f32 %v1469, %v1474
        %v1478 = vlaneseq
        %v1479 = vshrl.u32 %v1478, 7
        %v1480 = vsub.s32 0, %v1479
        %v1481 = vrot.slane %v1456, %v1480
        %v1483 = vadd.f32 %v1476, %v1481
        %v1484 = vpack.c.bf16 %v1483, %v1483
        %v1485 = vld [vmem:[#allocation22] sm:$0xf]
        %v1486 = vld [vmem:[#allocation22 + $0x4] sm:$0xf]
        %v1487 = vld [vmem:[#allocation22 + $0x8] sm:$0xf]
        %v1488 = vld [vmem:[#allocation22 + $0xc] sm:$0xf]
        %v1489 = vld [vmem:[#allocation23] sm:$0x1]
        %v1491 = vlaneseq
        %v1492 = vshrl.u32 %v1491, 7
        %v1493 = vsub.s32 0, %v1492
        %v1494 = vrot.slane %v1489, %v1493
        %v1500 = vunpack.c.l.b16 %v1485
        %v1501 = vunpack.c.l.b16 %v1486
        %v1502 = vunpack.c.l.b16 %v1487
        %v1503 = vunpack.c.l.b16 %v1488
        %v1504 = vpack.c.b16 %v1501, %v1500
        %v1505 = vpack.c.b16 %v1503, %v1502
        %v1509 = vsel %vm764, %v1484, 0
        %1511 = vmatprep.subr.bf16.mxu0 0
        %1512 = vmatpush1.bf16.msra.mxu0 %v1504
        %1513 = vmatprep.subr.bf16.mxu0 0
        %1514 = vmatpush1.bf16.msra.mxu0 %v1505
        %1515 = vmatprep.subr.bf16.mxu0 0
        %1516 = vmatpush1.bf16.msra.mxu0 0
        %1517 = vmatprep.subr.bf16.mxu0 0
        %1518 = vmatpush1.bf16.msra.mxu0 0
        %1519 = vmatprep.subr.bf16.mxu0 0
        %1520 = vmatpush1.bf16.msra.mxu0 0
        %1521 = vmatprep.subr.bf16.mxu0 0
        %1522 = vmatpush1.bf16.msra.mxu0 0
        %1523 = vmatprep.subr.bf16.mxu0 0
        %1524 = vmatpush1.bf16.msra.mxu0 0
        %1525 = vmatprep.subr.bf16.mxu0 0
        %1526 = vmatpush1.bf16.msra.mxu0 0
        %1527 = vmatprep.subr.bf16.mxu0 0
        %1528 = vmatpush1.bf16.msra.mxu0 0
        %1529 = vmatprep.subr.bf16.mxu0 0
        %1530 = vmatpush1.bf16.msra.mxu0 0
        %1531 = vmatprep.subr.bf16.mxu0 0
        %1532 = vmatpush1.bf16.msra.mxu0 0
        %1533 = vmatprep.subr.bf16.mxu0 0
        %1534 = vmatpush1.bf16.msra.mxu0 0
        %1535 = vmatprep.subr.bf16.mxu0 0
        %1536 = vmatpush1.bf16.msra.mxu0 0
        %1537 = vmatprep.subr.bf16.mxu0 0
        %1538 = vmatpush1.bf16.msra.mxu0 0
        %1539 = vmatprep.subr.bf16.mxu0 0
        %1540 = vmatpush1.bf16.msra.mxu0 0
        %1541 = vmatprep.subr.bf16.mxu0 0
        %1542 = vmatpush1.bf16.msra.mxu0 0
        %1543 = vmatprep.mubr.bf16.mxu0 0
        %1544 = vmatmul.mubr.bf16.gmra.mrb[0].mxu0 %v1509
        %v1545 = vpop.f32.mrb[0].mxu0
        %v1546 = vadd.f32 %v1494, %v1545
        %v1547 = vpop.f32.mrb[0].mxu0
        %v1548 = vpop.f32.mrb[0].mxu0
        %v1549 = vpop.f32.mrb[0].mxu0
        %1550 = vdwg.mxu0
        %v1551 = vmax.f32 %v1546, 0.0
        %v1552 = vpack.c.bf16 %v1551, %v1551
        %v1553 = vld [vmem:[#allocation25] sm:$0xf]
        %v1554 = vld [vmem:[#allocation25 + $0x4] sm:$0xf]
        %v1555 = vld [vmem:[#allocation25 + $0x8] sm:$0xf]
        %v1556 = vld [vmem:[#allocation25 + $0xc] sm:$0xf]
        %v1557 = vld [vmem:[#allocation25 + $0x10] sm:$0xf]
        %v1558 = vld [vmem:[#allocation25 + $0x14] sm:$0xf]
        %v1559 = vld [vmem:[#allocation25 + $0x18] sm:$0xf]
        %v1560 = vld [vmem:[#allocation25 + $0x1c] sm:$0xf]
        %v1561 = vld [vmem:[#allocation25 + $0x20] sm:$0xf]
        %v1562 = vld [vmem:[#allocation25 + $0x24] sm:$0xf]
        %v1563 = vld [vmem:[#allocation25 + $0x28] sm:$0xf]
        %v1564 = vld [vmem:[#allocation25 + $0x2c] sm:$0xf]
        %v1565 = vld [vmem:[#allocation25 + $0x30] sm:$0xf]
        %v1566 = vld [vmem:[#allocation25 + $0x34] sm:$0xf]
        %v1567 = vld [vmem:[#allocation25 + $0x38] sm:$0xf]
        %v1568 = vld [vmem:[#allocation25 + $0x3c] sm:$0xf]
        %v1569 = vld [vmem:[#allocation26] sm:$0x1]
        %v1571 = vlaneseq
        %v1572 = vshrl.u32 %v1571, 7
        %v1573 = vsub.s32 0, %v1572
        %v1574 = vrot.slane %v1569, %v1573
        %v1592 = vunpack.c.l.b16 %v1553
        %v1593 = vunpack.c.l.b16 %v1554
        %v1594 = vunpack.c.l.b16 %v1555
        %v1595 = vunpack.c.l.b16 %v1556
        %v1596 = vunpack.c.l.b16 %v1557
        %v1597 = vunpack.c.l.b16 %v1558
        %v1598 = vunpack.c.l.b16 %v1559
        %v1599 = vunpack.c.l.b16 %v1560
        %v1600 = vunpack.c.l.b16 %v1561
        %v1601 = vunpack.c.l.b16 %v1562
        %v1602 = vunpack.c.l.b16 %v1563
        %v1603 = vunpack.c.l.b16 %v1564
        %v1604 = vunpack.c.l.b16 %v1565
        %v1605 = vunpack.c.l.b16 %v1566
        %v1606 = vunpack.c.l.b16 %v1567
        %v1607 = vunpack.c.l.b16 %v1568
        %v1608 = vpack.c.b16 %v1593, %v1592
        %v1609 = vpack.c.b16 %v1595, %v1594
        %v1610 = vpack.c.b16 %v1597, %v1596
        %v1611 = vpack.c.b16 %v1599, %v1598
        %v1612 = vpack.c.b16 %v1601, %v1600
        %v1613 = vpack.c.b16 %v1603, %v1602
        %v1614 = vpack.c.b16 %v1605, %v1604
        %v1615 = vpack.c.b16 %v1607, %v1606
        %1624 = vmatprep.subr.bf16.mxu0 0
        %1625 = vmatpush1.bf16.msra.mxu0 %v1608
        %1626 = vmatprep.subr.bf16.mxu0 0
        %1627 = vmatpush1.bf16.msra.mxu0 %v1609
        %1628 = vmatprep.subr.bf16.mxu0 0
        %1629 = vmatpush1.bf16.msra.mxu0 %v1610
        %1630 = vmatprep.subr.bf16.mxu0 0
        %1631 = vmatpush1.bf16.msra.mxu0 %v1611
        %1632 = vmatprep.subr.bf16.mxu0 0
        %1633 = vmatpush1.bf16.msra.mxu0 %v1612
        %1634 = vmatprep.subr.bf16.mxu0 0
        %1635 = vmatpush1.bf16.msra.mxu0 %v1613
        %1636 = vmatprep.subr.bf16.mxu0 0
        %1637 = vmatpush1.bf16.msra.mxu0 %v1614
        %1638 = vmatprep.subr.bf16.mxu0 0
        %1639 = vmatpush1.bf16.msra.mxu0 %v1615
        %1640 = vmatprep.subr.bf16.mxu0 0
        %1641 = vmatpush1.bf16.msra.mxu0 0
        %1642 = vmatprep.subr.bf16.mxu0 0
        %1643 = vmatpush1.bf16.msra.mxu0 0
        %1644 = vmatprep.subr.bf16.mxu0 0
        %1645 = vmatpush1.bf16.msra.mxu0 0
        %1646 = vmatprep.subr.bf16.mxu0 0
        %1647 = vmatpush1.bf16.msra.mxu0 0
        %1648 = vmatprep.subr.bf16.mxu0 0
        %1649 = vmatpush1.bf16.msra.mxu0 0
        %1650 = vmatprep.subr.bf16.mxu0 0
        %1651 = vmatpush1.bf16.msra.mxu0 0
        %1652 = vmatprep.subr.bf16.mxu0 0
        %1653 = vmatpush1.bf16.msra.mxu0 0
        %1654 = vmatprep.subr.bf16.mxu0 0
        %1655 = vmatpush1.bf16.msra.mxu0 0
        %1656 = vmatprep.mubr.bf16.mxu0 0
        %1657 = vmatmul.mubr.bf16.gmra.mrb[0].mxu0 %v1552
        %v1658 = vpop.f32.mrb[0].mxu0
        %v1659 = vadd.f32 %v1574, %v1658
        %v1660 = vpop.f32.mrb[0].mxu0
        %v1661 = vpop.f32.mrb[0].mxu0
        %v1662 = vpop.f32.mrb[0].mxu0
        %1663 = vdwg.mxu0
        %v1664 = vadd.f32 %v1454, %v1659
        %1665 = vst.msk [vmem:[%s758] sm:$0xff] %vm764, %v1664
        %s1666 = sand.u32 %s397, 1
        %s1667 = scalar_lea.sflag [#allocation4], %s1666
        %s1668 = sand.u32 %s397, 1
        %s1669 = smul.addr %s1668, 8
        %s1670 = scalar_lea.vmem [#allocation28], %s1669
        // Predicated region
        $region149: #{transformer_encoder_forward.2} parent=83 // pred_check
          %p1671 = pneg %p407
        $region150: #{transformer_encoder_forward.2} parent=83 // pred_check_branch
          %1673 = sbr.rel (%p1671) target = $region152
        $region151: #{transformer_encoder_forward.2} parent=83 // pred_region
          %s1675 = ssub.s32 128, 128
          %1676 = vsyncadd %s1667, %s1675
          %s1677 = smul.addr %s43, 128
          %s1678 = scalar_lea.hbm %s16, %s1677
          %s1680 = sshll.u32 %s1670, 4
          %s1681 = int_to_ptr.vmem [resolvable:$true] %s1680
          %1683 = dma.vmem_to_hbm [thread:$0]  %s1681, 128, %s1678, %s1667
        $region152: #{transformer_encoder_forward.2} parent=83 // pred_fallthru
          _
      $region84: #{transformer_encoder_forward.2} parent=5 // pred_fallthru
        _
      %p1684 = scmp.le.s32.totalorder 2, %s38
      // Predicated region
      $region153: #{transformer_encoder_forward.2} parent=5 // pred_check
        %p1685 = pneg %p1684
      $region154: #{transformer_encoder_forward.2} parent=5 // pred_check_branch
        %1687 = sbr.rel (%p1685) target = $region156
      $region155: #{transformer_encoder_forward.2} parent=5 // pred_region
        %s1688 = ssub.s32 %s38, 2
        // Predicated region
        $region157: #{transformer_encoder_forward.2} parent=155 // pred_check
          %p1689 = pneg %p413
        $region158: #{transformer_encoder_forward.2} parent=155 // pred_check_branch
          %1691 = sbr.rel (%p1689) target = $region160
        $region159: #{transformer_encoder_forward.2} parent=155 // pred_region
          %s1692 = sand.u32 %s398, 1
          %s1693 = scalar_lea.sflag [#allocation4], %s1692
          %s1694 = sand.u32 %s398, 1
          %s1695 = smul.addr %s1694, 8
          %s1696 = scalar_lea.vmem [#allocation28], %s1695
          %1697 = dma.done %s1693, 128
        $region160: #{transformer_encoder_forward.2} parent=155 // pred_fallthru
          _
      $region156: #{transformer_encoder_forward.2} parent=5 // pred_fallthru
        _
    $region6: #{transformer_encoder_forward.2} parent=1 // loop_footer
      %s42 = sadd.s32 1, %s38
    $region7: #{transformer_encoder_forward.2} parent=1 // loop_footer_branch
      %37 = sbr.rel target = $region3
    $region8: #{transformer_encoder_forward.2} parent=1 // loop_exit
      _
    %1698 = vsyncpa [#allocation3], 1
    %s1699 = scalar_lea.sflag [#allocation3], 1
    %1700 = vsyncpa %s1699, 1
    %1701 = vsyncpa [#allocation6], 1
    %s1702 = scalar_lea.sflag [#allocation6], 1
    %1703 = vsyncpa %s1702, 1
    %1704 = vsyncpa [#allocation9], 1
    %1705 = vsyncpa [#allocation12], 1
    %1706 = vsyncpa [#allocation15], 1
    %1707 = vsyncpa [#allocation18], 1
    %1708 = vsyncpa [#allocation21], 1
    %1709 = vsyncpa [#allocation24], 1
    %1710 = vsyncpa [#allocation27], 1
    %1711 = vsyncpa [#allocation4], 1
    %s1712 = scalar_lea.sflag [#allocation4], 1
    %1713 = vsyncpa %s1712, 1

</llo_original>
